<compile_context>
chip_gen: v6e
topology: v6e:2x2x1
jax: 0.10.0
libtpu: 0.0.40
codegen_flags: <defaults>
</compile_context>

<pallas_src>
import functools

import jax
import jax.numpy as jnp
from jax.experimental import pallas as pl
from jax.experimental.pallas import tpu as pltpu

LANE = 128
_BN_EPS = 1e-5


def _round_up(n, m):
    return ((n + m - 1) // m) * m


def _whole(ndim):
    # index_map for a grid-invariant (resident) operand.
    return lambda i: (0,) * ndim


# ------------------------------------------------------------------------- kernels


def _bottleneck_s2_kernel(x_ref, w1, b1, w2, b2, w3, b3, wd, bd, out_ref,
                          hp00, hp01, hp10, hp11):
    """First Bottleneck block: conv1x1 -> conv3x3(stride 2) -> conv1x1, plus a
    conv1x1(stride 2) downsample on the identity path.  BN pre-folded.

    x_ref holds the block input after a 2x2 space-to-depth:
        x_ref[b, i*Wo + j, (pr*2+pc)*Cp : (pr*2+pc+1)*Cp] == x[b, 2i+pr, 2j+pc, :]
    so every stride-2 access below is a contiguous slice."""
    TB, HWo, C4 = x_ref.shape
    Cp = C4 // 4
    Ho, Wo = hp00.shape[1] - 1, hp00.shape[2] - 1
    Pp = hp00.shape[3]
    M = TB * Ho * Wo
    cdt = w1.dtype

    x2d = x_ref[...].reshape(M, C4)

    planes = (hp00, hp01, hp10, hp11)
    for p in planes:                       # zero the halo rows/cols (cheap, tiny)
        p[...] = jnp.zeros_like(p)

    # conv1 (1x1) + BN + ReLU per spatial-parity plane (a 1x1 conv commutes with the
    # space-to-depth).  Plane (pr, pc) is stored at offset (pr, pc) inside its padded
    # scratch so the 3x3 taps below become contiguous reads with a zero halo.
    for idx, (pr, pc) in enumerate(((0, 0), (0, 1), (1, 0), (1, 1))):
        xs = x2d[:, idx * Cp:(idx + 1) * Cp]
        h = jnp.dot(xs.astype(cdt), w1[...], preferred_element_type=jnp.float32)
        h = jnp.maximum(h + b1[...], 0.0)
        planes[idx][:, pr:pr + Ho, pc:pc + Wo, :] = h.reshape(TB, Ho, Wo, Pp)

    # conv2 (3x3, stride 2) + BN + ReLU: 9 shifted MXU matmuls, f32 accumulation.
    acc = jnp.zeros((M, Pp), jnp.float32)
    for ki in range(3):
        pr, r0 = (ki + 1) % 2, ki // 2
        for kj in range(3):
            pc, c0 = (kj + 1) % 2, kj // 2
            patch = planes[pr * 2 + pc][:, r0:r0 + Ho, c0:c0 + Wo, :]
            acc = acc + jnp.dot(patch.reshape(M, Pp).astype(cdt), w2[ki * 3 + kj],
                                preferred_element_type=jnp.float32)
    h2 = jnp.maximum(acc + b2[...], 0.0)

    # conv3 (1x1) + BN
    out = jnp.dot(h2.astype(cdt), w3[...], preferred_element_type=jnp.float32) + b3[...]

    # downsample (1x1, stride 2) + BN == parity plane (0, 0) of the input.
    ds = jnp.dot(x2d[:, :Cp].astype(cdt), wd[...],
                 preferred_element_type=jnp.float32) + bd[...]

    y = jnp.maximum(out + ds, 0.0)
    out_ref[...] = y.reshape(TB, HWo, out_ref.shape[2]).astype(out_ref.dtype)


def _bottleneck_s1_kernel(x_ref, w1, b1, w2, b2, w3, b3, out_ref, hpad):
    """Stride-1 Bottleneck block with identity residual.  BN pre-folded."""
    TB, HW, Cp_in = x_ref.shape
    H, W = hpad.shape[1] - 2, hpad.shape[2] - 2
    Pp = hpad.shape[3]
    M = TB * H * W
    cdt = w1.dtype

    x2d = x_ref[...].reshape(M, Cp_in)

    hpad[...] = jnp.zeros_like(hpad)       # zero halo for the 3x3 conv
    h1 = jnp.dot(x2d.astype(cdt), w1[...], preferred_element_type=jnp.float32)
    h1 = jnp.maximum(h1 + b1[...], 0.0)
    hpad[:, 1:H + 1, 1:W + 1, :] = h1.reshape(TB, H, W, Pp)

    acc = jnp.zeros((M, Pp), jnp.float32)
    for ki in range(3):
        for kj in range(3):
            patch = hpad[:, ki:ki + H, kj:kj + W, :]
            acc = acc + jnp.dot(patch.reshape(M, Pp).astype(cdt), w2[ki * 3 + kj],
                                preferred_element_type=jnp.float32)
    h2 = jnp.maximum(acc + b2[...], 0.0)

    out = jnp.dot(h2.astype(cdt), w3[...], preferred_element_type=jnp.float32) + b3[...]
    y = jnp.maximum(out + x2d.astype(jnp.float32), 0.0)   # identity residual
    out_ref[...] = y.reshape(TB, HW, out_ref.shape[2]).astype(out_ref.dtype)


# ----------------------------------------------------- one-time parameter rewrites


def _fold_bn(w_hwio, bn):
    s = bn["gamma"] / jnp.sqrt(bn["var"] + _BN_EPS)
    return w_hwio * s, bn["beta"] - bn["mean"] * s


def _pad2(a, rows, cols):
    return jnp.pad(a, ((0, rows - a.shape[0]), (0, cols - a.shape[1])))


def _pad_bias(b, cols):
    return jnp.pad(b.reshape(1, -1), ((0, 0), (0, cols - b.shape[0]))).astype(jnp.float32)


def prepare_head_params(raw_params, compute_dtype=jnp.float32):
    """One-time weight rewrite (kept OUT of the per-call path, per perf review):
    fold eval-mode BN into the convs, reshape to matmul layout, zero-pad every channel
    axis to a 128-lane multiple, cast matmul operands to compute_dtype."""
    prep = {}
    for bi, bp in enumerate(raw_params):
        cin, width = bp["w1"].shape[2], bp["w1"].shape[3]
        cout = bp["w3"].shape[3]
        cin_p, w_p, out_p = (_round_up(c, LANE) for c in (cin, width, cout))
        w1, b1 = _fold_bn(bp["w1"], bp["bn1"])
        w2, b2 = _fold_bn(bp["w2"], bp["bn2"])
        w3, b3 = _fold_bn(bp["w3"], bp["bn3"])
        d = dict(
            w1=_pad2(w1.reshape(cin, width), cin_p, w_p).astype(compute_dtype),
            b1=_pad_bias(b1, w_p),
            w2=jnp.pad(w2.reshape(9, width, width),
                       ((0, 0), (0, w_p - width), (0, w_p - width))).astype(compute_dtype),
            b2=_pad_bias(b2, w_p),
            w3=_pad2(w3.reshape(width, cout), w_p, out_p).astype(compute_dtype),
            b3=_pad_bias(b3, out_p),
        )
        if "wd" in bp:
            wd, bd = _fold_bn(bp["wd"], bp["bnd"])
            d["wd"] = _pad2(wd.reshape(cin, cout), cin_p, out_p).astype(compute_dtype)
            d["bd"] = _pad_bias(bd, out_p)
        prep[f"block{bi + 1}"] = d
    return prep


# ------------------------------------------------------------------- forward wrapper


def _block_call(kernel, x3d, weights, out_cp, scratch_shapes, tb):
    B, HW, cin_p = x3d.shape
    in_specs = [pl.BlockSpec((tb, HW, cin_p), lambda i: (i, 0, 0))]
    in_specs += [pl.BlockSpec(w.shape, _whole(w.ndim)) for w in weights]
    # NOTE (perf review): weight blocks are grid-invariant; when VMEM is tight
    # (v7x: 64 MiB physical) they can be single-buffered via pipeline_mode=pl.Buffered(1).
    return pl.pallas_call(
        kernel,
        out_shape=jax.ShapeDtypeStruct((B, HW, out_cp), jnp.float32),
        grid=(pl.cdiv(B, tb),),
        in_specs=in_specs,
        out_specs=pl.BlockSpec((tb, HW, out_cp), lambda i: (i, 0, 0)),
        scratch_shapes=scratch_shapes,
        compiler_params=pltpu.CompilerParams(dimension_semantics=("parallel",)),
    )(x3d, *weights)


@functools.partial(jax.jit, static_argnames=("out_channels", "block_m"))
def head_forward(x_nchw, prep, *, out_channels, block_m=32):
    """HeadModule.forward(rois): 3 Bottleneck blocks (first: stride 2 + downsample).

    x_nchw: [B, Cin, H, W] (torch layout).  Returns [B, 4*planes, H//2, W//2]."""
    B, C, H, W = x_nchw.shape
    assert H % 2 == 0 and W % 2 == 0 and (H // 2) % 8 == 0 and (W // 2) % 8 == 0, (
        "kernel assumes the post-stride spatial dims are sublane (8) multiples")
    Ho, Wo = H // 2, W // 2

    b1p, b2p, b3p = prep["block1"], prep["block2"], prep["block3"]
    Cp = b1p["w1"].shape[0]          # padded input channels
    Pp = b1p["w1"].shape[1]          # padded bottleneck width
    Op = b1p["w3"].shape[1]          # padded output channels (4 * planes)
    cdt = b1p["w1"].dtype

    # Activation relayout (the only per-call work outside the kernels): NCHW -> NHWC,
    # zero-pad channels to the lane boundary, 2x2 space-to-depth for the stride-2
    # block.  No batch padding, no redundant casts (skipped when dtypes match).
    x = jnp.transpose(x_nchw, (0, 2, 3, 1))
    if C != Cp:
        x = jnp.pad(x, ((0, 0), (0, 0), (0, 0), (0, Cp - C)))
    if x.dtype != cdt:
        x = x.astype(cdt)
    x = x.reshape(B, Ho, 2, Wo, 2, Cp).transpose(0, 1, 3, 2, 4, 5)
    x = x.reshape(B, Ho * Wo, 4 * Cp)

    # Batch tile: cap at ceil(B/2) so the grid has >=2 tiles and both v7x TensorCores
    # participate; raise block_m on v6e for large batches (per-step overhead ~0.35us).
    tb = max(1, min(block_m, pl.cdiv(B, 2)))

    # Block 1: stride 2, conv1x1 downsample.
    scratch1 = [pltpu.VMEM((tb, Ho + 1, Wo + 1, Pp), jnp.float32) for _ in range(4)]
    y = _block_call(
        _bottleneck_s2_kernel, x,
        (b1p["w1"], b1p["b1"], b1p["w2"], b1p["b2"], b1p["w3"], b1p["b3"],
         b1p["wd"], b1p["bd"]),
        Op, scratch1, tb)

    # Blocks 2 & 3: stride 1, identity residual.
    for bp in (b2p, b3p):
        yin = y if y.dtype == cdt else y.astype(cdt)
        scratch = [pltpu.VMEM((tb, Ho + 2, Wo + 2, Pp), jnp.float32)]
        y = _block_call(
            _bottleneck_s1_kernel, yin,
            (bp["w1"], bp["b1"], bp["w2"], bp["b2"], bp["w3"], bp["b3"]),
            Op, scratch, tb)

    # Un-pad the channel axis and return the torch NCHW layout.
    y = y[:, :, :out_channels].reshape(B, Ho, Wo, out_channels)
    return jnp.transpose(y, (0, 3, 1, 2))


# ------------------------------------------------------------------ reference & demo


def _bn_ref(x, p):
    return p["gamma"] * (x - p["mean"]) / jnp.sqrt(p["var"] + _BN_EPS) + p["beta"]


def _conv_ref(x, w, stride, pad):
    return jax.lax.conv_general_dilated(
        x, w, window_strides=(stride, stride),
        padding=((pad, pad), (pad, pad)),
        dimension_numbers=("NHWC", "HWIO", "NHWC"),
        precision=jax.lax.Precision.HIGHEST)


def head_reference(x_nchw, raw_params):
    x = jnp.transpose(x_nchw, (0, 2, 3, 1))
    for bi, bp in enumerate(raw_params):
        stride = 2 if bi == 0 else 1
        out = jax.nn.relu(_bn_ref(_conv_ref(x, bp["w1"], 1, 0), bp["bn1"]))
        out = jax.nn.relu(_bn_ref(_conv_ref(out, bp["w2"], stride, 1), bp["bn2"]))
        out = _bn_ref(_conv_ref(out, bp["w3"], 1, 0), bp["bn3"])
        identity = (_bn_ref(_conv_ref(x, bp["wd"], stride, 0), bp["bnd"])
                    if "wd" in bp else x)
        x = jax.nn.relu(out + identity)
    return jnp.transpose(x, (0, 3, 1, 2))


def init_head_params(key, inplanes, planes, blocks=3):
    """Deterministic synthetic weights for _make_layer(Bottleneck, planes, blocks,
    stride=2) with groups=1, width_per_group=64 (so width == planes), eval-mode BN."""
    expansion = 4

    def bn_params(k, c):
        k1, k2, k3, k4 = jax.random.split(k, 4)
        return dict(gamma=1.0 + 0.1 * jax.random.normal(k1, (c,), jnp.float32),
                    beta=0.1 * jax.random.normal(k2, (c,), jnp.float32),
                    mean=0.1 * jax.random.normal(k3, (c,), jnp.float32),
                    var=jax.random.uniform(k4, (c,), jnp.float32, 0.5, 1.5))

    def conv_w(k, kh, kw, cin, cout):
        return jax.random.normal(k, (kh, kw, cin, cout), jnp.float32) / jnp.sqrt(kh * kw * cin)

    raw, cin = [], inplanes
    width, cout = planes, planes * expansion
    for bi in range(blocks):
        key, *ks = jax.random.split(key, 9)
        bp = dict(w1=conv_w(ks[0], 1, 1, cin, width), bn1=bn_params(ks[1], width),
                  w2=conv_w(ks[2], 3, 3, width, width), bn2=bn_params(ks[3], width),
                  w3=conv_w(ks[4], 1, 1, width, cout), bn3=bn_params(ks[5], cout))
        if bi == 0:
            bp["wd"] = conv_w(ks[6], 1, 1, cin, cout)
            bp["bnd"] = bn_params(ks[7], cout)
        raw.append(bp)
        cin = cout
    return raw


if __name__ == "__main__":
    # Small shapes consistent with the module: rois [B, inplanes, H, W]; the layer
    # halves the spatial dims and expands channels to planes * 4.
    B, inplanes, planes, H, W = 2, 32, 16, 16, 16

    key = jax.random.PRNGKey(0)
    kx, kp = jax.random.split(key)
    x = jax.random.normal(kx, (B, inplanes, H, W), dtype=jnp.float32)
    raw = init_head_params(kp, inplanes, planes, blocks=3)

    prep = prepare_head_params(raw)                 # one-time, outside the call path
    out = head_forward(x, prep, out_channels=planes * 4, block_m=32)
    out = jax.block_until_ready(out)

    ref = head_reference(x, raw)
    assert out.shape == ref.shape == (B, planes * 4, H // 2, W // 2), out.shape
    max_err = float(jnp.max(jnp.abs(out - ref)))
    assert jnp.allclose(out, ref, atol=5e-3, rtol=5e-3), max_err
    print("KERNEL_OK")
</pallas_src>

<mosaic_0001>
module attributes {stable_mosaic.version = 11 : i64} {
  func.func @_bottleneck_s1_kernel(%arg0: i32, %arg1: memref<1x64x128xf32, #tpu.memory_space<vmem>>, %arg2: memref<128x128xf32, #tpu.memory_space<vmem>>, %arg3: memref<1x128xf32, #tpu.memory_space<vmem>>, %arg4: memref<9x128x128xf32, #tpu.memory_space<vmem>>, %arg5: memref<1x128xf32, #tpu.memory_space<vmem>>, %arg6: memref<128x128xf32, #tpu.memory_space<vmem>>, %arg7: memref<1x128xf32, #tpu.memory_space<vmem>>, %arg8: memref<1x64x128xf32, #tpu.memory_space<vmem>>, %arg9: memref<1x10x10x128xf32, #tpu.memory_space<vmem>>) attributes {dimension_semantics = [#tpu.dimension_semantics<parallel>], iteration_bounds = array<i64: 2>, scalar_prefetch = 0 : i64, scratch_operands = 1 : i64, tpu.core_type = #tpu.core_type<tc>, window_params = [{transform_indices = @transform_0, window_bounds = array<i64: 1, 64, 128>}, {pipeline_mode = #tpu.pipeline_mode<synchronous>, transform_indices = @transform_1, window_bounds = array<i64: 128, 128>}, {pipeline_mode = #tpu.pipeline_mode<synchronous>, transform_indices = @transform_2, window_bounds = array<i64: 1, 128>}, {pipeline_mode = #tpu.pipeline_mode<synchronous>, transform_indices = @transform_3, window_bounds = array<i64: 9, 128, 128>}, {pipeline_mode = #tpu.pipeline_mode<synchronous>, transform_indices = @transform_4, window_bounds = array<i64: 1, 128>}, {pipeline_mode = #tpu.pipeline_mode<synchronous>, transform_indices = @transform_5, window_bounds = array<i64: 128, 128>}, {pipeline_mode = #tpu.pipeline_mode<synchronous>, transform_indices = @transform_6, window_bounds = array<i64: 1, 128>}, {transform_indices = @transform_7, window_bounds = array<i64: 1, 64, 128>}]} {
    %c0 = arith.constant 0 : index
    %c0_0 = arith.constant 0 : index
    %c0_1 = arith.constant 0 : index
    %0 = vector.load %arg1[%c0, %c0_0, %c0_1] : memref<1x64x128xf32, #tpu.memory_space<vmem>>, vector<1x64x128xf32>
    %1 = vector.shape_cast %0 : vector<1x64x128xf32> to vector<64x128xf32>
    %cst = arith.constant 0.000000e+00 : f32
    %2 = vector.broadcast %cst : f32 to vector<1x10x10x128xf32>
    %c0_2 = arith.constant 0 : index
    %c0_3 = arith.constant 0 : index
    %c0_4 = arith.constant 0 : index
    %c0_5 = arith.constant 0 : index
    %3 = vector.load %arg9[%c0_2, %c0_3, %c0_4, %c0_5] : memref<1x10x10x128xf32, #tpu.memory_space<vmem>>, vector<1x10x10x128xf32>
    tpu.vector_store %arg9[%c0_2, %c0_3, %c0_4, %c0_5], %2 {strides = array<i32>} : memref<1x10x10x128xf32, #tpu.memory_space<vmem>>, vector<1x10x10x128xf32>,
    %c0_6 = arith.constant 0 : index
    %c0_7 = arith.constant 0 : index
    %4 = vector.load %arg2[%c0_6, %c0_7] : memref<128x128xf32, #tpu.memory_space<vmem>>, vector<128x128xf32>
    %cst_8 = arith.constant dense<0.000000e+00> : vector<64x128xf32>
    %5 = tpu.matmul %1, %4, %cst_8 {dimension_numbers = #tpu.dot_dimension_numbers<[1], [0], [0], [1], [0, 0, 1, 1], [], []>} : vector<64x128xf32>, vector<128x128xf32>, vector<64x128xf32> -> vector<64x128xf32>
    %c0_9 = arith.constant 0 : index
    %c0_10 = arith.constant 0 : index
    %6 = vector.load %arg3[%c0_9, %c0_10] : memref<1x128xf32, #tpu.memory_space<vmem>>, vector<1x128xf32>
    %7 = vector.broadcast %6 : vector<1x128xf32> to vector<64x128xf32>
    %8 = arith.addf %5, %7 : vector<64x128xf32>
    %cst_11 = arith.constant 0.000000e+00 : f32
    %9 = vector.broadcast %cst_11 : f32 to vector<64x128xf32>
    %10 = arith.maximumf %8, %9 : vector<64x128xf32>
    %11 = vector.shape_cast %10 : vector<64x128xf32> to vector<1x8x8x128xf32>
    %c0_12 = arith.constant 0 : index
    %c1 = arith.constant 1 : index
    %c1_13 = arith.constant 1 : index
    %c0_14 = arith.constant 0 : index
    %12 = vector.load %arg9[%c0_12, %c1, %c1_13, %c0_14] : memref<1x10x10x128xf32, #tpu.memory_space<vmem>>, vector<1x8x8x128xf32>
    tpu.vector_store %arg9[%c0_12, %c1, %c1_13, %c0_14], %11 {strides = array<i32>} : memref<1x10x10x128xf32, #tpu.memory_space<vmem>>, vector<1x8x8x128xf32>,
    %cst_15 = arith.constant 0.000000e+00 : f32
    %13 = vector.broadcast %cst_15 : f32 to vector<64x128xf32>
    %c0_16 = arith.constant 0 : index
    %c0_17 = arith.constant 0 : index
    %c0_18 = arith.constant 0 : index
    %c0_19 = arith.constant 0 : index
    %14 = vector.load %arg9[%c0_16, %c0_17, %c0_18, %c0_19] : memref<1x10x10x128xf32, #tpu.memory_space<vmem>>, vector<1x8x8x128xf32>
    %15 = vector.shape_cast %14 : vector<1x8x8x128xf32> to vector<64x128xf32>
    %c0_20 = arith.constant 0 : index
    %c0_21 = arith.constant 0 : index
    %c0_22 = arith.constant 0 : index
    %16 = vector.load %arg4[%c0_20, %c0_21, %c0_22] : memref<9x128x128xf32, #tpu.memory_space<vmem>>, vector<1x128x128xf32>
    %17 = vector.shape_cast %16 : vector<1x128x128xf32> to vector<128x128xf32>
    %cst_23 = arith.constant dense<0.000000e+00> : vector<64x128xf32>
    %18 = tpu.matmul %15, %17, %cst_23 {dimension_numbers = #tpu.dot_dimension_numbers<[1], [0], [0], [1], [0, 0, 1, 1], [], []>} : vector<64x128xf32>, vector<128x128xf32>, vector<64x128xf32> -> vector<64x128xf32>
    %19 = arith.addf %13, %18 : vector<64x128xf32>
    %c0_24 = arith.constant 0 : index
    %c0_25 = arith.constant 0 : index
    %c1_26 = arith.constant 1 : index
    %c0_27 = arith.constant 0 : index
    %20 = vector.load %arg9[%c0_24, %c0_25, %c1_26, %c0_27] : memref<1x10x10x128xf32, #tpu.memory_space<vmem>>, vector<1x8x8x128xf32>
    %21 = vector.shape_cast %20 : vector<1x8x8x128xf32> to vector<64x128xf32>
    %c1_28 = arith.constant 1 : index
    %c0_29 = arith.constant 0 : index
    %c0_30 = arith.constant 0 : index
    %22 = vector.load %arg4[%c1_28, %c0_29, %c0_30] : memref<9x128x128xf32, #tpu.memory_space<vmem>>, vector<1x128x128xf32>
    %23 = vector.shape_cast %22 : vector<1x128x128xf32> to vector<128x128xf32>
    %cst_31 = arith.constant dense<0.000000e+00> : vector<64x128xf32>
    %24 = tpu.matmul %21, %23, %cst_31 {dimension_numbers = #tpu.dot_dimension_numbers<[1], [0], [0], [1], [0, 0, 1, 1], [], []>} : vector<64x128xf32>, vector<128x128xf32>, vector<64x128xf32> -> vector<64x128xf32>
    %25 = arith.addf %19, %24 : vector<64x128xf32>
    %c0_32 = arith.constant 0 : index
    %c0_33 = arith.constant 0 : index
    %c2 = arith.constant 2 : index
    %c0_34 = arith.constant 0 : index
    %26 = vector.load %arg9[%c0_32, %c0_33, %c2, %c0_34] : memref<1x10x10x128xf32, #tpu.memory_space<vmem>>, vector<1x8x8x128xf32>
    %27 = vector.shape_cast %26 : vector<1x8x8x128xf32> to vector<64x128xf32>
    %c2_35 = arith.constant 2 : index
    %c0_36 = arith.constant 0 : index
    %c0_37 = arith.constant 0 : index
    %28 = vector.load %arg4[%c2_35, %c0_36, %c0_37] : memref<9x128x128xf32, #tpu.memory_space<vmem>>, vector<1x128x128xf32>
    %29 = vector.shape_cast %28 : vector<1x128x128xf32> to vector<128x128xf32>
    %cst_38 = arith.constant dense<0.000000e+00> : vector<64x128xf32>
    %30 = tpu.matmul %27, %29, %cst_38 {dimension_numbers = #tpu.dot_dimension_numbers<[1], [0], [0], [1], [0, 0, 1, 1], [], []>} : vector<64x128xf32>, vector<128x128xf32>, vector<64x128xf32> -> vector<64x128xf32>
    %31 = arith.addf %25, %30 : vector<64x128xf32>
    %c0_39 = arith.constant 0 : index
    %c1_40 = arith.constant 1 : index
    %c0_41 = arith.constant 0 : index
    %c0_42 = arith.constant 0 : index
    %32 = vector.load %arg9[%c0_39, %c1_40, %c0_41, %c0_42] : memref<1x10x10x128xf32, #tpu.memory_space<vmem>>, vector<1x8x8x128xf32>
    %33 = vector.shape_cast %32 : vector<1x8x8x128xf32> to vector<64x128xf32>
    %c3 = arith.constant 3 : index
    %c0_43 = arith.constant 0 : index
    %c0_44 = arith.constant 0 : index
    %34 = vector.load %arg4[%c3, %c0_43, %c0_44] : memref<9x128x128xf32, #tpu.memory_space<vmem>>, vector<1x128x128xf32>
    %35 = vector.shape_cast %34 : vector<1x128x128xf32> to vector<128x128xf32>
    %cst_45 = arith.constant dense<0.000000e+00> : vector<64x128xf32>
    %36 = tpu.matmul %33, %35, %cst_45 {dimension_numbers = #tpu.dot_dimension_numbers<[1], [0], [0], [1], [0, 0, 1, 1], [], []>} : vector<64x128xf32>, vector<128x128xf32>, vector<64x128xf32> -> vector<64x128xf32>
    %37 = arith.addf %31, %36 : vector<64x128xf32>
    %c0_46 = arith.constant 0 : index
    %c1_47 = arith.constant 1 : index
    %c1_48 = arith.constant 1 : index
    %c0_49 = arith.constant 0 : index
    %38 = vector.load %arg9[%c0_46, %c1_47, %c1_48, %c0_49] : memref<1x10x10x128xf32, #tpu.memory_space<vmem>>, vector<1x8x8x128xf32>
    %39 = vector.shape_cast %38 : vector<1x8x8x128xf32> to vector<64x128xf32>
    %c4 = arith.constant 4 : index
    %c0_50 = arith.constant 0 : index
    %c0_51 = arith.constant 0 : index
    %40 = vector.load %arg4[%c4, %c0_50, %c0_51] : memref<9x128x128xf32, #tpu.memory_space<vmem>>, vector<1x128x128xf32>
    %41 = vector.shape_cast %40 : vector<1x128x128xf32> to vector<128x128xf32>
    %cst_52 = arith.constant dense<0.000000e+00> : vector<64x128xf32>
    %42 = tpu.matmul %39, %41, %cst_52 {dimension_numbers = #tpu.dot_dimension_numbers<[1], [0], [0], [1], [0, 0, 1, 1], [], []>} : vector<64x128xf32>, vector<128x128xf32>, vector<64x128xf32> -> vector<64x128xf32>
    %43 = arith.addf %37, %42 : vector<64x128xf32>
    %c0_53 = arith.constant 0 : index
    %c1_54 = arith.constant 1 : index
    %c2_55 = arith.constant 2 : index
    %c0_56 = arith.constant 0 : index
    %44 = vector.load %arg9[%c0_53, %c1_54, %c2_55, %c0_56] : memref<1x10x10x128xf32, #tpu.memory_space<vmem>>, vector<1x8x8x128xf32>
    %45 = vector.shape_cast %44 : vector<1x8x8x128xf32> to vector<64x128xf32>
    %c5 = arith.constant 5 : index
    %c0_57 = arith.constant 0 : index
    %c0_58 = arith.constant 0 : index
    %46 = vector.load %arg4[%c5, %c0_57, %c0_58] : memref<9x128x128xf32, #tpu.memory_space<vmem>>, vector<1x128x128xf32>
    %47 = vector.shape_cast %46 : vector<1x128x128xf32> to vector<128x128xf32>
    %cst_59 = arith.constant dense<0.000000e+00> : vector<64x128xf32>
    %48 = tpu.matmul %45, %47, %cst_59 {dimension_numbers = #tpu.dot_dimension_numbers<[1], [0], [0], [1], [0, 0, 1, 1], [], []>} : vector<64x128xf32>, vector<128x128xf32>, vector<64x128xf32> -> vector<64x128xf32>
    %49 = arith.addf %43, %48 : vector<64x128xf32>
    %c0_60 = arith.constant 0 : index
    %c2_61 = arith.constant 2 : index
    %c0_62 = arith.constant 0 : index
    %c0_63 = arith.constant 0 : index
    %50 = vector.load %arg9[%c0_60, %c2_61, %c0_62, %c0_63] : memref<1x10x10x128xf32, #tpu.memory_space<vmem>>, vector<1x8x8x128xf32>
    %51 = vector.shape_cast %50 : vector<1x8x8x128xf32> to vector<64x128xf32>
    %c6 = arith.constant 6 : index
    %c0_64 = arith.constant 0 : index
    %c0_65 = arith.constant 0 : index
    %52 = vector.load %arg4[%c6, %c0_64, %c0_65] : memref<9x128x128xf32, #tpu.memory_space<vmem>>, vector<1x128x128xf32>
    %53 = vector.shape_cast %52 : vector<1x128x128xf32> to vector<128x128xf32>
    %cst_66 = arith.constant dense<0.000000e+00> : vector<64x128xf32>
    %54 = tpu.matmul %51, %53, %cst_66 {dimension_numbers = #tpu.dot_dimension_numbers<[1], [0], [0], [1], [0, 0, 1, 1], [], []>} : vector<64x128xf32>, vector<128x128xf32>, vector<64x128xf32> -> vector<64x128xf32>
    %55 = arith.addf %49, %54 : vector<64x128xf32>
    %c0_67 = arith.constant 0 : index
    %c2_68 = arith.constant 2 : index
    %c1_69 = arith.constant 1 : index
    %c0_70 = arith.constant 0 : index
    %56 = vector.load %arg9[%c0_67, %c2_68, %c1_69, %c0_70] : memref<1x10x10x128xf32, #tpu.memory_space<vmem>>, vector<1x8x8x128xf32>
    %57 = vector.shape_cast %56 : vector<1x8x8x128xf32> to vector<64x128xf32>
    %c7 = arith.constant 7 : index
    %c0_71 = arith.constant 0 : index
    %c0_72 = arith.constant 0 : index
    %58 = vector.load %arg4[%c7, %c0_71, %c0_72] : memref<9x128x128xf32, #tpu.memory_space<vmem>>, vector<1x128x128xf32>
    %59 = vector.shape_cast %58 : vector<1x128x128xf32> to vector<128x128xf32>
    %cst_73 = arith.constant dense<0.000000e+00> : vector<64x128xf32>
    %60 = tpu.matmul %57, %59, %cst_73 {dimension_numbers = #tpu.dot_dimension_numbers<[1], [0], [0], [1], [0, 0, 1, 1], [], []>} : vector<64x128xf32>, vector<128x128xf32>, vector<64x128xf32> -> vector<64x128xf32>
    %61 = arith.addf %55, %60 : vector<64x128xf32>
    %c0_74 = arith.constant 0 : index
    %c2_75 = arith.constant 2 : index
    %c2_76 = arith.constant 2 : index
    %c0_77 = arith.constant 0 : index
    %62 = vector.load %arg9[%c0_74, %c2_75, %c2_76, %c0_77] : memref<1x10x10x128xf32, #tpu.memory_space<vmem>>, vector<1x8x8x128xf32>
    %63 = vector.shape_cast %62 : vector<1x8x8x128xf32> to vector<64x128xf32>
    %c8 = arith.constant 8 : index
    %c0_78 = arith.constant 0 : index
    %c0_79 = arith.constant 0 : index
    %64 = vector.load %arg4[%c8, %c0_78, %c0_79] : memref<9x128x128xf32, #tpu.memory_space<vmem>>, vector<1x128x128xf32>
    %65 = vector.shape_cast %64 : vector<1x128x128xf32> to vector<128x128xf32>
    %cst_80 = arith.constant dense<0.000000e+00> : vector<64x128xf32>
    %66 = tpu.matmul %63, %65, %cst_80 {dimension_numbers = #tpu.dot_dimension_numbers<[1], [0], [0], [1], [0, 0, 1, 1], [], []>} : vector<64x128xf32>, vector<128x128xf32>, vector<64x128xf32> -> vector<64x128xf32>
    %67 = arith.addf %61, %66 : vector<64x128xf32>
    %c0_81 = arith.constant 0 : index
    %c0_82 = arith.constant 0 : index
    %68 = vector.load %arg5[%c0_81, %c0_82] : memref<1x128xf32, #tpu.memory_space<vmem>>, vector<1x128xf32>
    %69 = vector.broadcast %68 : vector<1x128xf32> to vector<64x128xf32>
    %70 = arith.addf %67, %69 : vector<64x128xf32>
    %cst_83 = arith.constant 0.000000e+00 : f32
    %71 = vector.broadcast %cst_83 : f32 to vector<64x128xf32>
    %72 = arith.maximumf %70, %71 : vector<64x128xf32>
    %c0_84 = arith.constant 0 : index
    %c0_85 = arith.constant 0 : index
    %73 = vector.load %arg6[%c0_84, %c0_85] : memref<128x128xf32, #tpu.memory_space<vmem>>, vector<128x128xf32>
    %cst_86 = arith.constant dense<0.000000e+00> : vector<64x128xf32>
    %74 = tpu.matmul %72, %73, %cst_86 {dimension_numbers = #tpu.dot_dimension_numbers<[1], [0], [0], [1], [0, 0, 1, 1], [], []>} : vector<64x128xf32>, vector<128x128xf32>, vector<64x128xf32> -> vector<64x128xf32>
    %c0_87 = arith.constant 0 : index
    %c0_88 = arith.constant 0 : index
    %75 = vector.load %arg7[%c0_87, %c0_88] : memref<1x128xf32, #tpu.memory_space<vmem>>, vector<1x128xf32>
    %76 = vector.broadcast %75 : vector<1x128xf32> to vector<64x128xf32>
    %77 = arith.addf %74, %76 : vector<64x128xf32>
    %78 = arith.addf %77, %1 : vector<64x128xf32>
    %cst_89 = arith.constant 0.000000e+00 : f32
    %79 = vector.broadcast %cst_89 : f32 to vector<64x128xf32>
    %80 = arith.maximumf %78, %79 : vector<64x128xf32>
    %81 = vector.shape_cast %80 : vector<64x128xf32> to vector<1x64x128xf32>
    %c0_90 = arith.constant 0 : index
    %c0_91 = arith.constant 0 : index
    %c0_92 = arith.constant 0 : index
    %82 = vector.load %arg8[%c0_90, %c0_91, %c0_92] : memref<1x64x128xf32, #tpu.memory_space<vmem>>, vector<1x64x128xf32>
    tpu.vector_store %arg8[%c0_90, %c0_91, %c0_92], %81 {strides = array<i32>} : memref<1x64x128xf32, #tpu.memory_space<vmem>>, vector<1x64x128xf32>,
    return
  }
  func.func @transform_0(%arg0: i32) -> (i32, i32, i32) {
    %c0_i32 = arith.constant 0 : i32
    %c0_i32_0 = arith.constant 0 : i32
    %c0_i32_1 = arith.constant 0 : i32
    return %arg0, %c0_i32, %c0_i32_0 : i32, i32, i32
  }
  func.func @transform_1(%arg0: i32) -> (i32, i32) {
    %c0_i32 = arith.constant 0 : i32
    %c0_i32_0 = arith.constant 0 : i32
    %c0_i32_1 = arith.constant 0 : i32
    return %c0_i32, %c0_i32_0 : i32, i32
  }
  func.func @transform_2(%arg0: i32) -> (i32, i32) {
    %c0_i32 = arith.constant 0 : i32
    %c0_i32_0 = arith.constant 0 : i32
    %c0_i32_1 = arith.constant 0 : i32
    return %c0_i32, %c0_i32_0 : i32, i32
  }
  func.func @transform_3(%arg0: i32) -> (i32, i32, i32) {
    %c0_i32 = arith.constant 0 : i32
    %c0_i32_0 = arith.constant 0 : i32
    %c0_i32_1 = arith.constant 0 : i32
    %c0_i32_2 = arith.constant 0 : i32
    return %c0_i32, %c0_i32_0, %c0_i32_1 : i32, i32, i32
  }
  func.func @transform_4(%arg0: i32) -> (i32, i32) {
    %c0_i32 = arith.constant 0 : i32
    %c0_i32_0 = arith.constant 0 : i32
    %c0_i32_1 = arith.constant 0 : i32
    return %c0_i32, %c0_i32_0 : i32, i32
  }
  func.func @transform_5(%arg0: i32) -> (i32, i32) {
    %c0_i32 = arith.constant 0 : i32
    %c0_i32_0 = arith.constant 0 : i32
    %c0_i32_1 = arith.constant 0 : i32
    return %c0_i32, %c0_i32_0 : i32, i32
  }
  func.func @transform_6(%arg0: i32) -> (i32, i32) {
    %c0_i32 = arith.constant 0 : i32
    %c0_i32_0 = arith.constant 0 : i32
    %c0_i32_1 = arith.constant 0 : i32
    return %c0_i32, %c0_i32_0 : i32, i32
  }
  func.func @transform_7(%arg0: i32) -> (i32, i32, i32) {
    %c0_i32 = arith.constant 0 : i32
    %c0_i32_0 = arith.constant 0 : i32
    %c0_i32_1 = arith.constant 0 : i32
    return %arg0, %c0_i32, %c0_i32_0 : i32, i32, i32
  }
}

module attributes {stable_mosaic.version = 11 : i64} {
  func.func @_bottleneck_s2_kernel(%arg0: i32, %arg1: memref<1x64x512xf32, #tpu.memory_space<vmem>>, %arg2: memref<128x128xf32, #tpu.memory_space<vmem>>, %arg3: memref<1x128xf32, #tpu.memory_space<vmem>>, %arg4: memref<9x128x128xf32, #tpu.memory_space<vmem>>, %arg5: memref<1x128xf32, #tpu.memory_space<vmem>>, %arg6: memref<128x128xf32, #tpu.memory_space<vmem>>, %arg7: memref<1x128xf32, #tpu.memory_space<vmem>>, %arg8: memref<128x128xf32, #tpu.memory_space<vmem>>, %arg9: memref<1x128xf32, #tpu.memory_space<vmem>>, %arg10: memref<1x64x128xf32, #tpu.memory_space<vmem>>, %arg11: memref<1x9x9x128xf32, #tpu.memory_space<vmem>>, %arg12: memref<1x9x9x128xf32, #tpu.memory_space<vmem>>, %arg13: memref<1x9x9x128xf32, #tpu.memory_space<vmem>>, %arg14: memref<1x9x9x128xf32, #tpu.memory_space<vmem>>) attributes {dimension_semantics = [#tpu.dimension_semantics<parallel>], iteration_bounds = array<i64: 2>, scalar_prefetch = 0 : i64, scratch_operands = 4 : i64, tpu.core_type = #tpu.core_type<tc>, window_params = [{transform_indices = @transform_0, window_bounds = array<i64: 1, 64, 512>}, {pipeline_mode = #tpu.pipeline_mode<synchronous>, transform_indices = @transform_1, window_bounds = array<i64: 128, 128>}, {pipeline_mode = #tpu.pipeline_mode<synchronous>, transform_indices = @transform_2, window_bounds = array<i64: 1, 128>}, {pipeline_mode = #tpu.pipeline_mode<synchronous>, transform_indices = @transform_3, window_bounds = array<i64: 9, 128, 128>}, {pipeline_mode = #tpu.pipeline_mode<synchronous>, transform_indices = @transform_4, window_bounds = array<i64: 1, 128>}, {pipeline_mode = #tpu.pipeline_mode<synchronous>, transform_indices = @transform_5, window_bounds = array<i64: 128, 128>}, {pipeline_mode = #tpu.pipeline_mode<synchronous>, transform_indices = @transform_6, window_bounds = array<i64: 1, 128>}, {pipeline_mode = #tpu.pipeline_mode<synchronous>, transform_indices = @transform_7, window_bounds = array<i64: 128, 128>}, {pipeline_mode = #tpu.pipeline_mode<synchronous>, transform_indices = @transform_8, window_bounds = array<i64: 1, 128>}, {transform_indices = @transform_9, window_bounds = array<i64: 1, 64, 128>}]} {
    %c0 = arith.constant 0 : index
    %c0_0 = arith.constant 0 : index
    %c0_1 = arith.constant 0 : index
    %0 = vector.load %arg1[%c0, %c0_0, %c0_1] : memref<1x64x512xf32, #tpu.memory_space<vmem>>, vector<1x64x512xf32>
    %1 = vector.shape_cast %0 : vector<1x64x512xf32> to vector<64x512xf32>
    %cst = arith.constant 0.000000e+00 : f32
    %2 = vector.broadcast %cst : f32 to vector<1x9x9x128xf32>
    %c0_2 = arith.constant 0 : index
    %c0_3 = arith.constant 0 : index
    %c0_4 = arith.constant 0 : index
    %c0_5 = arith.constant 0 : index
    %3 = vector.load %arg11[%c0_2, %c0_3, %c0_4, %c0_5] : memref<1x9x9x128xf32, #tpu.memory_space<vmem>>, vector<1x9x9x128xf32>
    tpu.vector_store %arg11[%c0_2, %c0_3, %c0_4, %c0_5], %2 {strides = array<i32>} : memref<1x9x9x128xf32, #tpu.memory_space<vmem>>, vector<1x9x9x128xf32>,
    %cst_6 = arith.constant 0.000000e+00 : f32
    %4 = vector.broadcast %cst_6 : f32 to vector<1x9x9x128xf32>
    %c0_7 = arith.constant 0 : index
    %c0_8 = arith.constant 0 : index
    %c0_9 = arith.constant 0 : index
    %c0_10 = arith.constant 0 : index
    %5 = vector.load %arg12[%c0_7, %c0_8, %c0_9, %c0_10] : memref<1x9x9x128xf32, #tpu.memory_space<vmem>>, vector<1x9x9x128xf32>
    tpu.vector_store %arg12[%c0_7, %c0_8, %c0_9, %c0_10], %4 {strides = array<i32>} : memref<1x9x9x128xf32, #tpu.memory_space<vmem>>, vector<1x9x9x128xf32>,
    %cst_11 = arith.constant 0.000000e+00 : f32
    %6 = vector.broadcast %cst_11 : f32 to vector<1x9x9x128xf32>
    %c0_12 = arith.constant 0 : index
    %c0_13 = arith.constant 0 : index
    %c0_14 = arith.constant 0 : index
    %c0_15 = arith.constant 0 : index
    %7 = vector.load %arg13[%c0_12, %c0_13, %c0_14, %c0_15] : memref<1x9x9x128xf32, #tpu.memory_space<vmem>>, vector<1x9x9x128xf32>
    tpu.vector_store %arg13[%c0_12, %c0_13, %c0_14, %c0_15], %6 {strides = array<i32>} : memref<1x9x9x128xf32, #tpu.memory_space<vmem>>, vector<1x9x9x128xf32>,
    %cst_16 = arith.constant 0.000000e+00 : f32
    %8 = vector.broadcast %cst_16 : f32 to vector<1x9x9x128xf32>
    %c0_17 = arith.constant 0 : index
    %c0_18 = arith.constant 0 : index
    %c0_19 = arith.constant 0 : index
    %c0_20 = arith.constant 0 : index
    %9 = vector.load %arg14[%c0_17, %c0_18, %c0_19, %c0_20] : memref<1x9x9x128xf32, #tpu.memory_space<vmem>>, vector<1x9x9x128xf32>
    tpu.vector_store %arg14[%c0_17, %c0_18, %c0_19, %c0_20], %8 {strides = array<i32>} : memref<1x9x9x128xf32, #tpu.memory_space<vmem>>, vector<1x9x9x128xf32>,
    %10 = vector.extract_strided_slice %1 {offsets = [0, 0], sizes = [64, 128], strides = [1, 1]} : vector<64x512xf32> to vector<64x128xf32>
    %c0_21 = arith.constant 0 : index
    %c0_22 = arith.constant 0 : index
    %11 = vector.load %arg2[%c0_21, %c0_22] : memref<128x128xf32, #tpu.memory_space<vmem>>, vector<128x128xf32>
    %cst_23 = arith.constant dense<0.000000e+00> : vector<64x128xf32>
    %12 = tpu.matmul %10, %11, %cst_23 {dimension_numbers = #tpu.dot_dimension_numbers<[1], [0], [0], [1], [0, 0, 1, 1], [], []>} : vector<64x128xf32>, vector<128x128xf32>, vector<64x128xf32> -> vector<64x128xf32>
    %c0_24 = arith.constant 0 : index
    %c0_25 = arith.constant 0 : index
    %13 = vector.load %arg3[%c0_24, %c0_25] : memref<1x128xf32, #tpu.memory_space<vmem>>, vector<1x128xf32>
    %14 = vector.broadcast %13 : vector<1x128xf32> to vector<64x128xf32>
    %15 = arith.addf %12, %14 : vector<64x128xf32>
    %cst_26 = arith.constant 0.000000e+00 : f32
    %16 = vector.broadcast %cst_26 : f32 to vector<64x128xf32>
    %17 = arith.maximumf %15, %16 : vector<64x128xf32>
    %18 = vector.shape_cast %17 : vector<64x128xf32> to vector<1x8x8x128xf32>
    %c0_27 = arith.constant 0 : index
    %c0_28 = arith.constant 0 : index
    %c0_29 = arith.constant 0 : index
    %c0_30 = arith.constant 0 : index
    %19 = vector.load %arg11[%c0_27, %c0_28, %c0_29, %c0_30] : memref<1x9x9x128xf32, #tpu.memory_space<vmem>>, vector<1x8x8x128xf32>
    tpu.vector_store %arg11[%c0_27, %c0_28, %c0_29, %c0_30], %18 {strides = array<i32>} : memref<1x9x9x128xf32, #tpu.memory_space<vmem>>, vector<1x8x8x128xf32>,
    %20 = vector.extract_strided_slice %1 {offsets = [0, 128], sizes = [64, 128], strides = [1, 1]} : vector<64x512xf32> to vector<64x128xf32>
    %c0_31 = arith.constant 0 : index
    %c0_32 = arith.constant 0 : index
    %21 = vector.load %arg2[%c0_31, %c0_32] : memref<128x128xf32, #tpu.memory_space<vmem>>, vector<128x128xf32>
    %cst_33 = arith.constant dense<0.000000e+00> : vector<64x128xf32>
    %22 = tpu.matmul %20, %21, %cst_33 {dimension_numbers = #tpu.dot_dimension_numbers<[1], [0], [0], [1], [0, 0, 1, 1], [], []>} : vector<64x128xf32>, vector<128x128xf32>, vector<64x128xf32> -> vector<64x128xf32>
    %c0_34 = arith.constant 0 : index
    %c0_35 = arith.constant 0 : index
    %23 = vector.load %arg3[%c0_34, %c0_35] : memref<1x128xf32, #tpu.memory_space<vmem>>, vector<1x128xf32>
    %24 = vector.broadcast %23 : vector<1x128xf32> to vector<64x128xf32>
    %25 = arith.addf %22, %24 : vector<64x128xf32>
    %cst_36 = arith.constant 0.000000e+00 : f32
    %26 = vector.broadcast %cst_36 : f32 to vector<64x128xf32>
    %27 = arith.maximumf %25, %26 : vector<64x128xf32>
    %28 = vector.shape_cast %27 : vector<64x128xf32> to vector<1x8x8x128xf32>
    %c0_37 = arith.constant 0 : index
    %c0_38 = arith.constant 0 : index
    %c1 = arith.constant 1 : index
    %c0_39 = arith.constant 0 : index
    %29 = vector.load %arg12[%c0_37, %c0_38, %c1, %c0_39] : memref<1x9x9x128xf32, #tpu.memory_space<vmem>>, vector<1x8x8x128xf32>
    tpu.vector_store %arg12[%c0_37, %c0_38, %c1, %c0_39], %28 {strides = array<i32>} : memref<1x9x9x128xf32, #tpu.memory_space<vmem>>, vector<1x8x8x128xf32>,
    %30 = vector.extract_strided_slice %1 {offsets = [0, 256], sizes = [64, 128], strides = [1, 1]} : vector<64x512xf32> to vector<64x128xf32>
    %c0_40 = arith.constant 0 : index
    %c0_41 = arith.constant 0 : index
    %31 = vector.load %arg2[%c0_40, %c0_41] : memref<128x128xf32, #tpu.memory_space<vmem>>, vector<128x128xf32>
    %cst_42 = arith.constant dense<0.000000e+00> : vector<64x128xf32>
    %32 = tpu.matmul %30, %31, %cst_42 {dimension_numbers = #tpu.dot_dimension_numbers<[1], [0], [0], [1], [0, 0, 1, 1], [], []>} : vector<64x128xf32>, vector<128x128xf32>, vector<64x128xf32> -> vector<64x128xf32>
    %c0_43 = arith.constant 0 : index
    %c0_44 = arith.constant 0 : index
    %33 = vector.load %arg3[%c0_43, %c0_44] : memref<1x128xf32, #tpu.memory_space<vmem>>, vector<1x128xf32>
    %34 = vector.broadcast %33 : vector<1x128xf32> to vector<64x128xf32>
    %35 = arith.addf %32, %34 : vector<64x128xf32>
    %cst_45 = arith.constant 0.000000e+00 : f32
    %36 = vector.broadcast %cst_45 : f32 to vector<64x128xf32>
    %37 = arith.maximumf %35, %36 : vector<64x128xf32>
    %38 = vector.shape_cast %37 : vector<64x128xf32> to vector<1x8x8x128xf32>
    %c0_46 = arith.constant 0 : index
    %c1_47 = arith.constant 1 : index
    %c0_48 = arith.constant 0 : index
    %c0_49 = arith.constant 0 : index
    %39 = vector.load %arg13[%c0_46, %c1_47, %c0_48, %c0_49] : memref<1x9x9x128xf32, #tpu.memory_space<vmem>>, vector<1x8x8x128xf32>
    tpu.vector_store %arg13[%c0_46, %c1_47, %c0_48, %c0_49], %38 {strides = array<i32>} : memref<1x9x9x128xf32, #tpu.memory_space<vmem>>, vector<1x8x8x128xf32>,
    %40 = vector.extract_strided_slice %1 {offsets = [0, 384], sizes = [64, 128], strides = [1, 1]} : vector<64x512xf32> to vector<64x128xf32>
    %c0_50 = arith.constant 0 : index
    %c0_51 = arith.constant 0 : index
    %41 = vector.load %arg2[%c0_50, %c0_51] : memref<128x128xf32, #tpu.memory_space<vmem>>, vector<128x128xf32>
    %cst_52 = arith.constant dense<0.000000e+00> : vector<64x128xf32>
    %42 = tpu.matmul %40, %41, %cst_52 {dimension_numbers = #tpu.dot_dimension_numbers<[1], [0], [0], [1], [0, 0, 1, 1], [], []>} : vector<64x128xf32>, vector<128x128xf32>, vector<64x128xf32> -> vector<64x128xf32>
    %c0_53 = arith.constant 0 : index
    %c0_54 = arith.constant 0 : index
    %43 = vector.load %arg3[%c0_53, %c0_54] : memref<1x128xf32, #tpu.memory_space<vmem>>, vector<1x128xf32>
    %44 = vector.broadcast %43 : vector<1x128xf32> to vector<64x128xf32>
    %45 = arith.addf %42, %44 : vector<64x128xf32>
    %cst_55 = arith.constant 0.000000e+00 : f32
    %46 = vector.broadcast %cst_55 : f32 to vector<64x128xf32>
    %47 = arith.maximumf %45, %46 : vector<64x128xf32>
    %48 = vector.shape_cast %47 : vector<64x128xf32> to vector<1x8x8x128xf32>
    %c0_56 = arith.constant 0 : index
    %c1_57 = arith.constant 1 : index
    %c1_58 = arith.constant 1 : index
    %c0_59 = arith.constant 0 : index
    %49 = vector.load %arg14[%c0_56, %c1_57, %c1_58, %c0_59] : memref<1x9x9x128xf32, #tpu.memory_space<vmem>>, vector<1x8x8x128xf32>
    tpu.vector_store %arg14[%c0_56, %c1_57, %c1_58, %c0_59], %48 {strides = array<i32>} : memref<1x9x9x128xf32, #tpu.memory_space<vmem>>, vector<1x8x8x128xf32>,
    %cst_60 = arith.constant 0.000000e+00 : f32
    %50 = vector.broadcast %cst_60 : f32 to vector<64x128xf32>
    %c0_61 = arith.constant 0 : index
    %c0_62 = arith.constant 0 : index
    %c0_63 = arith.constant 0 : index
    %c0_64 = arith.constant 0 : index
    %51 = vector.load %arg14[%c0_61, %c0_62, %c0_63, %c0_64] : memref<1x9x9x128xf32, #tpu.memory_space<vmem>>, vector<1x8x8x128xf32>
    %52 = vector.shape_cast %51 : vector<1x8x8x128xf32> to vector<64x128xf32>
    %c0_65 = arith.constant 0 : index
    %c0_66 = arith.constant 0 : index
    %c0_67 = arith.constant 0 : index
    %53 = vector.load %arg4[%c0_65, %c0_66, %c0_67] : memref<9x128x128xf32, #tpu.memory_space<vmem>>, vector<1x128x128xf32>
    %54 = vector.shape_cast %53 : vector<1x128x128xf32> to vector<128x128xf32>
    %cst_68 = arith.constant dense<0.000000e+00> : vector<64x128xf32>
    %55 = tpu.matmul %52, %54, %cst_68 {dimension_numbers = #tpu.dot_dimension_numbers<[1], [0], [0], [1], [0, 0, 1, 1], [], []>} : vector<64x128xf32>, vector<128x128xf32>, vector<64x128xf32> -> vector<64x128xf32>
    %56 = arith.addf %50, %55 : vector<64x128xf32>
    %c0_69 = arith.constant 0 : index
    %c0_70 = arith.constant 0 : index
    %c0_71 = arith.constant 0 : index
    %c0_72 = arith.constant 0 : index
    %57 = vector.load %arg13[%c0_69, %c0_70, %c0_71, %c0_72] : memref<1x9x9x128xf32, #tpu.memory_space<vmem>>, vector<1x8x8x128xf32>
    %58 = vector.shape_cast %57 : vector<1x8x8x128xf32> to vector<64x128xf32>
    %c1_73 = arith.constant 1 : index
    %c0_74 = arith.constant 0 : index
    %c0_75 = arith.constant 0 : index
    %59 = vector.load %arg4[%c1_73, %c0_74, %c0_75] : memref<9x128x128xf32, #tpu.memory_space<vmem>>, vector<1x128x128xf32>
    %60 = vector.shape_cast %59 : vector<1x128x128xf32> to vector<128x128xf32>
    %cst_76 = arith.constant dense<0.000000e+00> : vector<64x128xf32>
    %61 = tpu.matmul %58, %60, %cst_76 {dimension_numbers = #tpu.dot_dimension_numbers<[1], [0], [0], [1], [0, 0, 1, 1], [], []>} : vector<64x128xf32>, vector<128x128xf32>, vector<64x128xf32> -> vector<64x128xf32>
    %62 = arith.addf %56, %61 : vector<64x128xf32>
    %c0_77 = arith.constant 0 : index
    %c0_78 = arith.constant 0 : index
    %c1_79 = arith.constant 1 : index
    %c0_80 = arith.constant 0 : index
    %63 = vector.load %arg14[%c0_77, %c0_78, %c1_79, %c0_80] : memref<1x9x9x128xf32, #tpu.memory_space<vmem>>, vector<1x8x8x128xf32>
    %64 = vector.shape_cast %63 : vector<1x8x8x128xf32> to vector<64x128xf32>
    %c2 = arith.constant 2 : index
    %c0_81 = arith.constant 0 : index
    %c0_82 = arith.constant 0 : index
    %65 = vector.load %arg4[%c2, %c0_81, %c0_82] : memref<9x128x128xf32, #tpu.memory_space<vmem>>, vector<1x128x128xf32>
    %66 = vector.shape_cast %65 : vector<1x128x128xf32> to vector<128x128xf32>
    %cst_83 = arith.constant dense<0.000000e+00> : vector<64x128xf32>
    %67 = tpu.matmul %64, %66, %cst_83 {dimension_numbers = #tpu.dot_dimension_numbers<[1], [0], [0], [1], [0, 0, 1, 1], [], []>} : vector<64x128xf32>, vector<128x128xf32>, vector<64x128xf32> -> vector<64x128xf32>
    %68 = arith.addf %62, %67 : vector<64x128xf32>
    %c0_84 = arith.constant 0 : index
    %c0_85 = arith.constant 0 : index
    %c0_86 = arith.constant 0 : index
    %c0_87 = arith.constant 0 : index
    %69 = vector.load %arg12[%c0_84, %c0_85, %c0_86, %c0_87] : memref<1x9x9x128xf32, #tpu.memory_space<vmem>>, vector<1x8x8x128xf32>
    %70 = vector.shape_cast %69 : vector<1x8x8x128xf32> to vector<64x128xf32>
    %c3 = arith.constant 3 : index
    %c0_88 = arith.constant 0 : index
    %c0_89 = arith.constant 0 : index
    %71 = vector.load %arg4[%c3, %c0_88, %c0_89] : memref<9x128x128xf32, #tpu.memory_space<vmem>>, vector<1x128x128xf32>
    %72 = vector.shape_cast %71 : vector<1x128x128xf32> to vector<128x128xf32>
    %cst_90 = arith.constant dense<0.000000e+00> : vector<64x128xf32>
    %73 = tpu.matmul %70, %72, %cst_90 {dimension_numbers = #tpu.dot_dimension_numbers<[1], [0], [0], [1], [0, 0, 1, 1], [], []>} : vector<64x128xf32>, vector<128x128xf32>, vector<64x128xf32> -> vector<64x128xf32>
    %74 = arith.addf %68, %73 : vector<64x128xf32>
    %c0_91 = arith.constant 0 : index
    %c0_92 = arith.constant 0 : index
    %c0_93 = arith.constant 0 : index
    %c0_94 = arith.constant 0 : index
    %75 = vector.load %arg11[%c0_91, %c0_92, %c0_93, %c0_94] : memref<1x9x9x128xf32, #tpu.memory_space<vmem>>, vector<1x8x8x128xf32>
    %76 = vector.shape_cast %75 : vector<1x8x8x128xf32> to vector<64x128xf32>
    %c4 = arith.constant 4 : index
    %c0_95 = arith.constant 0 : index
    %c0_96 = arith.constant 0 : index
    %77 = vector.load %arg4[%c4, %c0_95, %c0_96] : memref<9x128x128xf32, #tpu.memory_space<vmem>>, vector<1x128x128xf32>
    %78 = vector.shape_cast %77 : vector<1x128x128xf32> to vector<128x128xf32>
    %cst_97 = arith.constant dense<0.000000e+00> : vector<64x128xf32>
    %79 = tpu.matmul %76, %78, %cst_97 {dimension_numbers = #tpu.dot_dimension_numbers<[1], [0], [0], [1], [0, 0, 1, 1], [], []>} : vector<64x128xf32>, vector<128x128xf32>, vector<64x128xf32> -> vector<64x128xf32>
    %80 = arith.addf %74, %79 : vector<64x128xf32>
    %c0_98 = arith.constant 0 : index
    %c0_99 = arith.constant 0 : index
    %c1_100 = arith.constant 1 : index
    %c0_101 = arith.constant 0 : index
    %81 = vector.load %arg12[%c0_98, %c0_99, %c1_100, %c0_101] : memref<1x9x9x128xf32, #tpu.memory_space<vmem>>, vector<1x8x8x128xf32>
    %82 = vector.shape_cast %81 : vector<1x8x8x128xf32> to vector<64x128xf32>
    %c5 = arith.constant 5 : index
    %c0_102 = arith.constant 0 : index
    %c0_103 = arith.constant 0 : index
    %83 = vector.load %arg4[%c5, %c0_102, %c0_103] : memref<9x128x128xf32, #tpu.memory_space<vmem>>, vector<1x128x128xf32>
    %84 = vector.shape_cast %83 : vector<1x128x128xf32> to vector<128x128xf32>
    %cst_104 = arith.constant dense<0.000000e+00> : vector<64x128xf32>
    %85 = tpu.matmul %82, %84, %cst_104 {dimension_numbers = #tpu.dot_dimension_numbers<[1], [0], [0], [1], [0, 0, 1, 1], [], []>} : vector<64x128xf32>, vector<128x128xf32>, vector<64x128xf32> -> vector<64x128xf32>
    %86 = arith.addf %80, %85 : vector<64x128xf32>
    %c0_105 = arith.constant 0 : index
    %c1_106 = arith.constant 1 : index
    %c0_107 = arith.constant 0 : index
    %c0_108 = arith.constant 0 : index
    %87 = vector.load %arg14[%c0_105, %c1_106, %c0_107, %c0_108] : memref<1x9x9x128xf32, #tpu.memory_space<vmem>>, vector<1x8x8x128xf32>
    %88 = vector.shape_cast %87 : vector<1x8x8x128xf32> to vector<64x128xf32>
    %c6 = arith.constant 6 : index
    %c0_109 = arith.constant 0 : index
    %c0_110 = arith.constant 0 : index
    %89 = vector.load %arg4[%c6, %c0_109, %c0_110] : memref<9x128x128xf32, #tpu.memory_space<vmem>>, vector<1x128x128xf32>
    %90 = vector.shape_cast %89 : vector<1x128x128xf32> to vector<128x128xf32>
    %cst_111 = arith.constant dense<0.000000e+00> : vector<64x128xf32>
    %91 = tpu.matmul %88, %90, %cst_111 {dimension_numbers = #tpu.dot_dimension_numbers<[1], [0], [0], [1], [0, 0, 1, 1], [], []>} : vector<64x128xf32>, vector<128x128xf32>, vector<64x128xf32> -> vector<64x128xf32>
    %92 = arith.addf %86, %91 : vector<64x128xf32>
    %c0_112 = arith.constant 0 : index
    %c1_113 = arith.constant 1 : index
    %c0_114 = arith.constant 0 : index
    %c0_115 = arith.constant 0 : index
    %93 = vector.load %arg13[%c0_112, %c1_113, %c0_114, %c0_115] : memref<1x9x9x128xf32, #tpu.memory_space<vmem>>, vector<1x8x8x128xf32>
    %94 = vector.shape_cast %93 : vector<1x8x8x128xf32> to vector<64x128xf32>
    %c7 = arith.constant 7 : index
    %c0_116 = arith.constant 0 : index
    %c0_117 = arith.constant 0 : index
    %95 = vector.load %arg4[%c7, %c0_116, %c0_117] : memref<9x128x128xf32, #tpu.memory_space<vmem>>, vector<1x128x128xf32>
    %96 = vector.shape_cast %95 : vector<1x128x128xf32> to vector<128x128xf32>
    %cst_118 = arith.constant dense<0.000000e+00> : vector<64x128xf32>
    %97 = tpu.matmul %94, %96, %cst_118 {dimension_numbers = #tpu.dot_dimension_numbers<[1], [0], [0], [1], [0, 0, 1, 1], [], []>} : vector<64x128xf32>, vector<128x128xf32>, vector<64x128xf32> -> vector<64x128xf32>
    %98 = arith.addf %92, %97 : vector<64x128xf32>
    %c0_119 = arith.constant 0 : index
    %c1_120 = arith.constant 1 : index
    %c1_121 = arith.constant 1 : index
    %c0_122 = arith.constant 0 : index
    %99 = vector.load %arg14[%c0_119, %c1_120, %c1_121, %c0_122] : memref<1x9x9x128xf32, #tpu.memory_space<vmem>>, vector<1x8x8x128xf32>
    %100 = vector.shape_cast %99 : vector<1x8x8x128xf32> to vector<64x128xf32>
    %c8 = arith.constant 8 : index
    %c0_123 = arith.constant 0 : index
    %c0_124 = arith.constant 0 : index
    %101 = vector.load %arg4[%c8, %c0_123, %c0_124] : memref<9x128x128xf32, #tpu.memory_space<vmem>>, vector<1x128x128xf32>
    %102 = vector.shape_cast %101 : vector<1x128x128xf32> to vector<128x128xf32>
    %cst_125 = arith.constant dense<0.000000e+00> : vector<64x128xf32>
    %103 = tpu.matmul %100, %102, %cst_125 {dimension_numbers = #tpu.dot_dimension_numbers<[1], [0], [0], [1], [0, 0, 1, 1], [], []>} : vector<64x128xf32>, vector<128x128xf32>, vector<64x128xf32> -> vector<64x128xf32>
    %104 = arith.addf %98, %103 : vector<64x128xf32>
    %c0_126 = arith.constant 0 : index
    %c0_127 = arith.constant 0 : index
    %105 = vector.load %arg5[%c0_126, %c0_127] : memref<1x128xf32, #tpu.memory_space<vmem>>, vector<1x128xf32>
    %106 = vector.broadcast %105 : vector<1x128xf32> to vector<64x128xf32>
    %107 = arith.addf %104, %106 : vector<64x128xf32>
    %cst_128 = arith.constant 0.000000e+00 : f32
    %108 = vector.broadcast %cst_128 : f32 to vector<64x128xf32>
    %109 = arith.maximumf %107, %108 : vector<64x128xf32>
    %c0_129 = arith.constant 0 : index
    %c0_130 = arith.constant 0 : index
    %110 = vector.load %arg6[%c0_129, %c0_130] : memref<128x128xf32, #tpu.memory_space<vmem>>, vector<128x128xf32>
    %cst_131 = arith.constant dense<0.000000e+00> : vector<64x128xf32>
    %111 = tpu.matmul %109, %110, %cst_131 {dimension_numbers = #tpu.dot_dimension_numbers<[1], [0], [0], [1], [0, 0, 1, 1], [], []>} : vector<64x128xf32>, vector<128x128xf32>, vector<64x128xf32> -> vector<64x128xf32>
    %c0_132 = arith.constant 0 : index
    %c0_133 = arith.constant 0 : index
    %112 = vector.load %arg7[%c0_132, %c0_133] : memref<1x128xf32, #tpu.memory_space<vmem>>, vector<1x128xf32>
    %113 = vector.broadcast %112 : vector<1x128xf32> to vector<64x128xf32>
    %114 = arith.addf %111, %113 : vector<64x128xf32>
    %115 = vector.extract_strided_slice %1 {offsets = [0, 0], sizes = [64, 128], strides = [1, 1]} : vector<64x512xf32> to vector<64x128xf32>
    %c0_134 = arith.constant 0 : index
    %c0_135 = arith.constant 0 : index
    %116 = vector.load %arg8[%c0_134, %c0_135] : memref<128x128xf32, #tpu.memory_space<vmem>>, vector<128x128xf32>
    %cst_136 = arith.constant dense<0.000000e+00> : vector<64x128xf32>
    %117 = tpu.matmul %115, %116, %cst_136 {dimension_numbers = #tpu.dot_dimension_numbers<[1], [0], [0], [1], [0, 0, 1, 1], [], []>} : vector<64x128xf32>, vector<128x128xf32>, vector<64x128xf32> -> vector<64x128xf32>
    %c0_137 = arith.constant 0 : index
    %c0_138 = arith.constant 0 : index
    %118 = vector.load %arg9[%c0_137, %c0_138] : memref<1x128xf32, #tpu.memory_space<vmem>>, vector<1x128xf32>
    %119 = vector.broadcast %118 : vector<1x128xf32> to vector<64x128xf32>
    %120 = arith.addf %117, %119 : vector<64x128xf32>
    %121 = arith.addf %114, %120 : vector<64x128xf32>
    %cst_139 = arith.constant 0.000000e+00 : f32
    %122 = vector.broadcast %cst_139 : f32 to vector<64x128xf32>
    %123 = arith.maximumf %121, %122 : vector<64x128xf32>
    %124 = vector.shape_cast %123 : vector<64x128xf32> to vector<1x64x128xf32>
    %c0_140 = arith.constant 0 : index
    %c0_141 = arith.constant 0 : index
    %c0_142 = arith.constant 0 : index
    %125 = vector.load %arg10[%c0_140, %c0_141, %c0_142] : memref<1x64x128xf32, #tpu.memory_space<vmem>>, vector<1x64x128xf32>
    tpu.vector_store %arg10[%c0_140, %c0_141, %c0_142], %124 {strides = array<i32>} : memref<1x64x128xf32, #tpu.memory_space<vmem>>, vector<1x64x128xf32>,
    return
  }
  func.func @transform_0(%arg0: i32) -> (i32, i32, i32) {
    %c0_i32 = arith.constant 0 : i32
    %c0_i32_0 = arith.constant 0 : i32
    %c0_i32_1 = arith.constant 0 : i32
    return %arg0, %c0_i32, %c0_i32_0 : i32, i32, i32
  }
  func.func @transform_1(%arg0: i32) -> (i32, i32) {
    %c0_i32 = arith.constant 0 : i32
    %c0_i32_0 = arith.constant 0 : i32
    %c0_i32_1 = arith.constant 0 : i32
    return %c0_i32, %c0_i32_0 : i32, i32
  }
  func.func @transform_2(%arg0: i32) -> (i32, i32) {
    %c0_i32 = arith.constant 0 : i32
    %c0_i32_0 = arith.constant 0 : i32
    %c0_i32_1 = arith.constant 0 : i32
    return %c0_i32, %c0_i32_0 : i32, i32
  }
  func.func @transform_3(%arg0: i32) -> (i32, i32, i32) {
    %c0_i32 = arith.constant 0 : i32
    %c0_i32_0 = arith.constant 0 : i32
    %c0_i32_1 = arith.constant 0 : i32
    %c0_i32_2 = arith.constant 0 : i32
    return %c0_i32, %c0_i32_0, %c0_i32_1 : i32, i32, i32
  }
  func.func @transform_4(%arg0: i32) -> (i32, i32) {
    %c0_i32 = arith.constant 0 : i32
    %c0_i32_0 = arith.constant 0 : i32
    %c0_i32_1 = arith.constant 0 : i32
    return %c0_i32, %c0_i32_0 : i32, i32
  }
  func.func @transform_5(%arg0: i32) -> (i32, i32) {
    %c0_i32 = arith.constant 0 : i32
    %c0_i32_0 = arith.constant 0 : i32
    %c0_i32_1 = arith.constant 0 : i32
    return %c0_i32, %c0_i32_0 : i32, i32
  }
  func.func @transform_6(%arg0: i32) -> (i32, i32) {
    %c0_i32 = arith.constant 0 : i32
    %c0_i32_0 = arith.constant 0 : i32
    %c0_i32_1 = arith.constant 0 : i32
    return %c0_i32, %c0_i32_0 : i32, i32
  }
  func.func @transform_7(%arg0: i32) -> (i32, i32) {
    %c0_i32 = arith.constant 0 : i32
    %c0_i32_0 = arith.constant 0 : i32
    %c0_i32_1 = arith.constant 0 : i32
    return %c0_i32, %c0_i32_0 : i32, i32
  }
  func.func @transform_8(%arg0: i32) -> (i32, i32) {
    %c0_i32 = arith.constant 0 : i32
    %c0_i32_0 = arith.constant 0 : i32
    %c0_i32_1 = arith.constant 0 : i32
    return %c0_i32, %c0_i32_0 : i32, i32
  }
  func.func @transform_9(%arg0: i32) -> (i32, i32, i32) {
    %c0_i32 = arith.constant 0 : i32
    %c0_i32_0 = arith.constant 0 : i32
    %c0_i32_1 = arith.constant 0 : i32
    return %arg0, %c0_i32, %c0_i32_0 : i32, i32, i32
  }
}

</mosaic_0001>

<llo_original>
// kernel: head_forward.4
$region0: #{head_forward.4}
  #allocation0 [shape = 'u32[]', space=smem, size = 0x4, offset = 0x4, fixed_abs, tag = 'smem constant byte address 0x4 - core index']
  #allocation1 [shape = 'u32[144,128]{1,0:T(1,128)}', space=vmem, size = 0x12000, scoped, tag = 'internal scratch']
  #allocation2 [shape = 'f32[1,10,10,128]{3,2,1,0:T(8,128)}', space=vmem, size = 0x14000, scoped, tag = 'scratch operand']
  %s0 = inlined_call_operand.vmem [shape: f32[2,64,128], index: 0, kind: input, shape index: {}]
  %s1 = inlined_call_operand.vmem [shape: f32[128,128], index: 1, kind: input, shape index: {}]
  %s2 = inlined_call_operand.vmem [shape: f32[1,128], index: 2, kind: input, shape index: {}]
  %s3 = inlined_call_operand.vmem [shape: f32[9,128,128], index: 3, kind: input, shape index: {}]
  %s4 = inlined_call_operand.vmem [shape: f32[1,128], index: 4, kind: input, shape index: {}]
  %s5 = inlined_call_operand.vmem [shape: f32[128,128], index: 5, kind: input, shape index: {}]
  %s6 = inlined_call_operand.vmem [shape: f32[1,128], index: 6, kind: input, shape index: {}]
  %s7 = inlined_call_operand.vmem [shape: f32[2,64,128], index: 7, kind: output, shape index: {}]
  %s8 = sld [smem:[#allocation0]]
  $region61: #{head_forward.4} parent=0
    _
  %s10 = ssub.s32 1, %s8
  %s11 = scalar_select 0, %s10, %s8
  loop: start=0, step=1, limit=4
  $region2: #{head_forward.4} parent=0 // loop_pre_header
    _
  $region3: #{head_forward.4} parent=0 // loop_header
    %s13 = sphi 0, %s17
    %p14 = scmp.ge.s32.totalorder %s13, 4
    %s23 = sphi 0, %s25
    %s26 = sphi 0, %s23
    %s27 = sphi 0, %s26
    %s43 = sphi 0, %s27
    %s47 = sphi 0, %s47
    %s49 = sphi 0, %s47
    %s50 = sphi 0, %s49
    %s64 = sphi 0, %s50
    %s68 = sphi 0, %s68
    %s70 = sphi 0, %s68
    %s71 = sphi 0, %s70
    %s85 = sphi 0, %s71
    %s89 = sphi 0, %s89
    %s91 = sphi 0, %s89
    %s92 = sphi 0, %s91
    %s106 = sphi 0, %s92
    %s110 = sphi 0, %s110
    %s112 = sphi 0, %s110
    %s113 = sphi 0, %s112
    %s127 = sphi 0, %s113
    %s131 = sphi 0, %s131
    %s133 = sphi 0, %s131
    %s134 = sphi 0, %s133
    %s148 = sphi 0, %s134
    %s152 = sphi 0, %s152
    %s154 = sphi 0, %s152
    %s155 = sphi 0, %s154
    %s169 = sphi 0, %s155
    %s175 = sphi 0, %s177
    %s178 = sphi 0, %s175
    %s179 = sphi 0, %s178
    %s195 = sphi 0, %s179
  $region4: #{head_forward.4} parent=0 // loop_header_branch
    %16 = sbr.rel (%p14) target = $region8
  $region5: #{head_forward.4} parent=0 // loop_body
    %s18 = ssub.s32 %s13, 1
    %s19 = ssub.s32 %s13, 2
    %s20 = sadd.s32 %s13, 1
    %s21 = ssub.s32 %s13, %s20
    %p22 = scmp.eq.s32.totalorder %s21, 0
    %s24 = sadd.s32 %s23, 1
    %s25 = scalar_select %p22, %s23, %s24
    %p28 = pneg %p22
    %p29 = scmp.eq.s32.totalorder %s13, 1
    %p30 = por %p28, %p29
    %p31 = scmp.ne.s32.totalorder %s23, %s26
    %p32 = scmp.eq.s32.totalorder %s13, 0
    %p33 = por %p31, %p32
    %p34 = scmp.ne.s32.totalorder %s23, %s26
    %p35 = scmp.eq.s32.totalorder %s18, 1
    %p36 = por %p34, %p35
    %p37 = scmp.ne.s32.totalorder %s26, %s27
    %p38 = scmp.eq.s32.totalorder %s18, 0
    %p39 = por %p37, %p38
    %p40 = scmp.ne.s32.totalorder %s26, %s27
    %p41 = scmp.eq.s32.totalorder %s19, 1
    %p42 = por %p40, %p41
    %p44 = scmp.ne.s32.totalorder %s27, %s43
    %p45 = scmp.eq.s32.totalorder %s19, 0
    %p46 = por %p44, %p45
    %s48 = sadd.s32 %s47, 1
    %p51 = scmp.eq.s32.totalorder %s13, 1
    %p52 = scmp.ne.s32.totalorder %s47, %s49
    %p53 = scmp.eq.s32.totalorder %s13, 0
    %p54 = por %p52, %p53
    %p55 = scmp.ne.s32.totalorder %s47, %s49
    %p56 = scmp.eq.s32.totalorder %s18, 1
    %p57 = por %p55, %p56
    %p58 = scmp.ne.s32.totalorder %s49, %s50
    %p59 = scmp.eq.s32.totalorder %s18, 0
    %p60 = por %p58, %p59
    %p61 = scmp.ne.s32.totalorder %s49, %s50
    %p62 = scmp.eq.s32.totalorder %s19, 1
    %p63 = por %p61, %p62
    %p65 = scmp.ne.s32.totalorder %s50, %s64
    %p66 = scmp.eq.s32.totalorder %s19, 0
    %p67 = por %p65, %p66
    %s69 = sadd.s32 %s68, 1
    %p72 = scmp.eq.s32.totalorder %s13, 1
    %p73 = scmp.ne.s32.totalorder %s68, %s70
    %p74 = scmp.eq.s32.totalorder %s13, 0
    %p75 = por %p73, %p74
    %p76 = scmp.ne.s32.totalorder %s68, %s70
    %p77 = scmp.eq.s32.totalorder %s18, 1
    %p78 = por %p76, %p77
    %p79 = scmp.ne.s32.totalorder %s70, %s71
    %p80 = scmp.eq.s32.totalorder %s18, 0
    %p81 = por %p79, %p80
    %p82 = scmp.ne.s32.totalorder %s70, %s71
    %p83 = scmp.eq.s32.totalorder %s19, 1
    %p84 = por %p82, %p83
    %p86 = scmp.ne.s32.totalorder %s71, %s85
    %p87 = scmp.eq.s32.totalorder %s19, 0
    %p88 = por %p86, %p87
    %s90 = sadd.s32 %s89, 1
    %p93 = scmp.eq.s32.totalorder %s13, 1
    %p94 = scmp.ne.s32.totalorder %s89, %s91
    %p95 = scmp.eq.s32.totalorder %s13, 0
    %p96 = por %p94, %p95
    %p97 = scmp.ne.s32.totalorder %s89, %s91
    %p98 = scmp.eq.s32.totalorder %s18, 1
    %p99 = por %p97, %p98
    %p100 = scmp.ne.s32.totalorder %s91, %s92
    %p101 = scmp.eq.s32.totalorder %s18, 0
    %p102 = por %p100, %p101
    %p103 = scmp.ne.s32.totalorder %s91, %s92
    %p104 = scmp.eq.s32.totalorder %s19, 1
    %p105 = por %p103, %p104
    %p107 = scmp.ne.s32.totalorder %s92, %s106
    %p108 = scmp.eq.s32.totalorder %s19, 0
    %p109 = por %p107, %p108
    %s111 = sadd.s32 %s110, 1
    %p114 = scmp.eq.s32.totalorder %s13, 1
    %p115 = scmp.ne.s32.totalorder %s110, %s112
    %p116 = scmp.eq.s32.totalorder %s13, 0
    %p117 = por %p115, %p116
    %p118 = scmp.ne.s32.totalorder %s110, %s112
    %p119 = scmp.eq.s32.totalorder %s18, 1
    %p120 = por %p118, %p119
    %p121 = scmp.ne.s32.totalorder %s112, %s113
    %p122 = scmp.eq.s32.totalorder %s18, 0
    %p123 = por %p121, %p122
    %p124 = scmp.ne.s32.totalorder %s112, %s113
    %p125 = scmp.eq.s32.totalorder %s19, 1
    %p126 = por %p124, %p125
    %p128 = scmp.ne.s32.totalorder %s113, %s127
    %p129 = scmp.eq.s32.totalorder %s19, 0
    %p130 = por %p128, %p129
    %s132 = sadd.s32 %s131, 1
    %p135 = scmp.eq.s32.totalorder %s13, 1
    %p136 = scmp.ne.s32.totalorder %s131, %s133
    %p137 = scmp.eq.s32.totalorder %s13, 0
    %p138 = por %p136, %p137
    %p139 = scmp.ne.s32.totalorder %s131, %s133
    %p140 = scmp.eq.s32.totalorder %s18, 1
    %p141 = por %p139, %p140
    %p142 = scmp.ne.s32.totalorder %s133, %s134
    %p143 = scmp.eq.s32.totalorder %s18, 0
    %p144 = por %p142, %p143
    %p145 = scmp.ne.s32.totalorder %s133, %s134
    %p146 = scmp.eq.s32.totalorder %s19, 1
    %p147 = por %p145, %p146
    %p149 = scmp.ne.s32.totalorder %s134, %s148
    %p150 = scmp.eq.s32.totalorder %s19, 0
    %p151 = por %p149, %p150
    %s153 = sadd.s32 %s152, 1
    %p156 = scmp.eq.s32.totalorder %s13, 1
    %p157 = scmp.ne.s32.totalorder %s152, %s154
    %p158 = scmp.eq.s32.totalorder %s13, 0
    %p159 = por %p157, %p158
    %p160 = scmp.ne.s32.totalorder %s152, %s154
    %p161 = scmp.eq.s32.totalorder %s18, 1
    %p162 = por %p160, %p161
    %p163 = scmp.ne.s32.totalorder %s154, %s155
    %p164 = scmp.eq.s32.totalorder %s18, 0
    %p165 = por %p163, %p164
    %p166 = scmp.ne.s32.totalorder %s154, %s155
    %p167 = scmp.eq.s32.totalorder %s19, 1
    %p168 = por %p166, %p167
    %p170 = scmp.ne.s32.totalorder %s155, %s169
    %p171 = scmp.eq.s32.totalorder %s19, 0
    %p172 = por %p170, %p171
    %s173 = ssub.s32 %s13, %s20
    %p174 = scmp.eq.s32.totalorder %s173, 0
    %s176 = sadd.s32 %s175, 1
    %s177 = scalar_select %p174, %s175, %s176
    %p180 = pneg %p174
    %p181 = scmp.eq.s32.totalorder %s13, 1
    %p182 = por %p180, %p181
    %p183 = scmp.ne.s32.totalorder %s175, %s178
    %p184 = scmp.eq.s32.totalorder %s13, 0
    %p185 = por %p183, %p184
    %p186 = scmp.ne.s32.totalorder %s175, %s178
    %p187 = scmp.eq.s32.totalorder %s18, 1
    %p188 = por %p186, %p187
    %p189 = scmp.ne.s32.totalorder %s178, %s179
    %p190 = scmp.eq.s32.totalorder %s18, 0
    %p191 = por %p189, %p190
    %p192 = scmp.ne.s32.totalorder %s178, %s179
    %p193 = scmp.eq.s32.totalorder %s19, 1
    %p194 = por %p192, %p193
    %p196 = scmp.ne.s32.totalorder %s179, %s195
    %p197 = scmp.eq.s32.totalorder %s19, 0
    %p198 = por %p196, %p197
    %p199 = scmp.le.s32.totalorder 1, %s13
    %p200 = scmp.lt.s32.totalorder %s13, 3
    %p201 = pnand %p199, %p200
    %p202 = pneg %p201
    // Predicated region
    $region9: #{head_forward.4} parent=5 // pred_check
      _
    $region10: #{head_forward.4} parent=5 // pred_check_branch
      %204 = sbr.rel (%p201) target = $region12
    $region11: #{head_forward.4} parent=5 // pred_region
      %s205 = ssub.s32 %s13, 1
      // Predicated region
      $region13: #{head_forward.4} parent=11 // pred_check
        %p206 = pneg %p60
      $region14: #{head_forward.4} parent=11 // pred_check_branch
        %208 = sbr.rel (%p206) target = $region16
      $region15: #{head_forward.4} parent=11 // pred_region
        _
      $region16: #{head_forward.4} parent=11 // pred_fallthru
        _
      // Predicated region
      $region17: #{head_forward.4} parent=11 // pred_check
        %p209 = pneg %p81
      $region18: #{head_forward.4} parent=11 // pred_check_branch
        %211 = sbr.rel (%p209) target = $region20
      $region19: #{head_forward.4} parent=11 // pred_region
        _
      $region20: #{head_forward.4} parent=11 // pred_fallthru
        _
      // Predicated region
      $region21: #{head_forward.4} parent=11 // pred_check
        %p212 = pneg %p102
      $region22: #{head_forward.4} parent=11 // pred_check_branch
        %214 = sbr.rel (%p212) target = $region24
      $region23: #{head_forward.4} parent=11 // pred_region
        _
      $region24: #{head_forward.4} parent=11 // pred_fallthru
        _
      // Predicated region
      $region25: #{head_forward.4} parent=11 // pred_check
        %p215 = pneg %p123
      $region26: #{head_forward.4} parent=11 // pred_check_branch
        %217 = sbr.rel (%p215) target = $region28
      $region27: #{head_forward.4} parent=11 // pred_region
        _
      $region28: #{head_forward.4} parent=11 // pred_fallthru
        _
      // Predicated region
      $region29: #{head_forward.4} parent=11 // pred_check
        %p218 = pneg %p144
      $region30: #{head_forward.4} parent=11 // pred_check_branch
        %220 = sbr.rel (%p218) target = $region32
      $region31: #{head_forward.4} parent=11 // pred_region
        _
      $region32: #{head_forward.4} parent=11 // pred_fallthru
        _
      // Predicated region
      $region33: #{head_forward.4} parent=11 // pred_check
        %p221 = pneg %p165
      $region34: #{head_forward.4} parent=11 // pred_check_branch
        %223 = sbr.rel (%p221) target = $region36
      $region35: #{head_forward.4} parent=11 // pred_region
        _
      $region36: #{head_forward.4} parent=11 // pred_fallthru
        _
    $region12: #{head_forward.4} parent=5 // pred_fallthru
      _
    %p224 = scmp.lt.s32.totalorder %s13, 2
    // Predicated region
    $region37: #{head_forward.4} parent=5 // pred_check
      %p225 = pneg %p224
    $region38: #{head_forward.4} parent=5 // pred_check_branch
      %227 = sbr.rel (%p225) target = $region40
    $region39: #{head_forward.4} parent=5 // pred_region
      // Predicated region
      $region41: #{head_forward.4} parent=39 // pred_check
        %p228 = pneg %p33
      $region42: #{head_forward.4} parent=39 // pred_check_branch
        %230 = sbr.rel (%p228) target = $region44
      $region43: #{head_forward.4} parent=39 // pred_region
        %p231 = scmp.lt.s32.totalorder %s13, 1
        %s232 = scalar_select %p231, %s13, 1
        %s233 = smul.addr %s232, 8
        %s234 = smul.addr %s233, 8
        %s235 = scalar_lea.vmem %s0, %s234
      $region44: #{head_forward.4} parent=39 // pred_fallthru
        _
    $region40: #{head_forward.4} parent=5 // pred_fallthru
      _
    %p236 = scmp.le.s32.totalorder 1, %s13
    %p237 = scmp.lt.s32.totalorder %s13, 3
    %p238 = pnand %p236, %p237
    %p239 = pneg %p238
    // Predicated region
    $region45: #{head_forward.4} parent=5 // pred_check
      _
    $region46: #{head_forward.4} parent=5 // pred_check_branch
      %241 = sbr.rel (%p238) target = $region48
    $region47: #{head_forward.4} parent=5 // pred_region
      %s242 = ssub.s32 %s13, 1
      %p243 = scmp.lt.s32.totalorder %s18, 1
      %s244 = scalar_select %p243, %s18, 1
      %s245 = smul.addr %s244, 8
      %s246 = smul.addr %s245, 8
      %s247 = scalar_lea.vmem %s0, %s246
      %p248 = pneg %p39
      %p249 = pneg %p36
      %p250 = pneg %p60
      %p251 = pneg %p57
      %p252 = pneg %p81
      %p253 = pneg %p78
      %p254 = pneg %p102
      %p255 = pneg %p99
      %p256 = pneg %p123
      %p257 = pneg %p120
      %p258 = pneg %p144
      %p259 = pneg %p141
      %p260 = pneg %p165
      %p261 = pneg %p162
      %p262 = pneg %p191
      %p263 = pneg %p188
      %p264 = scmp.lt.s32.totalorder %s18, 1
      %s265 = scalar_select %p264, %s18, 1
      %s266 = smul.addr %s265, 8
      %s267 = smul.addr %s266, 8
      %s268 = scalar_lea.vmem %s7, %s267
      %p269 = scmp.lt.s32.totalorder %s18, 1
      %s270 = scalar_select %p269, %s18, 1
      %s271 = smul.addr %s270, 8
      %s272 = smul.addr %s271, 8
      %s273 = scalar_lea.vmem %s0, %s272
      %p274 = scmp.lt.s32.totalorder %s18, 1
      %s275 = scalar_select %p274, %s18, 1
      %s276 = smul.addr %s275, 8
      %s277 = smul.addr %s276, 8
      %s278 = scalar_lea.vmem %s7, %s277
      %v279 = vld [vmem:[%s273] sm:$0xff]
      %v280 = vld [vmem:[%s273 + $0x8] sm:$0xff]
      %v281 = vld [vmem:[%s273 + $0x10] sm:$0xff]
      %v282 = vld [vmem:[%s273 + $0x18] sm:$0xff]
      %v283 = vld [vmem:[%s273 + $0x20] sm:$0xff]
      %v284 = vld [vmem:[%s273 + $0x28] sm:$0xff]
      %v285 = vld [vmem:[%s273 + $0x30] sm:$0xff]
      %v286 = vld [vmem:[%s273 + $0x38] sm:$0xff]
      %287 = vst [vmem:[#allocation2] sm:$0xff] 0.0
      %288 = vst [vmem:[#allocation2 + $0x8] sm:$0x3] 0.0
      %289 = vst [vmem:[#allocation2 + $0x10] sm:$0xff] 0.0
      %290 = vst [vmem:[#allocation2 + $0x18] sm:$0x3] 0.0
      %291 = vst [vmem:[#allocation2 + $0x20] sm:$0xff] 0.0
      %292 = vst [vmem:[#allocation2 + $0x28] sm:$0x3] 0.0
      %293 = vst [vmem:[#allocation2 + $0x30] sm:$0xff] 0.0
      %294 = vst [vmem:[#allocation2 + $0x38] sm:$0x3] 0.0
      %295 = vst [vmem:[#allocation2 + $0x40] sm:$0xff] 0.0
      %296 = vst [vmem:[#allocation2 + $0x48] sm:$0x3] 0.0
      %297 = vst [vmem:[#allocation2 + $0x50] sm:$0xff] 0.0
      %298 = vst [vmem:[#allocation2 + $0x58] sm:$0x3] 0.0
      %299 = vst [vmem:[#allocation2 + $0x60] sm:$0xff] 0.0
      %300 = vst [vmem:[#allocation2 + $0x68] sm:$0x3] 0.0
      %301 = vst [vmem:[#allocation2 + $0x70] sm:$0xff] 0.0
      %302 = vst [vmem:[#allocation2 + $0x78] sm:$0x3] 0.0
      %303 = vst [vmem:[#allocation2 + $0x80] sm:$0xff] 0.0
      %304 = vst [vmem:[#allocation2 + $0x88] sm:$0x3] 0.0
      %305 = vst [vmem:[#allocation2 + $0x90] sm:$0xff] 0.0
      %306 = vst [vmem:[#allocation2 + $0x98] sm:$0x3] 0.0
      %v307 = vld [vmem:[%s1] sm:$0xff]
      %v308 = vld [vmem:[%s1 + $0x8] sm:$0xff]
      %v309 = vld [vmem:[%s1 + $0x10] sm:$0xff]
      %v310 = vld [vmem:[%s1 + $0x18] sm:$0xff]
      %v311 = vld [vmem:[%s1 + $0x20] sm:$0xff]
      %v312 = vld [vmem:[%s1 + $0x28] sm:$0xff]
      %v313 = vld [vmem:[%s1 + $0x30] sm:$0xff]
      %v314 = vld [vmem:[%s1 + $0x38] sm:$0xff]
      %v315 = vld [vmem:[%s1 + $0x40] sm:$0xff]
      %v316 = vld [vmem:[%s1 + $0x48] sm:$0xff]
      %v317 = vld [vmem:[%s1 + $0x50] sm:$0xff]
      %v318 = vld [vmem:[%s1 + $0x58] sm:$0xff]
      %v319 = vld [vmem:[%s1 + $0x60] sm:$0xff]
      %v320 = vld [vmem:[%s1 + $0x68] sm:$0xff]
      %v321 = vld [vmem:[%s1 + $0x70] sm:$0xff]
      %v322 = vld [vmem:[%s1 + $0x78] sm:$0xff]
      %v323 = vld [vmem:[%s2] sm:$0x1]
      %v325 = vlaneseq
      %v326 = vshrl.u32 %v325, 7
      %v327 = vsub.s32 0, %v326
      %v328 = vrot.slane %v323, %v327
      %330 = vmatprep.subr.mxu0 0.0
      %331 = vmatpush1.msra.mxu0 %v322
      %332 = vmatprep.subr.mxu0 0.0
      %333 = vmatpush1.msra.mxu0 %v321
      %334 = vmatprep.subr.mxu0 0.0
      %335 = vmatpush1.msra.mxu0 %v320
      %336 = vmatprep.subr.mxu0 0.0
      %337 = vmatpush1.msra.mxu0 %v319
      %338 = vmatprep.subr.mxu0 0.0
      %339 = vmatpush1.msra.mxu0 %v318
      %340 = vmatprep.subr.mxu0 0.0
      %341 = vmatpush1.msra.mxu0 %v317
      %342 = vmatprep.subr.mxu0 0.0
      %343 = vmatpush1.msra.mxu0 %v316
      %344 = vmatprep.subr.mxu0 0.0
      %345 = vmatpush1.msra.mxu0 %v315
      %346 = vmatprep.subr.mxu0 0.0
      %347 = vmatpush1.msra.mxu0 %v314
      %348 = vmatprep.subr.mxu0 0.0
      %349 = vmatpush1.msra.mxu0 %v313
      %350 = vmatprep.subr.mxu0 0.0
      %351 = vmatpush1.msra.mxu0 %v312
      %352 = vmatprep.subr.mxu0 0.0
      %353 = vmatpush1.msra.mxu0 %v311
      %354 = vmatprep.subr.mxu0 0.0
      %355 = vmatpush1.msra.mxu0 %v310
      %356 = vmatprep.subr.mxu0 0.0
      %357 = vmatpush1.msra.mxu0 %v309
      %358 = vmatprep.subr.mxu0 0.0
      %359 = vmatpush1.msra.mxu0 %v308
      %360 = vmatprep.subr.mxu0 0.0
      %361 = vmatpush1.msra.mxu0 %v307
      %362 = vmatprep.subr.mxu0 0.0
      %363 = vmatpush2.msra.mxu0 0.0
      %364 = vmatprep.subr.mxu0 0.0
      %365 = vmatpush2.msra.mxu0 0.0
      %366 = vmatprep.subr.mxu0 0.0
      %367 = vmatpush2.msra.mxu0 0.0
      %368 = vmatprep.subr.mxu0 0.0
      %369 = vmatpush2.msra.mxu0 0.0
      %370 = vmatprep.subr.mxu0 0.0
      %371 = vmatpush2.msra.mxu0 0.0
      %372 = vmatprep.subr.mxu0 0.0
      %373 = vmatpush2.msra.mxu0 0.0
      %374 = vmatprep.subr.mxu0 0.0
      %375 = vmatpush2.msra.mxu0 0.0
      %376 = vmatprep.subr.mxu0 0.0
      %377 = vmatpush2.msra.mxu0 0.0
      %378 = vmatprep.subr.mxu0 0.0
      %379 = vmatpush2.msra.mxu0 0.0
      %380 = vmatprep.subr.mxu0 0.0
      %381 = vmatpush2.msra.mxu0 0.0
      %382 = vmatprep.subr.mxu0 0.0
      %383 = vmatpush2.msra.mxu0 0.0
      %384 = vmatprep.subr.mxu0 0.0
      %385 = vmatpush2.msra.mxu0 0.0
      %386 = vmatprep.subr.mxu0 0.0
      %387 = vmatpush2.msra.mxu0 0.0
      %388 = vmatprep.subr.mxu0 0.0
      %389 = vmatpush2.msra.mxu0 0.0
      %390 = vmatprep.subr.mxu0 0.0
      %391 = vmatpush2.msra.mxu0 0.0
      %392 = vmatprep.subr.mxu0 0.0
      %393 = vmatpush2.msra.mxu0 0.0
      %394 = vmatprep.mubr.f32.mxu0 0.0
      %395 = vmatmul.mubr.f32.gmra.mxu0 %v279
      %v396 = vpop.f32.mrf.mxu0
      %v397 = vadd.f32 %v328, %v396
      %v398 = vpop.f32.mrf.mxu0
      %399 = vmatprep.mubr.f32.mxu0 0.0
      %400 = vmatmul.mubr.f32.gmra.mxu0 %v280
      %v401 = vpop.f32.mrf.mxu0
      %v402 = vadd.f32 %v328, %v401
      %v403 = vpop.f32.mrf.mxu0
      %404 = vmatprep.mubr.f32.mxu0 0.0
      %405 = vmatmul.mubr.f32.gmra.mxu0 %v281
      %v406 = vpop.f32.mrf.mxu0
      %v407 = vadd.f32 %v328, %v406
      %v408 = vpop.f32.mrf.mxu0
      %409 = vmatprep.mubr.f32.mxu0 0.0
      %410 = vmatmul.mubr.f32.gmra.mxu0 %v282
      %v411 = vpop.f32.mrf.mxu0
      %v412 = vadd.f32 %v328, %v411
      %v413 = vpop.f32.mrf.mxu0
      %414 = vmatprep.mubr.f32.mxu0 0.0
      %415 = vmatmul.mubr.f32.gmra.mxu0 %v283
      %v416 = vpop.f32.mrf.mxu0
      %v417 = vadd.f32 %v328, %v416
      %v418 = vpop.f32.mrf.mxu0
      %419 = vmatprep.mubr.f32.mxu0 0.0
      %420 = vmatmul.mubr.f32.gmra.mxu0 %v284
      %v421 = vpop.f32.mrf.mxu0
      %v422 = vadd.f32 %v328, %v421
      %v423 = vpop.f32.mrf.mxu0
      %424 = vmatprep.mubr.f32.mxu0 0.0
      %425 = vmatmul.mubr.f32.gmra.mxu0 %v285
      %v426 = vpop.f32.mrf.mxu0
      %v427 = vadd.f32 %v328, %v426
      %v428 = vpop.f32.mrf.mxu0
      %429 = vmatprep.mubr.f32.mxu0 0.0
      %430 = vmatmul.mubr.f32.gmra.mxu0 %v286
      %v431 = vpop.f32.mrf.mxu0
      %v432 = vadd.f32 %v328, %v431
      %v433 = vpop.f32.mrf.mxu0
      %434 = vdwg.mxu0
      %v435 = vmax.f32 %v397, 0.0
      %v436 = vmax.f32 %v402, 0.0
      %v437 = vmax.f32 %v407, 0.0
      %v438 = vmax.f32 %v412, 0.0
      %v439 = vmax.f32 %v417, 0.0
      %v440 = vmax.f32 %v422, 0.0
      %v441 = vmax.f32 %v427, 0.0
      %v442 = vmax.f32 %v432, 0.0
      %s443 = scalar_lea.vmem [#allocation2], 16
      %444 = vst [vmem:[%s443 + $0x1] sm:$0xff] %v435
      %445 = vst [vmem:[%s443 + $0x11] sm:$0xff] %v436
      %446 = vst [vmem:[%s443 + $0x21] sm:$0xff] %v437
      %447 = vst [vmem:[%s443 + $0x31] sm:$0xff] %v438
      %448 = vst [vmem:[%s443 + $0x41] sm:$0xff] %v439
      %449 = vst [vmem:[%s443 + $0x51] sm:$0xff] %v440
      %450 = vst [vmem:[%s443 + $0x61] sm:$0xff] %v441
      %451 = vst [vmem:[%s443 + $0x71] sm:$0xff] %v442
      %v452 = vld [vmem:[#allocation2] sm:$0xff]
      %v453 = vld [vmem:[#allocation2 + $0x10] sm:$0xff]
      %v454 = vld [vmem:[#allocation2 + $0x20] sm:$0xff]
      %v455 = vld [vmem:[#allocation2 + $0x30] sm:$0xff]
      %v456 = vld [vmem:[#allocation2 + $0x40] sm:$0xff]
      %v457 = vld [vmem:[#allocation2 + $0x50] sm:$0xff]
      %v458 = vld [vmem:[#allocation2 + $0x60] sm:$0xff]
      %v459 = vld [vmem:[#allocation2 + $0x70] sm:$0xff]
      %v460 = vld [vmem:[%s3] sm:$0xff]
      %v461 = vld [vmem:[%s3 + $0x8] sm:$0xff]
      %v462 = vld [vmem:[%s3 + $0x10] sm:$0xff]
      %v463 = vld [vmem:[%s3 + $0x18] sm:$0xff]
      %v464 = vld [vmem:[%s3 + $0x20] sm:$0xff]
      %v465 = vld [vmem:[%s3 + $0x28] sm:$0xff]
      %v466 = vld [vmem:[%s3 + $0x30] sm:$0xff]
      %v467 = vld [vmem:[%s3 + $0x38] sm:$0xff]
      %v468 = vld [vmem:[%s3 + $0x40] sm:$0xff]
      %v469 = vld [vmem:[%s3 + $0x48] sm:$0xff]
      %v470 = vld [vmem:[%s3 + $0x50] sm:$0xff]
      %v471 = vld [vmem:[%s3 + $0x58] sm:$0xff]
      %v472 = vld [vmem:[%s3 + $0x60] sm:$0xff]
      %v473 = vld [vmem:[%s3 + $0x68] sm:$0xff]
      %v474 = vld [vmem:[%s3 + $0x70] sm:$0xff]
      %v475 = vld [vmem:[%s3 + $0x78] sm:$0xff]
      %v476 = vld [vmem:[#allocation2 + $0x1] sm:$0xff]
      %v477 = vld [vmem:[#allocation2 + $0x11] sm:$0xff]
      %v478 = vld [vmem:[#allocation2 + $0x21] sm:$0xff]
      %v479 = vld [vmem:[#allocation2 + $0x31] sm:$0xff]
      %v480 = vld [vmem:[#allocation2 + $0x41] sm:$0xff]
      %v481 = vld [vmem:[#allocation2 + $0x51] sm:$0xff]
      %v482 = vld [vmem:[#allocation2 + $0x61] sm:$0xff]
      %v483 = vld [vmem:[#allocation2 + $0x71] sm:$0xff]
      %s484 = scalar_lea.vmem %s3, 128
      %v485 = vld [vmem:[%s484] sm:$0xff]
      %v486 = vld [vmem:[%s484 + $0x8] sm:$0xff]
      %v487 = vld [vmem:[%s484 + $0x10] sm:$0xff]
      %v488 = vld [vmem:[%s484 + $0x18] sm:$0xff]
      %v489 = vld [vmem:[%s484 + $0x20] sm:$0xff]
      %v490 = vld [vmem:[%s484 + $0x28] sm:$0xff]
      %v491 = vld [vmem:[%s484 + $0x30] sm:$0xff]
      %v492 = vld [vmem:[%s484 + $0x38] sm:$0xff]
      %v493 = vld [vmem:[%s484 + $0x40] sm:$0xff]
      %v494 = vld [vmem:[%s484 + $0x48] sm:$0xff]
      %v495 = vld [vmem:[%s484 + $0x50] sm:$0xff]
      %v496 = vld [vmem:[%s484 + $0x58] sm:$0xff]
      %v497 = vld [vmem:[%s484 + $0x60] sm:$0xff]
      %v498 = vld [vmem:[%s484 + $0x68] sm:$0xff]
      %v499 = vld [vmem:[%s484 + $0x70] sm:$0xff]
      %v500 = vld [vmem:[%s484 + $0x78] sm:$0xff]
      %501 = vmatprep.subr.mxu0 0.0
      %502 = vmatpush1.msra.mxu0 %v500
      %503 = vmatprep.subr.mxu0 0.0
      %504 = vmatpush1.msra.mxu0 %v499
      %505 = vmatprep.subr.mxu0 0.0
      %506 = vmatpush1.msra.mxu0 %v498
      %507 = vmatprep.subr.mxu0 0.0
      %508 = vmatpush1.msra.mxu0 %v497
      %509 = vmatprep.subr.mxu0 0.0
      %510 = vmatpush1.msra.mxu0 %v496
      %511 = vmatprep.subr.mxu0 0.0
      %512 = vmatpush1.msra.mxu0 %v495
      %513 = vmatprep.subr.mxu0 0.0
      %514 = vmatpush1.msra.mxu0 %v494
      %515 = vmatprep.subr.mxu0 0.0
      %516 = vmatpush1.msra.mxu0 %v493
      %517 = vmatprep.subr.mxu0 0.0
      %518 = vmatpush1.msra.mxu0 %v492
      %519 = vmatprep.subr.mxu0 0.0
      %520 = vmatpush1.msra.mxu0 %v491
      %521 = vmatprep.subr.mxu0 0.0
      %522 = vmatpush1.msra.mxu0 %v490
      %523 = vmatprep.subr.mxu0 0.0
      %524 = vmatpush1.msra.mxu0 %v489
      %525 = vmatprep.subr.mxu0 0.0
      %526 = vmatpush1.msra.mxu0 %v488
      %527 = vmatprep.subr.mxu0 0.0
      %528 = vmatpush1.msra.mxu0 %v487
      %529 = vmatprep.subr.mxu0 0.0
      %530 = vmatpush1.msra.mxu0 %v486
      %531 = vmatprep.subr.mxu0 0.0
      %532 = vmatpush1.msra.mxu0 %v485
      %533 = vmatprep.subr.mxu0 0.0
      %534 = vmatpush2.msra.mxu0 0.0
      %535 = vmatprep.subr.mxu0 0.0
      %536 = vmatpush2.msra.mxu0 0.0
      %537 = vmatprep.subr.mxu0 0.0
      %538 = vmatpush2.msra.mxu0 0.0
      %539 = vmatprep.subr.mxu0 0.0
      %540 = vmatpush2.msra.mxu0 0.0
      %541 = vmatprep.subr.mxu0 0.0
      %542 = vmatpush2.msra.mxu0 0.0
      %543 = vmatprep.subr.mxu0 0.0
      %544 = vmatpush2.msra.mxu0 0.0
      %545 = vmatprep.subr.mxu0 0.0
      %546 = vmatpush2.msra.mxu0 0.0
      %547 = vmatprep.subr.mxu0 0.0
      %548 = vmatpush2.msra.mxu0 0.0
      %549 = vmatprep.subr.mxu0 0.0
      %550 = vmatpush2.msra.mxu0 0.0
      %551 = vmatprep.subr.mxu0 0.0
      %552 = vmatpush2.msra.mxu0 0.0
      %553 = vmatprep.subr.mxu0 0.0
      %554 = vmatpush2.msra.mxu0 0.0
      %555 = vmatprep.subr.mxu0 0.0
      %556 = vmatpush2.msra.mxu0 0.0
      %557 = vmatprep.subr.mxu0 0.0
      %558 = vmatpush2.msra.mxu0 0.0
      %559 = vmatprep.subr.mxu0 0.0
      %560 = vmatpush2.msra.mxu0 0.0
      %561 = vmatprep.subr.mxu0 0.0
      %562 = vmatpush2.msra.mxu0 0.0
      %563 = vmatprep.subr.mxu0 0.0
      %564 = vmatpush2.msra.mxu0 0.0
      %565 = vmatprep.mubr.f32.mxu0 0.0
      %566 = vmatmul.mubr.f32.gmra.mxu0 %v476
      %v567 = vpop.f32.mrf.mxu0
      %v568 = vadd.f32 0.0, %v567
      %v569 = vpop.f32.mrf.mxu0
      %570 = vmatprep.mubr.f32.mxu0 0.0
      %571 = vmatmul.mubr.f32.gmra.mxu0 %v477
      %v572 = vpop.f32.mrf.mxu0
      %v573 = vadd.f32 0.0, %v572
      %v574 = vpop.f32.mrf.mxu0
      %575 = vmatprep.mubr.f32.mxu0 0.0
      %576 = vmatmul.mubr.f32.gmra.mxu0 %v478
      %v577 = vpop.f32.mrf.mxu0
      %v578 = vadd.f32 0.0, %v577
      %v579 = vpop.f32.mrf.mxu0
      %580 = vmatprep.mubr.f32.mxu0 0.0
      %581 = vmatmul.mubr.f32.gmra.mxu0 %v479
      %v582 = vpop.f32.mrf.mxu0
      %v583 = vadd.f32 0.0, %v582
      %v584 = vpop.f32.mrf.mxu0
      %585 = vmatprep.mubr.f32.mxu0 0.0
      %586 = vmatmul.mubr.f32.gmra.mxu0 %v480
      %v587 = vpop.f32.mrf.mxu0
      %v588 = vadd.f32 0.0, %v587
      %v589 = vpop.f32.mrf.mxu0
      %590 = vmatprep.mubr.f32.mxu0 0.0
      %591 = vmatmul.mubr.f32.gmra.mxu0 %v481
      %v592 = vpop.f32.mrf.mxu0
      %v593 = vadd.f32 0.0, %v592
      %v594 = vpop.f32.mrf.mxu0
      %595 = vmatprep.mubr.f32.mxu0 0.0
      %596 = vmatmul.mubr.f32.gmra.mxu0 %v482
      %v597 = vpop.f32.mrf.mxu0
      %v598 = vadd.f32 0.0, %v597
      %v599 = vpop.f32.mrf.mxu0
      %600 = vmatprep.mubr.f32.mxu0 0.0
      %601 = vmatmul.mubr.f32.gmra.mxu0 %v483
      %v602 = vpop.f32.mrf.mxu0
      %v603 = vadd.f32 0.0, %v602
      %v604 = vpop.f32.mrf.mxu0
      %605 = vdwg.mxu0
      %606 = vmatprep.subr.mxu0 0.0
      %607 = vmatpush1.msra.mxu0 %v475
      %608 = vmatprep.subr.mxu0 0.0
      %609 = vmatpush1.msra.mxu0 %v474
      %610 = vmatprep.subr.mxu0 0.0
      %611 = vmatpush1.msra.mxu0 %v473
      %612 = vmatprep.subr.mxu0 0.0
      %613 = vmatpush1.msra.mxu0 %v472
      %614 = vmatprep.subr.mxu0 0.0
      %615 = vmatpush1.msra.mxu0 %v471
      %616 = vmatprep.subr.mxu0 0.0
      %617 = vmatpush1.msra.mxu0 %v470
      %618 = vmatprep.subr.mxu0 0.0
      %619 = vmatpush1.msra.mxu0 %v469
      %620 = vmatprep.subr.mxu0 0.0
      %621 = vmatpush1.msra.mxu0 %v468
      %622 = vmatprep.subr.mxu0 0.0
      %623 = vmatpush1.msra.mxu0 %v467
      %624 = vmatprep.subr.mxu0 0.0
      %625 = vmatpush1.msra.mxu0 %v466
      %626 = vmatprep.subr.mxu0 0.0
      %627 = vmatpush1.msra.mxu0 %v465
      %628 = vmatprep.subr.mxu0 0.0
      %629 = vmatpush1.msra.mxu0 %v464
      %630 = vmatprep.subr.mxu0 0.0
      %631 = vmatpush1.msra.mxu0 %v463
      %632 = vmatprep.subr.mxu0 0.0
      %633 = vmatpush1.msra.mxu0 %v462
      %634 = vmatprep.subr.mxu0 0.0
      %635 = vmatpush1.msra.mxu0 %v461
      %636 = vmatprep.subr.mxu0 0.0
      %637 = vmatpush1.msra.mxu0 %v460
      %638 = vmatprep.subr.mxu0 0.0
      %639 = vmatpush2.msra.mxu0 0.0
      %640 = vmatprep.subr.mxu0 0.0
      %641 = vmatpush2.msra.mxu0 0.0
      %642 = vmatprep.subr.mxu0 0.0
      %643 = vmatpush2.msra.mxu0 0.0
      %644 = vmatprep.subr.mxu0 0.0
      %645 = vmatpush2.msra.mxu0 0.0
      %646 = vmatprep.subr.mxu0 0.0
      %647 = vmatpush2.msra.mxu0 0.0
      %648 = vmatprep.subr.mxu0 0.0
      %649 = vmatpush2.msra.mxu0 0.0
      %650 = vmatprep.subr.mxu0 0.0
      %651 = vmatpush2.msra.mxu0 0.0
      %652 = vmatprep.subr.mxu0 0.0
      %653 = vmatpush2.msra.mxu0 0.0
      %654 = vmatprep.subr.mxu0 0.0
      %655 = vmatpush2.msra.mxu0 0.0
      %656 = vmatprep.subr.mxu0 0.0
      %657 = vmatpush2.msra.mxu0 0.0
      %658 = vmatprep.subr.mxu0 0.0
      %659 = vmatpush2.msra.mxu0 0.0
      %660 = vmatprep.subr.mxu0 0.0
      %661 = vmatpush2.msra.mxu0 0.0
      %662 = vmatprep.subr.mxu0 0.0
      %663 = vmatpush2.msra.mxu0 0.0
      %664 = vmatprep.subr.mxu0 0.0
      %665 = vmatpush2.msra.mxu0 0.0
      %666 = vmatprep.subr.mxu0 0.0
      %667 = vmatpush2.msra.mxu0 0.0
      %668 = vmatprep.subr.mxu0 0.0
      %669 = vmatpush2.msra.mxu0 0.0
      %670 = vmatprep.mubr.f32.mxu0 0.0
      %671 = vmatmul.mubr.f32.gmra.mxu0 %v452
      %v672 = vpop.f32.mrf.mxu0
      %v673 = vadd.f32 %v568, %v672
      %v674 = vpop.f32.mrf.mxu0
      %675 = vmatprep.mubr.f32.mxu0 0.0
      %676 = vmatmul.mubr.f32.gmra.mxu0 %v453
      %v677 = vpop.f32.mrf.mxu0
      %v678 = vadd.f32 %v573, %v677
      %v679 = vpop.f32.mrf.mxu0
      %680 = vmatprep.mubr.f32.mxu0 0.0
      %681 = vmatmul.mubr.f32.gmra.mxu0 %v454
      %v682 = vpop.f32.mrf.mxu0
      %v683 = vadd.f32 %v578, %v682
      %v684 = vpop.f32.mrf.mxu0
      %685 = vmatprep.mubr.f32.mxu0 0.0
      %686 = vmatmul.mubr.f32.gmra.mxu0 %v455
      %v687 = vpop.f32.mrf.mxu0
      %v688 = vadd.f32 %v583, %v687
      %v689 = vpop.f32.mrf.mxu0
      %690 = vmatprep.mubr.f32.mxu0 0.0
      %691 = vmatmul.mubr.f32.gmra.mxu0 %v456
      %v692 = vpop.f32.mrf.mxu0
      %v693 = vadd.f32 %v588, %v692
      %v694 = vpop.f32.mrf.mxu0
      %695 = vmatprep.mubr.f32.mxu0 0.0
      %696 = vmatmul.mubr.f32.gmra.mxu0 %v457
      %v697 = vpop.f32.mrf.mxu0
      %v698 = vadd.f32 %v593, %v697
      %v699 = vpop.f32.mrf.mxu0
      %700 = vmatprep.mubr.f32.mxu0 0.0
      %701 = vmatmul.mubr.f32.gmra.mxu0 %v458
      %v702 = vpop.f32.mrf.mxu0
      %v703 = vadd.f32 %v598, %v702
      %v704 = vpop.f32.mrf.mxu0
      %705 = vmatprep.mubr.f32.mxu0 0.0
      %706 = vmatmul.mubr.f32.gmra.mxu0 %v459
      %v707 = vpop.f32.mrf.mxu0
      %v708 = vadd.f32 %v603, %v707
      %v709 = vpop.f32.mrf.mxu0
      %710 = vdwg.mxu0
      %v711 = vld [vmem:[#allocation2 + $0x2] sm:$0xff]
      %v712 = vld [vmem:[#allocation2 + $0x12] sm:$0xff]
      %v713 = vld [vmem:[#allocation2 + $0x22] sm:$0xff]
      %v714 = vld [vmem:[#allocation2 + $0x32] sm:$0xff]
      %v715 = vld [vmem:[#allocation2 + $0x42] sm:$0xff]
      %v716 = vld [vmem:[#allocation2 + $0x52] sm:$0xff]
      %v717 = vld [vmem:[#allocation2 + $0x62] sm:$0xff]
      %v718 = vld [vmem:[#allocation2 + $0x72] sm:$0xff]
      %s719 = scalar_lea.vmem %s3, 256
      %v720 = vld [vmem:[%s719] sm:$0xff]
      %v721 = vld [vmem:[%s719 + $0x8] sm:$0xff]
      %v722 = vld [vmem:[%s719 + $0x10] sm:$0xff]
      %v723 = vld [vmem:[%s719 + $0x18] sm:$0xff]
      %v724 = vld [vmem:[%s719 + $0x20] sm:$0xff]
      %v725 = vld [vmem:[%s719 + $0x28] sm:$0xff]
      %v726 = vld [vmem:[%s719 + $0x30] sm:$0xff]
      %v727 = vld [vmem:[%s719 + $0x38] sm:$0xff]
      %v728 = vld [vmem:[%s719 + $0x40] sm:$0xff]
      %v729 = vld [vmem:[%s719 + $0x48] sm:$0xff]
      %v730 = vld [vmem:[%s719 + $0x50] sm:$0xff]
      %v731 = vld [vmem:[%s719 + $0x58] sm:$0xff]
      %v732 = vld [vmem:[%s719 + $0x60] sm:$0xff]
      %v733 = vld [vmem:[%s719 + $0x68] sm:$0xff]
      %v734 = vld [vmem:[%s719 + $0x70] sm:$0xff]
      %v735 = vld [vmem:[%s719 + $0x78] sm:$0xff]
      %736 = vmatprep.subr.mxu0 0.0
      %737 = vmatpush1.msra.mxu0 %v735
      %738 = vmatprep.subr.mxu0 0.0
      %739 = vmatpush1.msra.mxu0 %v734
      %740 = vmatprep.subr.mxu0 0.0
      %741 = vmatpush1.msra.mxu0 %v733
      %742 = vmatprep.subr.mxu0 0.0
      %743 = vmatpush1.msra.mxu0 %v732
      %744 = vmatprep.subr.mxu0 0.0
      %745 = vmatpush1.msra.mxu0 %v731
      %746 = vmatprep.subr.mxu0 0.0
      %747 = vmatpush1.msra.mxu0 %v730
      %748 = vmatprep.subr.mxu0 0.0
      %749 = vmatpush1.msra.mxu0 %v729
      %750 = vmatprep.subr.mxu0 0.0
      %751 = vmatpush1.msra.mxu0 %v728
      %752 = vmatprep.subr.mxu0 0.0
      %753 = vmatpush1.msra.mxu0 %v727
      %754 = vmatprep.subr.mxu0 0.0
      %755 = vmatpush1.msra.mxu0 %v726
      %756 = vmatprep.subr.mxu0 0.0
      %757 = vmatpush1.msra.mxu0 %v725
      %758 = vmatprep.subr.mxu0 0.0
      %759 = vmatpush1.msra.mxu0 %v724
      %760 = vmatprep.subr.mxu0 0.0
      %761 = vmatpush1.msra.mxu0 %v723
      %762 = vmatprep.subr.mxu0 0.0
      %763 = vmatpush1.msra.mxu0 %v722
      %764 = vmatprep.subr.mxu0 0.0
      %765 = vmatpush1.msra.mxu0 %v721
      %766 = vmatprep.subr.mxu0 0.0
      %767 = vmatpush1.msra.mxu0 %v720
      %768 = vmatprep.subr.mxu0 0.0
      %769 = vmatpush2.msra.mxu0 0.0
      %770 = vmatprep.subr.mxu0 0.0
      %771 = vmatpush2.msra.mxu0 0.0
      %772 = vmatprep.subr.mxu0 0.0
      %773 = vmatpush2.msra.mxu0 0.0
      %774 = vmatprep.subr.mxu0 0.0
      %775 = vmatpush2.msra.mxu0 0.0
      %776 = vmatprep.subr.mxu0 0.0
      %777 = vmatpush2.msra.mxu0 0.0
      %778 = vmatprep.subr.mxu0 0.0
      %779 = vmatpush2.msra.mxu0 0.0
      %780 = vmatprep.subr.mxu0 0.0
      %781 = vmatpush2.msra.mxu0 0.0
      %782 = vmatprep.subr.mxu0 0.0
      %783 = vmatpush2.msra.mxu0 0.0
      %784 = vmatprep.subr.mxu0 0.0
      %785 = vmatpush2.msra.mxu0 0.0
      %786 = vmatprep.subr.mxu0 0.0
      %787 = vmatpush2.msra.mxu0 0.0
      %788 = vmatprep.subr.mxu0 0.0
      %789 = vmatpush2.msra.mxu0 0.0
      %790 = vmatprep.subr.mxu0 0.0
      %791 = vmatpush2.msra.mxu0 0.0
      %792 = vmatprep.subr.mxu0 0.0
      %793 = vmatpush2.msra.mxu0 0.0
      %794 = vmatprep.subr.mxu0 0.0
      %795 = vmatpush2.msra.mxu0 0.0
      %796 = vmatprep.subr.mxu0 0.0
      %797 = vmatpush2.msra.mxu0 0.0
      %798 = vmatprep.subr.mxu0 0.0
      %799 = vmatpush2.msra.mxu0 0.0
      %800 = vmatprep.mubr.f32.mxu0 0.0
      %801 = vmatmul.mubr.f32.gmra.mxu0 %v711
      %v802 = vpop.f32.mrf.mxu0
      %v803 = vadd.f32 0.0, %v802
      %v804 = vpop.f32.mrf.mxu0
      %805 = vmatprep.mubr.f32.mxu0 0.0
      %806 = vmatmul.mubr.f32.gmra.mxu0 %v712
      %v807 = vpop.f32.mrf.mxu0
      %v808 = vadd.f32 0.0, %v807
      %v809 = vpop.f32.mrf.mxu0
      %810 = vmatprep.mubr.f32.mxu0 0.0
      %811 = vmatmul.mubr.f32.gmra.mxu0 %v713
      %v812 = vpop.f32.mrf.mxu0
      %v813 = vadd.f32 0.0, %v812
      %v814 = vpop.f32.mrf.mxu0
      %815 = vmatprep.mubr.f32.mxu0 0.0
      %816 = vmatmul.mubr.f32.gmra.mxu0 %v714
      %v817 = vpop.f32.mrf.mxu0
      %v818 = vadd.f32 0.0, %v817
      %v819 = vpop.f32.mrf.mxu0
      %820 = vmatprep.mubr.f32.mxu0 0.0
      %821 = vmatmul.mubr.f32.gmra.mxu0 %v715
      %v822 = vpop.f32.mrf.mxu0
      %v823 = vadd.f32 0.0, %v822
      %v824 = vpop.f32.mrf.mxu0
      %825 = vmatprep.mubr.f32.mxu0 0.0
      %826 = vmatmul.mubr.f32.gmra.mxu0 %v716
      %v827 = vpop.f32.mrf.mxu0
      %v828 = vadd.f32 0.0, %v827
      %v829 = vpop.f32.mrf.mxu0
      %830 = vmatprep.mubr.f32.mxu0 0.0
      %831 = vmatmul.mubr.f32.gmra.mxu0 %v717
      %v832 = vpop.f32.mrf.mxu0
      %v833 = vadd.f32 0.0, %v832
      %v834 = vpop.f32.mrf.mxu0
      %835 = vmatprep.mubr.f32.mxu0 0.0
      %836 = vmatmul.mubr.f32.gmra.mxu0 %v718
      %v837 = vpop.f32.mrf.mxu0
      %v838 = vadd.f32 0.0, %v837
      %v839 = vpop.f32.mrf.mxu0
      %840 = vdwg.mxu0
      %v841 = vadd.f32 %v673, %v803
      %v842 = vadd.f32 %v678, %v808
      %v843 = vadd.f32 %v683, %v813
      %v844 = vadd.f32 %v688, %v818
      %v845 = vadd.f32 %v693, %v823
      %v846 = vadd.f32 %v698, %v828
      %v847 = vadd.f32 %v703, %v833
      %v848 = vadd.f32 %v708, %v838
      %v849 = vld [vmem:[%s443] sm:$0xff]
      %v850 = vld [vmem:[%s443 + $0x10] sm:$0xff]
      %v851 = vld [vmem:[%s443 + $0x20] sm:$0xff]
      %v852 = vld [vmem:[%s443 + $0x30] sm:$0xff]
      %v853 = vld [vmem:[%s443 + $0x40] sm:$0xff]
      %v854 = vld [vmem:[%s443 + $0x50] sm:$0xff]
      %v855 = vld [vmem:[%s443 + $0x60] sm:$0xff]
      %v856 = vld [vmem:[%s443 + $0x70] sm:$0xff]
      %s857 = scalar_lea.vmem %s3, 384
      %v858 = vld [vmem:[%s857] sm:$0xff]
      %v859 = vld [vmem:[%s857 + $0x8] sm:$0xff]
      %v860 = vld [vmem:[%s857 + $0x10] sm:$0xff]
      %v861 = vld [vmem:[%s857 + $0x18] sm:$0xff]
      %v862 = vld [vmem:[%s857 + $0x20] sm:$0xff]
      %v863 = vld [vmem:[%s857 + $0x28] sm:$0xff]
      %v864 = vld [vmem:[%s857 + $0x30] sm:$0xff]
      %v865 = vld [vmem:[%s857 + $0x38] sm:$0xff]
      %v866 = vld [vmem:[%s857 + $0x40] sm:$0xff]
      %v867 = vld [vmem:[%s857 + $0x48] sm:$0xff]
      %v868 = vld [vmem:[%s857 + $0x50] sm:$0xff]
      %v869 = vld [vmem:[%s857 + $0x58] sm:$0xff]
      %v870 = vld [vmem:[%s857 + $0x60] sm:$0xff]
      %v871 = vld [vmem:[%s857 + $0x68] sm:$0xff]
      %v872 = vld [vmem:[%s857 + $0x70] sm:$0xff]
      %v873 = vld [vmem:[%s857 + $0x78] sm:$0xff]
      %874 = vmatprep.subr.mxu0 0.0
      %875 = vmatpush1.msra.mxu0 %v873
      %876 = vmatprep.subr.mxu0 0.0
      %877 = vmatpush1.msra.mxu0 %v872
      %878 = vmatprep.subr.mxu0 0.0
      %879 = vmatpush1.msra.mxu0 %v871
      %880 = vmatprep.subr.mxu0 0.0
      %881 = vmatpush1.msra.mxu0 %v870
      %882 = vmatprep.subr.mxu0 0.0
      %883 = vmatpush1.msra.mxu0 %v869
      %884 = vmatprep.subr.mxu0 0.0
      %885 = vmatpush1.msra.mxu0 %v868
      %886 = vmatprep.subr.mxu0 0.0
      %887 = vmatpush1.msra.mxu0 %v867
      %888 = vmatprep.subr.mxu0 0.0
      %889 = vmatpush1.msra.mxu0 %v866
      %890 = vmatprep.subr.mxu0 0.0
      %891 = vmatpush1.msra.mxu0 %v865
      %892 = vmatprep.subr.mxu0 0.0
      %893 = vmatpush1.msra.mxu0 %v864
      %894 = vmatprep.subr.mxu0 0.0
      %895 = vmatpush1.msra.mxu0 %v863
      %896 = vmatprep.subr.mxu0 0.0
      %897 = vmatpush1.msra.mxu0 %v862
      %898 = vmatprep.subr.mxu0 0.0
      %899 = vmatpush1.msra.mxu0 %v861
      %900 = vmatprep.subr.mxu0 0.0
      %901 = vmatpush1.msra.mxu0 %v860
      %902 = vmatprep.subr.mxu0 0.0
      %903 = vmatpush1.msra.mxu0 %v859
      %904 = vmatprep.subr.mxu0 0.0
      %905 = vmatpush1.msra.mxu0 %v858
      %906 = vmatprep.subr.mxu0 0.0
      %907 = vmatpush2.msra.mxu0 0.0
      %908 = vmatprep.subr.mxu0 0.0
      %909 = vmatpush2.msra.mxu0 0.0
      %910 = vmatprep.subr.mxu0 0.0
      %911 = vmatpush2.msra.mxu0 0.0
      %912 = vmatprep.subr.mxu0 0.0
      %913 = vmatpush2.msra.mxu0 0.0
      %914 = vmatprep.subr.mxu0 0.0
      %915 = vmatpush2.msra.mxu0 0.0
      %916 = vmatprep.subr.mxu0 0.0
      %917 = vmatpush2.msra.mxu0 0.0
      %918 = vmatprep.subr.mxu0 0.0
      %919 = vmatpush2.msra.mxu0 0.0
      %920 = vmatprep.subr.mxu0 0.0
      %921 = vmatpush2.msra.mxu0 0.0
      %922 = vmatprep.subr.mxu0 0.0
      %923 = vmatpush2.msra.mxu0 0.0
      %924 = vmatprep.subr.mxu0 0.0
      %925 = vmatpush2.msra.mxu0 0.0
      %926 = vmatprep.subr.mxu0 0.0
      %927 = vmatpush2.msra.mxu0 0.0
      %928 = vmatprep.subr.mxu0 0.0
      %929 = vmatpush2.msra.mxu0 0.0
      %930 = vmatprep.subr.mxu0 0.0
      %931 = vmatpush2.msra.mxu0 0.0
      %932 = vmatprep.subr.mxu0 0.0
      %933 = vmatpush2.msra.mxu0 0.0
      %934 = vmatprep.subr.mxu0 0.0
      %935 = vmatpush2.msra.mxu0 0.0
      %936 = vmatprep.subr.mxu0 0.0
      %937 = vmatpush2.msra.mxu0 0.0
      %938 = vmatprep.mubr.f32.mxu0 0.0
      %939 = vmatmul.mubr.f32.gmra.mxu0 %v849
      %v940 = vpop.f32.mrf.mxu0
      %v941 = vadd.f32 0.0, %v940
      %v942 = vpop.f32.mrf.mxu0
      %943 = vmatprep.mubr.f32.mxu0 0.0
      %944 = vmatmul.mubr.f32.gmra.mxu0 %v850
      %v945 = vpop.f32.mrf.mxu0
      %v946 = vadd.f32 0.0, %v945
      %v947 = vpop.f32.mrf.mxu0
      %948 = vmatprep.mubr.f32.mxu0 0.0
      %949 = vmatmul.mubr.f32.gmra.mxu0 %v851
      %v950 = vpop.f32.mrf.mxu0
      %v951 = vadd.f32 0.0, %v950
      %v952 = vpop.f32.mrf.mxu0
      %953 = vmatprep.mubr.f32.mxu0 0.0
      %954 = vmatmul.mubr.f32.gmra.mxu0 %v852
      %v955 = vpop.f32.mrf.mxu0
      %v956 = vadd.f32 0.0, %v955
      %v957 = vpop.f32.mrf.mxu0
      %958 = vmatprep.mubr.f32.mxu0 0.0
      %959 = vmatmul.mubr.f32.gmra.mxu0 %v853
      %v960 = vpop.f32.mrf.mxu0
      %v961 = vadd.f32 0.0, %v960
      %v962 = vpop.f32.mrf.mxu0
      %963 = vmatprep.mubr.f32.mxu0 0.0
      %964 = vmatmul.mubr.f32.gmra.mxu0 %v854
      %v965 = vpop.f32.mrf.mxu0
      %v966 = vadd.f32 0.0, %v965
      %v967 = vpop.f32.mrf.mxu0
      %968 = vmatprep.mubr.f32.mxu0 0.0
      %969 = vmatmul.mubr.f32.gmra.mxu0 %v855
      %v970 = vpop.f32.mrf.mxu0
      %v971 = vadd.f32 0.0, %v970
      %v972 = vpop.f32.mrf.mxu0
      %973 = vmatprep.mubr.f32.mxu0 0.0
      %974 = vmatmul.mubr.f32.gmra.mxu0 %v856
      %v975 = vpop.f32.mrf.mxu0
      %v976 = vadd.f32 0.0, %v975
      %v977 = vpop.f32.mrf.mxu0
      %978 = vdwg.mxu0
      %v979 = vadd.f32 %v841, %v941
      %v980 = vadd.f32 %v842, %v946
      %v981 = vadd.f32 %v843, %v951
      %v982 = vadd.f32 %v844, %v956
      %v983 = vadd.f32 %v845, %v961
      %v984 = vadd.f32 %v846, %v966
      %v985 = vadd.f32 %v847, %v971
      %v986 = vadd.f32 %v848, %v976
      %v987 = vld [vmem:[%s443 + $0x1] sm:$0xff]
      %v988 = vld [vmem:[%s443 + $0x11] sm:$0xff]
      %v989 = vld [vmem:[%s443 + $0x21] sm:$0xff]
      %v990 = vld [vmem:[%s443 + $0x31] sm:$0xff]
      %v991 = vld [vmem:[%s443 + $0x41] sm:$0xff]
      %v992 = vld [vmem:[%s443 + $0x51] sm:$0xff]
      %v993 = vld [vmem:[%s443 + $0x61] sm:$0xff]
      %v994 = vld [vmem:[%s443 + $0x71] sm:$0xff]
      %s995 = scalar_lea.vmem %s3, 512
      %v996 = vld [vmem:[%s995] sm:$0xff]
      %v997 = vld [vmem:[%s995 + $0x8] sm:$0xff]
      %v998 = vld [vmem:[%s995 + $0x10] sm:$0xff]
      %v999 = vld [vmem:[%s995 + $0x18] sm:$0xff]
      %v1000 = vld [vmem:[%s995 + $0x20] sm:$0xff]
      %v1001 = vld [vmem:[%s995 + $0x28] sm:$0xff]
      %v1002 = vld [vmem:[%s995 + $0x30] sm:$0xff]
      %v1003 = vld [vmem:[%s995 + $0x38] sm:$0xff]
      %v1004 = vld [vmem:[%s995 + $0x40] sm:$0xff]
      %v1005 = vld [vmem:[%s995 + $0x48] sm:$0xff]
      %v1006 = vld [vmem:[%s995 + $0x50] sm:$0xff]
      %v1007 = vld [vmem:[%s995 + $0x58] sm:$0xff]
      %v1008 = vld [vmem:[%s995 + $0x60] sm:$0xff]
      %v1009 = vld [vmem:[%s995 + $0x68] sm:$0xff]
      %v1010 = vld [vmem:[%s995 + $0x70] sm:$0xff]
      %v1011 = vld [vmem:[%s995 + $0x78] sm:$0xff]
      %1012 = vmatprep.subr.mxu0 0.0
      %1013 = vmatpush1.msra.mxu0 %v1011
      %1014 = vmatprep.subr.mxu0 0.0
      %1015 = vmatpush1.msra.mxu0 %v1010
      %1016 = vmatprep.subr.mxu0 0.0
      %1017 = vmatpush1.msra.mxu0 %v1009
      %1018 = vmatprep.subr.mxu0 0.0
      %1019 = vmatpush1.msra.mxu0 %v1008
      %1020 = vmatprep.subr.mxu0 0.0
      %1021 = vmatpush1.msra.mxu0 %v1007
      %1022 = vmatprep.subr.mxu0 0.0
      %1023 = vmatpush1.msra.mxu0 %v1006
      %1024 = vmatprep.subr.mxu0 0.0
      %1025 = vmatpush1.msra.mxu0 %v1005
      %1026 = vmatprep.subr.mxu0 0.0
      %1027 = vmatpush1.msra.mxu0 %v1004
      %1028 = vmatprep.subr.mxu0 0.0
      %1029 = vmatpush1.msra.mxu0 %v1003
      %1030 = vmatprep.subr.mxu0 0.0
      %1031 = vmatpush1.msra.mxu0 %v1002
      %1032 = vmatprep.subr.mxu0 0.0
      %1033 = vmatpush1.msra.mxu0 %v1001
      %1034 = vmatprep.subr.mxu0 0.0
      %1035 = vmatpush1.msra.mxu0 %v1000
      %1036 = vmatprep.subr.mxu0 0.0
      %1037 = vmatpush1.msra.mxu0 %v999
      %1038 = vmatprep.subr.mxu0 0.0
      %1039 = vmatpush1.msra.mxu0 %v998
      %1040 = vmatprep.subr.mxu0 0.0
      %1041 = vmatpush1.msra.mxu0 %v997
      %1042 = vmatprep.subr.mxu0 0.0
      %1043 = vmatpush1.msra.mxu0 %v996
      %1044 = vmatprep.subr.mxu0 0.0
      %1045 = vmatpush2.msra.mxu0 0.0
      %1046 = vmatprep.subr.mxu0 0.0
      %1047 = vmatpush2.msra.mxu0 0.0
      %1048 = vmatprep.subr.mxu0 0.0
      %1049 = vmatpush2.msra.mxu0 0.0
      %1050 = vmatprep.subr.mxu0 0.0
      %1051 = vmatpush2.msra.mxu0 0.0
      %1052 = vmatprep.subr.mxu0 0.0
      %1053 = vmatpush2.msra.mxu0 0.0
      %1054 = vmatprep.subr.mxu0 0.0
      %1055 = vmatpush2.msra.mxu0 0.0
      %1056 = vmatprep.subr.mxu0 0.0
      %1057 = vmatpush2.msra.mxu0 0.0
      %1058 = vmatprep.subr.mxu0 0.0
      %1059 = vmatpush2.msra.mxu0 0.0
      %1060 = vmatprep.subr.mxu0 0.0
      %1061 = vmatpush2.msra.mxu0 0.0
      %1062 = vmatprep.subr.mxu0 0.0
      %1063 = vmatpush2.msra.mxu0 0.0
      %1064 = vmatprep.subr.mxu0 0.0
      %1065 = vmatpush2.msra.mxu0 0.0
      %1066 = vmatprep.subr.mxu0 0.0
      %1067 = vmatpush2.msra.mxu0 0.0
      %1068 = vmatprep.subr.mxu0 0.0
      %1069 = vmatpush2.msra.mxu0 0.0
      %1070 = vmatprep.subr.mxu0 0.0
      %1071 = vmatpush2.msra.mxu0 0.0
      %1072 = vmatprep.subr.mxu0 0.0
      %1073 = vmatpush2.msra.mxu0 0.0
      %1074 = vmatprep.subr.mxu0 0.0
      %1075 = vmatpush2.msra.mxu0 0.0
      %1076 = vmatprep.mubr.f32.mxu0 0.0
      %1077 = vmatmul.mubr.f32.gmra.mxu0 %v987
      %v1078 = vpop.f32.mrf.mxu0
      %v1079 = vadd.f32 0.0, %v1078
      %v1080 = vpop.f32.mrf.mxu0
      %1081 = vmatprep.mubr.f32.mxu0 0.0
      %1082 = vmatmul.mubr.f32.gmra.mxu0 %v988
      %v1083 = vpop.f32.mrf.mxu0
      %v1084 = vadd.f32 0.0, %v1083
      %v1085 = vpop.f32.mrf.mxu0
      %1086 = vmatprep.mubr.f32.mxu0 0.0
      %1087 = vmatmul.mubr.f32.gmra.mxu0 %v989
      %v1088 = vpop.f32.mrf.mxu0
      %v1089 = vadd.f32 0.0, %v1088
      %v1090 = vpop.f32.mrf.mxu0
      %1091 = vmatprep.mubr.f32.mxu0 0.0
      %1092 = vmatmul.mubr.f32.gmra.mxu0 %v990
      %v1093 = vpop.f32.mrf.mxu0
      %v1094 = vadd.f32 0.0, %v1093
      %v1095 = vpop.f32.mrf.mxu0
      %1096 = vmatprep.mubr.f32.mxu0 0.0
      %1097 = vmatmul.mubr.f32.gmra.mxu0 %v991
      %v1098 = vpop.f32.mrf.mxu0
      %v1099 = vadd.f32 0.0, %v1098
      %v1100 = vpop.f32.mrf.mxu0
      %1101 = vmatprep.mubr.f32.mxu0 0.0
      %1102 = vmatmul.mubr.f32.gmra.mxu0 %v992
      %v1103 = vpop.f32.mrf.mxu0
      %v1104 = vadd.f32 0.0, %v1103
      %v1105 = vpop.f32.mrf.mxu0
      %1106 = vmatprep.mubr.f32.mxu0 0.0
      %1107 = vmatmul.mubr.f32.gmra.mxu0 %v993
      %v1108 = vpop.f32.mrf.mxu0
      %v1109 = vadd.f32 0.0, %v1108
      %v1110 = vpop.f32.mrf.mxu0
      %1111 = vmatprep.mubr.f32.mxu0 0.0
      %1112 = vmatmul.mubr.f32.gmra.mxu0 %v994
      %v1113 = vpop.f32.mrf.mxu0
      %v1114 = vadd.f32 0.0, %v1113
      %v1115 = vpop.f32.mrf.mxu0
      %1116 = vdwg.mxu0
      %v1117 = vadd.f32 %v979, %v1079
      %v1118 = vadd.f32 %v980, %v1084
      %v1119 = vadd.f32 %v981, %v1089
      %v1120 = vadd.f32 %v982, %v1094
      %v1121 = vadd.f32 %v983, %v1099
      %v1122 = vadd.f32 %v984, %v1104
      %v1123 = vadd.f32 %v985, %v1109
      %v1124 = vadd.f32 %v986, %v1114
      %v1125 = vld [vmem:[%s443 + $0x2] sm:$0xff]
      %v1126 = vld [vmem:[%s443 + $0x12] sm:$0xff]
      %v1127 = vld [vmem:[%s443 + $0x22] sm:$0xff]
      %v1128 = vld [vmem:[%s443 + $0x32] sm:$0xff]
      %v1129 = vld [vmem:[%s443 + $0x42] sm:$0xff]
      %v1130 = vld [vmem:[%s443 + $0x52] sm:$0xff]
      %v1131 = vld [vmem:[%s443 + $0x62] sm:$0xff]
      %v1132 = vld [vmem:[%s443 + $0x72] sm:$0xff]
      %s1133 = scalar_lea.vmem %s3, 640
      %v1134 = vld [vmem:[%s1133] sm:$0xff]
      %v1135 = vld [vmem:[%s1133 + $0x8] sm:$0xff]
      %v1136 = vld [vmem:[%s1133 + $0x10] sm:$0xff]
      %v1137 = vld [vmem:[%s1133 + $0x18] sm:$0xff]
      %v1138 = vld [vmem:[%s1133 + $0x20] sm:$0xff]
      %v1139 = vld [vmem:[%s1133 + $0x28] sm:$0xff]
      %v1140 = vld [vmem:[%s1133 + $0x30] sm:$0xff]
      %v1141 = vld [vmem:[%s1133 + $0x38] sm:$0xff]
      %v1142 = vld [vmem:[%s1133 + $0x40] sm:$0xff]
      %v1143 = vld [vmem:[%s1133 + $0x48] sm:$0xff]
      %v1144 = vld [vmem:[%s1133 + $0x50] sm:$0xff]
      %v1145 = vld [vmem:[%s1133 + $0x58] sm:$0xff]
      %v1146 = vld [vmem:[%s1133 + $0x60] sm:$0xff]
      %v1147 = vld [vmem:[%s1133 + $0x68] sm:$0xff]
      %v1148 = vld [vmem:[%s1133 + $0x70] sm:$0xff]
      %v1149 = vld [vmem:[%s1133 + $0x78] sm:$0xff]
      %1150 = vmatprep.subr.mxu0 0.0
      %1151 = vmatpush1.msra.mxu0 %v1149
      %1152 = vmatprep.subr.mxu0 0.0
      %1153 = vmatpush1.msra.mxu0 %v1148
      %1154 = vmatprep.subr.mxu0 0.0
      %1155 = vmatpush1.msra.mxu0 %v1147
      %1156 = vmatprep.subr.mxu0 0.0
      %1157 = vmatpush1.msra.mxu0 %v1146
      %1158 = vmatprep.subr.mxu0 0.0
      %1159 = vmatpush1.msra.mxu0 %v1145
      %1160 = vmatprep.subr.mxu0 0.0
      %1161 = vmatpush1.msra.mxu0 %v1144
      %1162 = vmatprep.subr.mxu0 0.0
      %1163 = vmatpush1.msra.mxu0 %v1143
      %1164 = vmatprep.subr.mxu0 0.0
      %1165 = vmatpush1.msra.mxu0 %v1142
      %1166 = vmatprep.subr.mxu0 0.0
      %1167 = vmatpush1.msra.mxu0 %v1141
      %1168 = vmatprep.subr.mxu0 0.0
      %1169 = vmatpush1.msra.mxu0 %v1140
      %1170 = vmatprep.subr.mxu0 0.0
      %1171 = vmatpush1.msra.mxu0 %v1139
      %1172 = vmatprep.subr.mxu0 0.0
      %1173 = vmatpush1.msra.mxu0 %v1138
      %1174 = vmatprep.subr.mxu0 0.0
      %1175 = vmatpush1.msra.mxu0 %v1137
      %1176 = vmatprep.subr.mxu0 0.0
      %1177 = vmatpush1.msra.mxu0 %v1136
      %1178 = vmatprep.subr.mxu0 0.0
      %1179 = vmatpush1.msra.mxu0 %v1135
      %1180 = vmatprep.subr.mxu0 0.0
      %1181 = vmatpush1.msra.mxu0 %v1134
      %1182 = vmatprep.subr.mxu0 0.0
      %1183 = vmatpush2.msra.mxu0 0.0
      %1184 = vmatprep.subr.mxu0 0.0
      %1185 = vmatpush2.msra.mxu0 0.0
      %1186 = vmatprep.subr.mxu0 0.0
      %1187 = vmatpush2.msra.mxu0 0.0
      %1188 = vmatprep.subr.mxu0 0.0
      %1189 = vmatpush2.msra.mxu0 0.0
      %1190 = vmatprep.subr.mxu0 0.0
      %1191 = vmatpush2.msra.mxu0 0.0
      %1192 = vmatprep.subr.mxu0 0.0
      %1193 = vmatpush2.msra.mxu0 0.0
      %1194 = vmatprep.subr.mxu0 0.0
      %1195 = vmatpush2.msra.mxu0 0.0
      %1196 = vmatprep.subr.mxu0 0.0
      %1197 = vmatpush2.msra.mxu0 0.0
      %1198 = vmatprep.subr.mxu0 0.0
      %1199 = vmatpush2.msra.mxu0 0.0
      %1200 = vmatprep.subr.mxu0 0.0
      %1201 = vmatpush2.msra.mxu0 0.0
      %1202 = vmatprep.subr.mxu0 0.0
      %1203 = vmatpush2.msra.mxu0 0.0
      %1204 = vmatprep.subr.mxu0 0.0
      %1205 = vmatpush2.msra.mxu0 0.0
      %1206 = vmatprep.subr.mxu0 0.0
      %1207 = vmatpush2.msra.mxu0 0.0
      %1208 = vmatprep.subr.mxu0 0.0
      %1209 = vmatpush2.msra.mxu0 0.0
      %1210 = vmatprep.subr.mxu0 0.0
      %1211 = vmatpush2.msra.mxu0 0.0
      %1212 = vmatprep.subr.mxu0 0.0
      %1213 = vmatpush2.msra.mxu0 0.0
      %1214 = vmatprep.mubr.f32.mxu0 0.0
      %1215 = vmatmul.mubr.f32.gmra.mxu0 %v1125
      %v1216 = vpop.f32.mrf.mxu0
      %v1217 = vadd.f32 0.0, %v1216
      %v1218 = vpop.f32.mrf.mxu0
      %1219 = vmatprep.mubr.f32.mxu0 0.0
      %1220 = vmatmul.mubr.f32.gmra.mxu0 %v1126
      %v1221 = vpop.f32.mrf.mxu0
      %v1222 = vadd.f32 0.0, %v1221
      %v1223 = vpop.f32.mrf.mxu0
      %1224 = vmatprep.mubr.f32.mxu0 0.0
      %1225 = vmatmul.mubr.f32.gmra.mxu0 %v1127
      %v1226 = vpop.f32.mrf.mxu0
      %v1227 = vadd.f32 0.0, %v1226
      %v1228 = vpop.f32.mrf.mxu0
      %1229 = vmatprep.mubr.f32.mxu0 0.0
      %1230 = vmatmul.mubr.f32.gmra.mxu0 %v1128
      %v1231 = vpop.f32.mrf.mxu0
      %v1232 = vadd.f32 0.0, %v1231
      %v1233 = vpop.f32.mrf.mxu0
      %1234 = vmatprep.mubr.f32.mxu0 0.0
      %1235 = vmatmul.mubr.f32.gmra.mxu0 %v1129
      %v1236 = vpop.f32.mrf.mxu0
      %v1237 = vadd.f32 0.0, %v1236
      %v1238 = vpop.f32.mrf.mxu0
      %1239 = vmatprep.mubr.f32.mxu0 0.0
      %1240 = vmatmul.mubr.f32.gmra.mxu0 %v1130
      %v1241 = vpop.f32.mrf.mxu0
      %v1242 = vadd.f32 0.0, %v1241
      %v1243 = vpop.f32.mrf.mxu0
      %1244 = vmatprep.mubr.f32.mxu0 0.0
      %1245 = vmatmul.mubr.f32.gmra.mxu0 %v1131
      %v1246 = vpop.f32.mrf.mxu0
      %v1247 = vadd.f32 0.0, %v1246
      %v1248 = vpop.f32.mrf.mxu0
      %1249 = vmatprep.mubr.f32.mxu0 0.0
      %1250 = vmatmul.mubr.f32.gmra.mxu0 %v1132
      %v1251 = vpop.f32.mrf.mxu0
      %v1252 = vadd.f32 0.0, %v1251
      %v1253 = vpop.f32.mrf.mxu0
      %1254 = vdwg.mxu0
      %v1255 = vadd.f32 %v1117, %v1217
      %v1256 = vadd.f32 %v1118, %v1222
      %v1257 = vadd.f32 %v1119, %v1227
      %v1258 = vadd.f32 %v1120, %v1232
      %v1259 = vadd.f32 %v1121, %v1237
      %v1260 = vadd.f32 %v1122, %v1242
      %v1261 = vadd.f32 %v1123, %v1247
      %v1262 = vadd.f32 %v1124, %v1252
      %s1263 = scalar_lea.vmem [#allocation2], 32
      %v1264 = vld [vmem:[%s1263] sm:$0xff]
      %v1265 = vld [vmem:[%s1263 + $0x10] sm:$0xff]
      %v1266 = vld [vmem:[%s1263 + $0x20] sm:$0xff]
      %v1267 = vld [vmem:[%s1263 + $0x30] sm:$0xff]
      %v1268 = vld [vmem:[%s1263 + $0x40] sm:$0xff]
      %v1269 = vld [vmem:[%s1263 + $0x50] sm:$0xff]
      %v1270 = vld [vmem:[%s1263 + $0x60] sm:$0xff]
      %v1271 = vld [vmem:[%s1263 + $0x70] sm:$0xff]
      %s1272 = scalar_lea.vmem %s3, 768
      %v1273 = vld [vmem:[%s1272] sm:$0xff]
      %v1274 = vld [vmem:[%s1272 + $0x8] sm:$0xff]
      %v1275 = vld [vmem:[%s1272 + $0x10] sm:$0xff]
      %v1276 = vld [vmem:[%s1272 + $0x18] sm:$0xff]
      %v1277 = vld [vmem:[%s1272 + $0x20] sm:$0xff]
      %v1278 = vld [vmem:[%s1272 + $0x28] sm:$0xff]
      %v1279 = vld [vmem:[%s1272 + $0x30] sm:$0xff]
      %v1280 = vld [vmem:[%s1272 + $0x38] sm:$0xff]
      %v1281 = vld [vmem:[%s1272 + $0x40] sm:$0xff]
      %v1282 = vld [vmem:[%s1272 + $0x48] sm:$0xff]
      %v1283 = vld [vmem:[%s1272 + $0x50] sm:$0xff]
      %v1284 = vld [vmem:[%s1272 + $0x58] sm:$0xff]
      %v1285 = vld [vmem:[%s1272 + $0x60] sm:$0xff]
      %v1286 = vld [vmem:[%s1272 + $0x68] sm:$0xff]
      %v1287 = vld [vmem:[%s1272 + $0x70] sm:$0xff]
      %v1288 = vld [vmem:[%s1272 + $0x78] sm:$0xff]
      %1289 = vmatprep.subr.mxu0 0.0
      %1290 = vmatpush1.msra.mxu0 %v1288
      %1291 = vmatprep.subr.mxu0 0.0
      %1292 = vmatpush1.msra.mxu0 %v1287
      %1293 = vmatprep.subr.mxu0 0.0
      %1294 = vmatpush1.msra.mxu0 %v1286
      %1295 = vmatprep.subr.mxu0 0.0
      %1296 = vmatpush1.msra.mxu0 %v1285
      %1297 = vmatprep.subr.mxu0 0.0
      %1298 = vmatpush1.msra.mxu0 %v1284
      %1299 = vmatprep.subr.mxu0 0.0
      %1300 = vmatpush1.msra.mxu0 %v1283
      %1301 = vmatprep.subr.mxu0 0.0
      %1302 = vmatpush1.msra.mxu0 %v1282
      %1303 = vmatprep.subr.mxu0 0.0
      %1304 = vmatpush1.msra.mxu0 %v1281
      %1305 = vmatprep.subr.mxu0 0.0
      %1306 = vmatpush1.msra.mxu0 %v1280
      %1307 = vmatprep.subr.mxu0 0.0
      %1308 = vmatpush1.msra.mxu0 %v1279
      %1309 = vmatprep.subr.mxu0 0.0
      %1310 = vmatpush1.msra.mxu0 %v1278
      %1311 = vmatprep.subr.mxu0 0.0
      %1312 = vmatpush1.msra.mxu0 %v1277
      %1313 = vmatprep.subr.mxu0 0.0
      %1314 = vmatpush1.msra.mxu0 %v1276
      %1315 = vmatprep.subr.mxu0 0.0
      %1316 = vmatpush1.msra.mxu0 %v1275
      %1317 = vmatprep.subr.mxu0 0.0
      %1318 = vmatpush1.msra.mxu0 %v1274
      %1319 = vmatprep.subr.mxu0 0.0
      %1320 = vmatpush1.msra.mxu0 %v1273
      %1321 = vmatprep.subr.mxu0 0.0
      %1322 = vmatpush2.msra.mxu0 0.0
      %1323 = vmatprep.subr.mxu0 0.0
      %1324 = vmatpush2.msra.mxu0 0.0
      %1325 = vmatprep.subr.mxu0 0.0
      %1326 = vmatpush2.msra.mxu0 0.0
      %1327 = vmatprep.subr.mxu0 0.0
      %1328 = vmatpush2.msra.mxu0 0.0
      %1329 = vmatprep.subr.mxu0 0.0
      %1330 = vmatpush2.msra.mxu0 0.0
      %1331 = vmatprep.subr.mxu0 0.0
      %1332 = vmatpush2.msra.mxu0 0.0
      %1333 = vmatprep.subr.mxu0 0.0
      %1334 = vmatpush2.msra.mxu0 0.0
      %1335 = vmatprep.subr.mxu0 0.0
      %1336 = vmatpush2.msra.mxu0 0.0
      %1337 = vmatprep.subr.mxu0 0.0
      %1338 = vmatpush2.msra.mxu0 0.0
      %1339 = vmatprep.subr.mxu0 0.0
      %1340 = vmatpush2.msra.mxu0 0.0
      %1341 = vmatprep.subr.mxu0 0.0
      %1342 = vmatpush2.msra.mxu0 0.0
      %1343 = vmatprep.subr.mxu0 0.0
      %1344 = vmatpush2.msra.mxu0 0.0
      %1345 = vmatprep.subr.mxu0 0.0
      %1346 = vmatpush2.msra.mxu0 0.0
      %1347 = vmatprep.subr.mxu0 0.0
      %1348 = vmatpush2.msra.mxu0 0.0
      %1349 = vmatprep.subr.mxu0 0.0
      %1350 = vmatpush2.msra.mxu0 0.0
      %1351 = vmatprep.subr.mxu0 0.0
      %1352 = vmatpush2.msra.mxu0 0.0
      %1353 = vmatprep.mubr.f32.mxu0 0.0
      %1354 = vmatmul.mubr.f32.gmra.mxu0 %v1264
      %v1355 = vpop.f32.mrf.mxu0
      %v1356 = vadd.f32 0.0, %v1355
      %v1357 = vpop.f32.mrf.mxu0
      %1358 = vmatprep.mubr.f32.mxu0 0.0
      %1359 = vmatmul.mubr.f32.gmra.mxu0 %v1265
      %v1360 = vpop.f32.mrf.mxu0
      %v1361 = vadd.f32 0.0, %v1360
      %v1362 = vpop.f32.mrf.mxu0
      %1363 = vmatprep.mubr.f32.mxu0 0.0
      %1364 = vmatmul.mubr.f32.gmra.mxu0 %v1266
      %v1365 = vpop.f32.mrf.mxu0
      %v1366 = vadd.f32 0.0, %v1365
      %v1367 = vpop.f32.mrf.mxu0
      %1368 = vmatprep.mubr.f32.mxu0 0.0
      %1369 = vmatmul.mubr.f32.gmra.mxu0 %v1267
      %v1370 = vpop.f32.mrf.mxu0
      %v1371 = vadd.f32 0.0, %v1370
      %v1372 = vpop.f32.mrf.mxu0
      %1373 = vmatprep.mubr.f32.mxu0 0.0
      %1374 = vmatmul.mubr.f32.gmra.mxu0 %v1268
      %v1375 = vpop.f32.mrf.mxu0
      %v1376 = vadd.f32 0.0, %v1375
      %v1377 = vpop.f32.mrf.mxu0
      %1378 = vmatprep.mubr.f32.mxu0 0.0
      %1379 = vmatmul.mubr.f32.gmra.mxu0 %v1269
      %v1380 = vpop.f32.mrf.mxu0
      %v1381 = vadd.f32 0.0, %v1380
      %v1382 = vpop.f32.mrf.mxu0
      %1383 = vmatprep.mubr.f32.mxu0 0.0
      %1384 = vmatmul.mubr.f32.gmra.mxu0 %v1270
      %v1385 = vpop.f32.mrf.mxu0
      %v1386 = vadd.f32 0.0, %v1385
      %v1387 = vpop.f32.mrf.mxu0
      %1388 = vmatprep.mubr.f32.mxu0 0.0
      %1389 = vmatmul.mubr.f32.gmra.mxu0 %v1271
      %v1390 = vpop.f32.mrf.mxu0
      %v1391 = vadd.f32 0.0, %v1390
      %v1392 = vpop.f32.mrf.mxu0
      %1393 = vdwg.mxu0
      %v1394 = vadd.f32 %v1255, %v1356
      %v1395 = vadd.f32 %v1256, %v1361
      %v1396 = vadd.f32 %v1257, %v1366
      %v1397 = vadd.f32 %v1258, %v1371
      %v1398 = vadd.f32 %v1259, %v1376
      %v1399 = vadd.f32 %v1260, %v1381
      %v1400 = vadd.f32 %v1261, %v1386
      %v1401 = vadd.f32 %v1262, %v1391
      %v1402 = vld [vmem:[%s1263 + $0x1] sm:$0xff]
      %v1403 = vld [vmem:[%s1263 + $0x11] sm:$0xff]
      %v1404 = vld [vmem:[%s1263 + $0x21] sm:$0xff]
      %v1405 = vld [vmem:[%s1263 + $0x31] sm:$0xff]
      %v1406 = vld [vmem:[%s1263 + $0x41] sm:$0xff]
      %v1407 = vld [vmem:[%s1263 + $0x51] sm:$0xff]
      %v1408 = vld [vmem:[%s1263 + $0x61] sm:$0xff]
      %v1409 = vld [vmem:[%s1263 + $0x71] sm:$0xff]
      %s1410 = scalar_lea.vmem %s3, 896
      %v1411 = vld [vmem:[%s1410] sm:$0xff]
      %v1412 = vld [vmem:[%s1410 + $0x8] sm:$0xff]
      %v1413 = vld [vmem:[%s1410 + $0x10] sm:$0xff]
      %v1414 = vld [vmem:[%s1410 + $0x18] sm:$0xff]
      %v1415 = vld [vmem:[%s1410 + $0x20] sm:$0xff]
      %v1416 = vld [vmem:[%s1410 + $0x28] sm:$0xff]
      %v1417 = vld [vmem:[%s1410 + $0x30] sm:$0xff]
      %v1418 = vld [vmem:[%s1410 + $0x38] sm:$0xff]
      %v1419 = vld [vmem:[%s1410 + $0x40] sm:$0xff]
      %v1420 = vld [vmem:[%s1410 + $0x48] sm:$0xff]
      %v1421 = vld [vmem:[%s1410 + $0x50] sm:$0xff]
      %v1422 = vld [vmem:[%s1410 + $0x58] sm:$0xff]
      %v1423 = vld [vmem:[%s1410 + $0x60] sm:$0xff]
      %v1424 = vld [vmem:[%s1410 + $0x68] sm:$0xff]
      %v1425 = vld [vmem:[%s1410 + $0x70] sm:$0xff]
      %v1426 = vld [vmem:[%s1410 + $0x78] sm:$0xff]
      %1427 = vmatprep.subr.mxu0 0.0
      %1428 = vmatpush1.msra.mxu0 %v1426
      %1429 = vmatprep.subr.mxu0 0.0
      %1430 = vmatpush1.msra.mxu0 %v1425
      %1431 = vmatprep.subr.mxu0 0.0
      %1432 = vmatpush1.msra.mxu0 %v1424
      %1433 = vmatprep.subr.mxu0 0.0
      %1434 = vmatpush1.msra.mxu0 %v1423
      %1435 = vmatprep.subr.mxu0 0.0
      %1436 = vmatpush1.msra.mxu0 %v1422
      %1437 = vmatprep.subr.mxu0 0.0
      %1438 = vmatpush1.msra.mxu0 %v1421
      %1439 = vmatprep.subr.mxu0 0.0
      %1440 = vmatpush1.msra.mxu0 %v1420
      %1441 = vmatprep.subr.mxu0 0.0
      %1442 = vmatpush1.msra.mxu0 %v1419
      %1443 = vmatprep.subr.mxu0 0.0
      %1444 = vmatpush1.msra.mxu0 %v1418
      %1445 = vmatprep.subr.mxu0 0.0
      %1446 = vmatpush1.msra.mxu0 %v1417
      %1447 = vmatprep.subr.mxu0 0.0
      %1448 = vmatpush1.msra.mxu0 %v1416
      %1449 = vmatprep.subr.mxu0 0.0
      %1450 = vmatpush1.msra.mxu0 %v1415
      %1451 = vmatprep.subr.mxu0 0.0
      %1452 = vmatpush1.msra.mxu0 %v1414
      %1453 = vmatprep.subr.mxu0 0.0
      %1454 = vmatpush1.msra.mxu0 %v1413
      %1455 = vmatprep.subr.mxu0 0.0
      %1456 = vmatpush1.msra.mxu0 %v1412
      %1457 = vmatprep.subr.mxu0 0.0
      %1458 = vmatpush1.msra.mxu0 %v1411
      %1459 = vmatprep.subr.mxu0 0.0
      %1460 = vmatpush2.msra.mxu0 0.0
      %1461 = vmatprep.subr.mxu0 0.0
      %1462 = vmatpush2.msra.mxu0 0.0
      %1463 = vmatprep.subr.mxu0 0.0
      %1464 = vmatpush2.msra.mxu0 0.0
      %1465 = vmatprep.subr.mxu0 0.0
      %1466 = vmatpush2.msra.mxu0 0.0
      %1467 = vmatprep.subr.mxu0 0.0
      %1468 = vmatpush2.msra.mxu0 0.0
      %1469 = vmatprep.subr.mxu0 0.0
      %1470 = vmatpush2.msra.mxu0 0.0
      %1471 = vmatprep.subr.mxu0 0.0
      %1472 = vmatpush2.msra.mxu0 0.0
      %1473 = vmatprep.subr.mxu0 0.0
      %1474 = vmatpush2.msra.mxu0 0.0
      %1475 = vmatprep.subr.mxu0 0.0
      %1476 = vmatpush2.msra.mxu0 0.0
      %1477 = vmatprep.subr.mxu0 0.0
      %1478 = vmatpush2.msra.mxu0 0.0
      %1479 = vmatprep.subr.mxu0 0.0
      %1480 = vmatpush2.msra.mxu0 0.0
      %1481 = vmatprep.subr.mxu0 0.0
      %1482 = vmatpush2.msra.mxu0 0.0
      %1483 = vmatprep.subr.mxu0 0.0
      %1484 = vmatpush2.msra.mxu0 0.0
      %1485 = vmatprep.subr.mxu0 0.0
      %1486 = vmatpush2.msra.mxu0 0.0
      %1487 = vmatprep.subr.mxu0 0.0
      %1488 = vmatpush2.msra.mxu0 0.0
      %1489 = vmatprep.subr.mxu0 0.0
      %1490 = vmatpush2.msra.mxu0 0.0
      %1491 = vmatprep.mubr.f32.mxu0 0.0
      %1492 = vmatmul.mubr.f32.gmra.mxu0 %v1402
      %v1493 = vpop.f32.mrf.mxu0
      %v1494 = vadd.f32 0.0, %v1493
      %v1495 = vpop.f32.mrf.mxu0
      %1496 = vmatprep.mubr.f32.mxu0 0.0
      %1497 = vmatmul.mubr.f32.gmra.mxu0 %v1403
      %v1498 = vpop.f32.mrf.mxu0
      %v1499 = vadd.f32 0.0, %v1498
      %v1500 = vpop.f32.mrf.mxu0
      %1501 = vmatprep.mubr.f32.mxu0 0.0
      %1502 = vmatmul.mubr.f32.gmra.mxu0 %v1404
      %v1503 = vpop.f32.mrf.mxu0
      %v1504 = vadd.f32 0.0, %v1503
      %v1505 = vpop.f32.mrf.mxu0
      %1506 = vmatprep.mubr.f32.mxu0 0.0
      %1507 = vmatmul.mubr.f32.gmra.mxu0 %v1405
      %v1508 = vpop.f32.mrf.mxu0
      %v1509 = vadd.f32 0.0, %v1508
      %v1510 = vpop.f32.mrf.mxu0
      %1511 = vmatprep.mubr.f32.mxu0 0.0
      %1512 = vmatmul.mubr.f32.gmra.mxu0 %v1406
      %v1513 = vpop.f32.mrf.mxu0
      %v1514 = vadd.f32 0.0, %v1513
      %v1515 = vpop.f32.mrf.mxu0
      %1516 = vmatprep.mubr.f32.mxu0 0.0
      %1517 = vmatmul.mubr.f32.gmra.mxu0 %v1407
      %v1518 = vpop.f32.mrf.mxu0
      %v1519 = vadd.f32 0.0, %v1518
      %v1520 = vpop.f32.mrf.mxu0
      %1521 = vmatprep.mubr.f32.mxu0 0.0
      %1522 = vmatmul.mubr.f32.gmra.mxu0 %v1408
      %v1523 = vpop.f32.mrf.mxu0
      %v1524 = vadd.f32 0.0, %v1523
      %v1525 = vpop.f32.mrf.mxu0
      %1526 = vmatprep.mubr.f32.mxu0 0.0
      %1527 = vmatmul.mubr.f32.gmra.mxu0 %v1409
      %v1528 = vpop.f32.mrf.mxu0
      %v1529 = vadd.f32 0.0, %v1528
      %v1530 = vpop.f32.mrf.mxu0
      %1531 = vdwg.mxu0
      %v1532 = vadd.f32 %v1394, %v1494
      %v1533 = vadd.f32 %v1395, %v1499
      %v1534 = vadd.f32 %v1396, %v1504
      %v1535 = vadd.f32 %v1397, %v1509
      %v1536 = vadd.f32 %v1398, %v1514
      %v1537 = vadd.f32 %v1399, %v1519
      %v1538 = vadd.f32 %v1400, %v1524
      %v1539 = vadd.f32 %v1401, %v1529
      %v1540 = vld [vmem:[%s1263 + $0x2] sm:$0xff]
      %v1541 = vld [vmem:[%s1263 + $0x12] sm:$0xff]
      %v1542 = vld [vmem:[%s1263 + $0x22] sm:$0xff]
      %v1543 = vld [vmem:[%s1263 + $0x32] sm:$0xff]
      %v1544 = vld [vmem:[%s1263 + $0x42] sm:$0xff]
      %v1545 = vld [vmem:[%s1263 + $0x52] sm:$0xff]
      %v1546 = vld [vmem:[%s1263 + $0x62] sm:$0xff]
      %v1547 = vld [vmem:[%s1263 + $0x72] sm:$0xff]
      %s1548 = scalar_lea.vmem %s3, 1024
      %v1549 = vld [vmem:[%s1548] sm:$0xff]
      %v1550 = vld [vmem:[%s1548 + $0x8] sm:$0xff]
      %v1551 = vld [vmem:[%s1548 + $0x10] sm:$0xff]
      %v1552 = vld [vmem:[%s1548 + $0x18] sm:$0xff]
      %v1553 = vld [vmem:[%s1548 + $0x20] sm:$0xff]
      %v1554 = vld [vmem:[%s1548 + $0x28] sm:$0xff]
      %v1555 = vld [vmem:[%s1548 + $0x30] sm:$0xff]
      %v1556 = vld [vmem:[%s1548 + $0x38] sm:$0xff]
      %v1557 = vld [vmem:[%s1548 + $0x40] sm:$0xff]
      %v1558 = vld [vmem:[%s1548 + $0x48] sm:$0xff]
      %v1559 = vld [vmem:[%s1548 + $0x50] sm:$0xff]
      %v1560 = vld [vmem:[%s1548 + $0x58] sm:$0xff]
      %v1561 = vld [vmem:[%s1548 + $0x60] sm:$0xff]
      %v1562 = vld [vmem:[%s1548 + $0x68] sm:$0xff]
      %v1563 = vld [vmem:[%s1548 + $0x70] sm:$0xff]
      %v1564 = vld [vmem:[%s1548 + $0x78] sm:$0xff]
      %1565 = vmatprep.subr.mxu0 0.0
      %1566 = vmatpush1.msra.mxu0 %v1564
      %1567 = vmatprep.subr.mxu0 0.0
      %1568 = vmatpush1.msra.mxu0 %v1563
      %1569 = vmatprep.subr.mxu0 0.0
      %1570 = vmatpush1.msra.mxu0 %v1562
      %1571 = vmatprep.subr.mxu0 0.0
      %1572 = vmatpush1.msra.mxu0 %v1561
      %1573 = vmatprep.subr.mxu0 0.0
      %1574 = vmatpush1.msra.mxu0 %v1560
      %1575 = vmatprep.subr.mxu0 0.0
      %1576 = vmatpush1.msra.mxu0 %v1559
      %1577 = vmatprep.subr.mxu0 0.0
      %1578 = vmatpush1.msra.mxu0 %v1558
      %1579 = vmatprep.subr.mxu0 0.0
      %1580 = vmatpush1.msra.mxu0 %v1557
      %1581 = vmatprep.subr.mxu0 0.0
      %1582 = vmatpush1.msra.mxu0 %v1556
      %1583 = vmatprep.subr.mxu0 0.0
      %1584 = vmatpush1.msra.mxu0 %v1555
      %1585 = vmatprep.subr.mxu0 0.0
      %1586 = vmatpush1.msra.mxu0 %v1554
      %1587 = vmatprep.subr.mxu0 0.0
      %1588 = vmatpush1.msra.mxu0 %v1553
      %1589 = vmatprep.subr.mxu0 0.0
      %1590 = vmatpush1.msra.mxu0 %v1552
      %1591 = vmatprep.subr.mxu0 0.0
      %1592 = vmatpush1.msra.mxu0 %v1551
      %1593 = vmatprep.subr.mxu0 0.0
      %1594 = vmatpush1.msra.mxu0 %v1550
      %1595 = vmatprep.subr.mxu0 0.0
      %1596 = vmatpush1.msra.mxu0 %v1549
      %1597 = vmatprep.subr.mxu0 0.0
      %1598 = vmatpush2.msra.mxu0 0.0
      %1599 = vmatprep.subr.mxu0 0.0
      %1600 = vmatpush2.msra.mxu0 0.0
      %1601 = vmatprep.subr.mxu0 0.0
      %1602 = vmatpush2.msra.mxu0 0.0
      %1603 = vmatprep.subr.mxu0 0.0
      %1604 = vmatpush2.msra.mxu0 0.0
      %1605 = vmatprep.subr.mxu0 0.0
      %1606 = vmatpush2.msra.mxu0 0.0
      %1607 = vmatprep.subr.mxu0 0.0
      %1608 = vmatpush2.msra.mxu0 0.0
      %1609 = vmatprep.subr.mxu0 0.0
      %1610 = vmatpush2.msra.mxu0 0.0
      %1611 = vmatprep.subr.mxu0 0.0
      %1612 = vmatpush2.msra.mxu0 0.0
      %1613 = vmatprep.subr.mxu0 0.0
      %1614 = vmatpush2.msra.mxu0 0.0
      %1615 = vmatprep.subr.mxu0 0.0
      %1616 = vmatpush2.msra.mxu0 0.0
      %1617 = vmatprep.subr.mxu0 0.0
      %1618 = vmatpush2.msra.mxu0 0.0
      %1619 = vmatprep.subr.mxu0 0.0
      %1620 = vmatpush2.msra.mxu0 0.0
      %1621 = vmatprep.subr.mxu0 0.0
      %1622 = vmatpush2.msra.mxu0 0.0
      %1623 = vmatprep.subr.mxu0 0.0
      %1624 = vmatpush2.msra.mxu0 0.0
      %1625 = vmatprep.subr.mxu0 0.0
      %1626 = vmatpush2.msra.mxu0 0.0
      %1627 = vmatprep.subr.mxu0 0.0
      %1628 = vmatpush2.msra.mxu0 0.0
      %1629 = vmatprep.mubr.f32.mxu0 0.0
      %1630 = vmatmul.mubr.f32.gmra.mxu0 %v1540
      %v1631 = vpop.f32.mrf.mxu0
      %v1632 = vadd.f32 0.0, %v1631
      %v1633 = vpop.f32.mrf.mxu0
      %1634 = vmatprep.mubr.f32.mxu0 0.0
      %1635 = vmatmul.mubr.f32.gmra.mxu0 %v1541
      %v1636 = vpop.f32.mrf.mxu0
      %v1637 = vadd.f32 0.0, %v1636
      %v1638 = vpop.f32.mrf.mxu0
      %1639 = vmatprep.mubr.f32.mxu0 0.0
      %1640 = vmatmul.mubr.f32.gmra.mxu0 %v1542
      %v1641 = vpop.f32.mrf.mxu0
      %v1642 = vadd.f32 0.0, %v1641
      %v1643 = vpop.f32.mrf.mxu0
      %1644 = vmatprep.mubr.f32.mxu0 0.0
      %1645 = vmatmul.mubr.f32.gmra.mxu0 %v1543
      %v1646 = vpop.f32.mrf.mxu0
      %v1647 = vadd.f32 0.0, %v1646
      %v1648 = vpop.f32.mrf.mxu0
      %1649 = vmatprep.mubr.f32.mxu0 0.0
      %1650 = vmatmul.mubr.f32.gmra.mxu0 %v1544
      %v1651 = vpop.f32.mrf.mxu0
      %v1652 = vadd.f32 0.0, %v1651
      %v1653 = vpop.f32.mrf.mxu0
      %1654 = vmatprep.mubr.f32.mxu0 0.0
      %1655 = vmatmul.mubr.f32.gmra.mxu0 %v1545
      %v1656 = vpop.f32.mrf.mxu0
      %v1657 = vadd.f32 0.0, %v1656
      %v1658 = vpop.f32.mrf.mxu0
      %1659 = vmatprep.mubr.f32.mxu0 0.0
      %1660 = vmatmul.mubr.f32.gmra.mxu0 %v1546
      %v1661 = vpop.f32.mrf.mxu0
      %v1662 = vadd.f32 0.0, %v1661
      %v1663 = vpop.f32.mrf.mxu0
      %1664 = vmatprep.mubr.f32.mxu0 0.0
      %1665 = vmatmul.mubr.f32.gmra.mxu0 %v1547
      %v1666 = vpop.f32.mrf.mxu0
      %v1667 = vadd.f32 0.0, %v1666
      %v1668 = vpop.f32.mrf.mxu0
      %1669 = vdwg.mxu0
      %v1670 = vadd.f32 %v1532, %v1632
      %v1671 = vadd.f32 %v1533, %v1637
      %v1672 = vadd.f32 %v1534, %v1642
      %v1673 = vadd.f32 %v1535, %v1647
      %v1674 = vadd.f32 %v1536, %v1652
      %v1675 = vadd.f32 %v1537, %v1657
      %v1676 = vadd.f32 %v1538, %v1662
      %v1677 = vadd.f32 %v1539, %v1667
      %v1678 = vld [vmem:[%s4] sm:$0x1]
      %v1680 = vlaneseq
      %v1681 = vshrl.u32 %v1680, 7
      %v1682 = vsub.s32 0, %v1681
      %v1683 = vrot.slane %v1678, %v1682
      %v1685 = vadd.f32 %v1670, %v1683
      %v1686 = vadd.f32 %v1671, %v1683
      %v1687 = vadd.f32 %v1672, %v1683
      %v1688 = vadd.f32 %v1673, %v1683
      %v1689 = vadd.f32 %v1674, %v1683
      %v1690 = vadd.f32 %v1675, %v1683
      %v1691 = vadd.f32 %v1676, %v1683
      %v1692 = vadd.f32 %v1677, %v1683
      %v1693 = vmax.f32 %v1685, 0.0
      %v1694 = vmax.f32 %v1686, 0.0
      %v1695 = vmax.f32 %v1687, 0.0
      %v1696 = vmax.f32 %v1688, 0.0
      %v1697 = vmax.f32 %v1689, 0.0
      %v1698 = vmax.f32 %v1690, 0.0
      %v1699 = vmax.f32 %v1691, 0.0
      %v1700 = vmax.f32 %v1692, 0.0
      %v1701 = vld [vmem:[%s5] sm:$0xff]
      %v1702 = vld [vmem:[%s5 + $0x8] sm:$0xff]
      %v1703 = vld [vmem:[%s5 + $0x10] sm:$0xff]
      %v1704 = vld [vmem:[%s5 + $0x18] sm:$0xff]
      %v1705 = vld [vmem:[%s5 + $0x20] sm:$0xff]
      %v1706 = vld [vmem:[%s5 + $0x28] sm:$0xff]
      %v1707 = vld [vmem:[%s5 + $0x30] sm:$0xff]
      %v1708 = vld [vmem:[%s5 + $0x38] sm:$0xff]
      %v1709 = vld [vmem:[%s5 + $0x40] sm:$0xff]
      %v1710 = vld [vmem:[%s5 + $0x48] sm:$0xff]
      %v1711 = vld [vmem:[%s5 + $0x50] sm:$0xff]
      %v1712 = vld [vmem:[%s5 + $0x58] sm:$0xff]
      %v1713 = vld [vmem:[%s5 + $0x60] sm:$0xff]
      %v1714 = vld [vmem:[%s5 + $0x68] sm:$0xff]
      %v1715 = vld [vmem:[%s5 + $0x70] sm:$0xff]
      %v1716 = vld [vmem:[%s5 + $0x78] sm:$0xff]
      %v1717 = vld [vmem:[%s6] sm:$0x1]
      %v1719 = vlaneseq
      %v1720 = vshrl.u32 %v1719, 7
      %v1721 = vsub.s32 0, %v1720
      %v1722 = vrot.slane %v1717, %v1721
      %1724 = vmatprep.subr.mxu0 0.0
      %1725 = vmatpush1.msra.mxu0 %v1716
      %1726 = vmatprep.subr.mxu0 0.0
      %1727 = vmatpush1.msra.mxu0 %v1715
      %1728 = vmatprep.subr.mxu0 0.0
      %1729 = vmatpush1.msra.mxu0 %v1714
      %1730 = vmatprep.subr.mxu0 0.0
      %1731 = vmatpush1.msra.mxu0 %v1713
      %1732 = vmatprep.subr.mxu0 0.0
      %1733 = vmatpush1.msra.mxu0 %v1712
      %1734 = vmatprep.subr.mxu0 0.0
      %1735 = vmatpush1.msra.mxu0 %v1711
      %1736 = vmatprep.subr.mxu0 0.0
      %1737 = vmatpush1.msra.mxu0 %v1710
      %1738 = vmatprep.subr.mxu0 0.0
      %1739 = vmatpush1.msra.mxu0 %v1709
      %1740 = vmatprep.subr.mxu0 0.0
      %1741 = vmatpush1.msra.mxu0 %v1708
      %1742 = vmatprep.subr.mxu0 0.0
      %1743 = vmatpush1.msra.mxu0 %v1707
      %1744 = vmatprep.subr.mxu0 0.0
      %1745 = vmatpush1.msra.mxu0 %v1706
      %1746 = vmatprep.subr.mxu0 0.0
      %1747 = vmatpush1.msra.mxu0 %v1705
      %1748 = vmatprep.subr.mxu0 0.0
      %1749 = vmatpush1.msra.mxu0 %v1704
      %1750 = vmatprep.subr.mxu0 0.0
      %1751 = vmatpush1.msra.mxu0 %v1703
      %1752 = vmatprep.subr.mxu0 0.0
      %1753 = vmatpush1.msra.mxu0 %v1702
      %1754 = vmatprep.subr.mxu0 0.0
      %1755 = vmatpush1.msra.mxu0 %v1701
      %1756 = vmatprep.subr.mxu0 0.0
      %1757 = vmatpush2.msra.mxu0 0.0
      %1758 = vmatprep.subr.mxu0 0.0
      %1759 = vmatpush2.msra.mxu0 0.0
      %1760 = vmatprep.subr.mxu0 0.0
      %1761 = vmatpush2.msra.mxu0 0.0
      %1762 = vmatprep.subr.mxu0 0.0
      %1763 = vmatpush2.msra.mxu0 0.0
      %1764 = vmatprep.subr.mxu0 0.0
      %1765 = vmatpush2.msra.mxu0 0.0
      %1766 = vmatprep.subr.mxu0 0.0
      %1767 = vmatpush2.msra.mxu0 0.0
      %1768 = vmatprep.subr.mxu0 0.0
      %1769 = vmatpush2.msra.mxu0 0.0
      %1770 = vmatprep.subr.mxu0 0.0
      %1771 = vmatpush2.msra.mxu0 0.0
      %1772 = vmatprep.subr.mxu0 0.0
      %1773 = vmatpush2.msra.mxu0 0.0
      %1774 = vmatprep.subr.mxu0 0.0
      %1775 = vmatpush2.msra.mxu0 0.0
      %1776 = vmatprep.subr.mxu0 0.0
      %1777 = vmatpush2.msra.mxu0 0.0
      %1778 = vmatprep.subr.mxu0 0.0
      %1779 = vmatpush2.msra.mxu0 0.0
      %1780 = vmatprep.subr.mxu0 0.0
      %1781 = vmatpush2.msra.mxu0 0.0
      %1782 = vmatprep.subr.mxu0 0.0
      %1783 = vmatpush2.msra.mxu0 0.0
      %1784 = vmatprep.subr.mxu0 0.0
      %1785 = vmatpush2.msra.mxu0 0.0
      %1786 = vmatprep.subr.mxu0 0.0
      %1787 = vmatpush2.msra.mxu0 0.0
      %1788 = vmatprep.mubr.f32.mxu0 0.0
      %1789 = vmatmul.mubr.f32.gmra.mxu0 %v1693
      %v1790 = vpop.f32.mrf.mxu0
      %v1791 = vadd.f32 %v1722, %v1790
      %v1792 = vpop.f32.mrf.mxu0
      %1793 = vmatprep.mubr.f32.mxu0 0.0
      %1794 = vmatmul.mubr.f32.gmra.mxu0 %v1694
      %v1795 = vpop.f32.mrf.mxu0
      %v1796 = vadd.f32 %v1722, %v1795
      %v1797 = vpop.f32.mrf.mxu0
      %1798 = vmatprep.mubr.f32.mxu0 0.0
      %1799 = vmatmul.mubr.f32.gmra.mxu0 %v1695
      %v1800 = vpop.f32.mrf.mxu0
      %v1801 = vadd.f32 %v1722, %v1800
      %v1802 = vpop.f32.mrf.mxu0
      %1803 = vmatprep.mubr.f32.mxu0 0.0
      %1804 = vmatmul.mubr.f32.gmra.mxu0 %v1696
      %v1805 = vpop.f32.mrf.mxu0
      %v1806 = vadd.f32 %v1722, %v1805
      %v1807 = vpop.f32.mrf.mxu0
      %1808 = vmatprep.mubr.f32.mxu0 0.0
      %1809 = vmatmul.mubr.f32.gmra.mxu0 %v1697
      %v1810 = vpop.f32.mrf.mxu0
      %v1811 = vadd.f32 %v1722, %v1810
      %v1812 = vpop.f32.mrf.mxu0
      %1813 = vmatprep.mubr.f32.mxu0 0.0
      %1814 = vmatmul.mubr.f32.gmra.mxu0 %v1698
      %v1815 = vpop.f32.mrf.mxu0
      %v1816 = vadd.f32 %v1722, %v1815
      %v1817 = vpop.f32.mrf.mxu0
      %1818 = vmatprep.mubr.f32.mxu0 0.0
      %1819 = vmatmul.mubr.f32.gmra.mxu0 %v1699
      %v1820 = vpop.f32.mrf.mxu0
      %v1821 = vadd.f32 %v1722, %v1820
      %v1822 = vpop.f32.mrf.mxu0
      %1823 = vmatprep.mubr.f32.mxu0 0.0
      %1824 = vmatmul.mubr.f32.gmra.mxu0 %v1700
      %v1825 = vpop.f32.mrf.mxu0
      %v1826 = vadd.f32 %v1722, %v1825
      %v1827 = vpop.f32.mrf.mxu0
      %1828 = vdwg.mxu0
      %v1829 = vadd.f32 %v1791, %v279
      %v1830 = vadd.f32 %v1796, %v280
      %v1831 = vadd.f32 %v1801, %v281
      %v1832 = vadd.f32 %v1806, %v282
      %v1833 = vadd.f32 %v1811, %v283
      %v1834 = vadd.f32 %v1816, %v284
      %v1835 = vadd.f32 %v1821, %v285
      %v1836 = vadd.f32 %v1826, %v286
      %v1837 = vmax.f32 %v1829, 0.0
      %v1838 = vmax.f32 %v1830, 0.0
      %v1839 = vmax.f32 %v1831, 0.0
      %v1840 = vmax.f32 %v1832, 0.0
      %v1841 = vmax.f32 %v1833, 0.0
      %v1842 = vmax.f32 %v1834, 0.0
      %v1843 = vmax.f32 %v1835, 0.0
      %v1844 = vmax.f32 %v1836, 0.0
      %1845 = vst [vmem:[%s278] sm:$0xff] %v1837
      %1846 = vst [vmem:[%s278 + $0x8] sm:$0xff] %v1838
      %1847 = vst [vmem:[%s278 + $0x10] sm:$0xff] %v1839
      %1848 = vst [vmem:[%s278 + $0x18] sm:$0xff] %v1840
      %1849 = vst [vmem:[%s278 + $0x20] sm:$0xff] %v1841
      %1850 = vst [vmem:[%s278 + $0x28] sm:$0xff] %v1842
      %1851 = vst [vmem:[%s278 + $0x30] sm:$0xff] %v1843
      %1852 = vst [vmem:[%s278 + $0x38] sm:$0xff] %v1844
      %p1853 = scmp.lt.s32.totalorder %s18, 1
      %s1854 = scalar_select %p1853, %s18, 1
      %s1855 = smul.addr %s1854, 8
      %s1856 = smul.addr %s1855, 8
      %s1857 = scalar_lea.vmem %s7, %s1856
      // Predicated region
      $region49: #{head_forward.4} parent=47 // pred_check
        %p1858 = pneg %p188
      $region50: #{head_forward.4} parent=47 // pred_check_branch
        %1860 = sbr.rel (%p1858) target = $region52
      $region51: #{head_forward.4} parent=47 // pred_region
        _
      $region52: #{head_forward.4} parent=47 // pred_fallthru
        _
    $region48: #{head_forward.4} parent=5 // pred_fallthru
      _
    %p1861 = scmp.le.s32.totalorder 2, %s13
    // Predicated region
    $region53: #{head_forward.4} parent=5 // pred_check
      %p1862 = pneg %p1861
    $region54: #{head_forward.4} parent=5 // pred_check_branch
      %1864 = sbr.rel (%p1862) target = $region56
    $region55: #{head_forward.4} parent=5 // pred_region
      %s1865 = ssub.s32 %s13, 2
      // Predicated region
      $region57: #{head_forward.4} parent=55 // pred_check
        %p1866 = pneg %p194
      $region58: #{head_forward.4} parent=55 // pred_check_branch
        %1868 = sbr.rel (%p1866) target = $region60
      $region59: #{head_forward.4} parent=55 // pred_region
        %p1869 = scmp.lt.s32.totalorder %s19, 1
        %s1870 = scalar_select %p1869, %s19, 1
        %s1871 = smul.addr %s1870, 8
        %s1872 = smul.addr %s1871, 8
        %s1873 = scalar_lea.vmem %s7, %s1872
      $region60: #{head_forward.4} parent=55 // pred_fallthru
        _
    $region56: #{head_forward.4} parent=5 // pred_fallthru
      _
  $region6: #{head_forward.4} parent=0 // loop_footer
    %s17 = sadd.s32 1, %s13
  $region7: #{head_forward.4} parent=0 // loop_footer_branch
    %12 = sbr.rel target = $region3
  $region8: #{head_forward.4} parent=0 // loop_exit
    _

// kernel: head_forward.3
$region0: #{head_forward.3}
  #allocation0 [shape = 'u32[]', space=smem, size = 0x4, offset = 0x4, fixed_abs, tag = 'smem constant byte address 0x4 - core index']
  #allocation1 [shape = 'u32[144,128]{1,0:T(1,128)}', space=vmem, size = 0x12000, scoped, tag = 'internal scratch']
  #allocation2 [shape = 'f32[1,9,9,128]{3,2,1,0:T(8,128)}', space=vmem, size = 0x12000, scoped, tag = 'scratch operand']
  #allocation3 [shape = 'f32[1,9,9,128]{3,2,1,0:T(8,128)}', space=vmem, size = 0x12000, scoped, tag = 'scratch operand']
  #allocation4 [shape = 'f32[1,9,9,128]{3,2,1,0:T(8,128)}', space=vmem, size = 0x12000, scoped, tag = 'scratch operand']
  #allocation5 [shape = 'f32[1,9,9,128]{3,2,1,0:T(8,128)}', space=vmem, size = 0x12000, scoped, tag = 'scratch operand']
  %s0 = inlined_call_operand.vmem [shape: f32[2,64,512], index: 0, kind: input, shape index: {}]
  %s1 = inlined_call_operand.vmem [shape: f32[128,128], index: 1, kind: input, shape index: {}]
  %s2 = inlined_call_operand.vmem [shape: f32[1,128], index: 2, kind: input, shape index: {}]
  %s3 = inlined_call_operand.vmem [shape: f32[9,128,128], index: 3, kind: input, shape index: {}]
  %s4 = inlined_call_operand.vmem [shape: f32[1,128], index: 4, kind: input, shape index: {}]
  %s5 = inlined_call_operand.vmem [shape: f32[128,128], index: 5, kind: input, shape index: {}]
  %s6 = inlined_call_operand.vmem [shape: f32[1,128], index: 6, kind: input, shape index: {}]
  %s7 = inlined_call_operand.vmem [shape: f32[128,128], index: 7, kind: input, shape index: {}]
  %s8 = inlined_call_operand.vmem [shape: f32[1,128], index: 8, kind: input, shape index: {}]
  %s9 = inlined_call_operand.vmem [shape: f32[2,64,128], index: 9, kind: output, shape index: {}]
  %s10 = sld [smem:[#allocation0]]
  $region69: #{head_forward.3} parent=0
    _
  %s12 = ssub.s32 1, %s10
  %s13 = scalar_select 0, %s12, %s10
  loop: start=0, step=1, limit=4
  $region2: #{head_forward.3} parent=0 // loop_pre_header
    _
  $region3: #{head_forward.3} parent=0 // loop_header
    %s15 = sphi 0, %s19
    %p16 = scmp.ge.s32.totalorder %s15, 4
    %s25 = sphi 0, %s27
    %s28 = sphi 0, %s25
    %s29 = sphi 0, %s28
    %s45 = sphi 0, %s29
    %s49 = sphi 0, %s49
    %s51 = sphi 0, %s49
    %s52 = sphi 0, %s51
    %s66 = sphi 0, %s52
    %s70 = sphi 0, %s70
    %s72 = sphi 0, %s70
    %s73 = sphi 0, %s72
    %s87 = sphi 0, %s73
    %s91 = sphi 0, %s91
    %s93 = sphi 0, %s91
    %s94 = sphi 0, %s93
    %s108 = sphi 0, %s94
    %s112 = sphi 0, %s112
    %s114 = sphi 0, %s112
    %s115 = sphi 0, %s114
    %s129 = sphi 0, %s115
    %s133 = sphi 0, %s133
    %s135 = sphi 0, %s133
    %s136 = sphi 0, %s135
    %s150 = sphi 0, %s136
    %s154 = sphi 0, %s154
    %s156 = sphi 0, %s154
    %s157 = sphi 0, %s156
    %s171 = sphi 0, %s157
    %s175 = sphi 0, %s175
    %s177 = sphi 0, %s175
    %s178 = sphi 0, %s177
    %s192 = sphi 0, %s178
    %s196 = sphi 0, %s196
    %s198 = sphi 0, %s196
    %s199 = sphi 0, %s198
    %s213 = sphi 0, %s199
    %s219 = sphi 0, %s221
    %s222 = sphi 0, %s219
    %s223 = sphi 0, %s222
    %s239 = sphi 0, %s223
  $region4: #{head_forward.3} parent=0 // loop_header_branch
    %18 = sbr.rel (%p16) target = $region8
  $region5: #{head_forward.3} parent=0 // loop_body
    %s20 = ssub.s32 %s15, 1
    %s21 = ssub.s32 %s15, 2
    %s22 = sadd.s32 %s15, 1
    %s23 = ssub.s32 %s15, %s22
    %p24 = scmp.eq.s32.totalorder %s23, 0
    %s26 = sadd.s32 %s25, 1
    %s27 = scalar_select %p24, %s25, %s26
    %p30 = pneg %p24
    %p31 = scmp.eq.s32.totalorder %s15, 1
    %p32 = por %p30, %p31
    %p33 = scmp.ne.s32.totalorder %s25, %s28
    %p34 = scmp.eq.s32.totalorder %s15, 0
    %p35 = por %p33, %p34
    %p36 = scmp.ne.s32.totalorder %s25, %s28
    %p37 = scmp.eq.s32.totalorder %s20, 1
    %p38 = por %p36, %p37
    %p39 = scmp.ne.s32.totalorder %s28, %s29
    %p40 = scmp.eq.s32.totalorder %s20, 0
    %p41 = por %p39, %p40
    %p42 = scmp.ne.s32.totalorder %s28, %s29
    %p43 = scmp.eq.s32.totalorder %s21, 1
    %p44 = por %p42, %p43
    %p46 = scmp.ne.s32.totalorder %s29, %s45
    %p47 = scmp.eq.s32.totalorder %s21, 0
    %p48 = por %p46, %p47
    %s50 = sadd.s32 %s49, 1
    %p53 = scmp.eq.s32.totalorder %s15, 1
    %p54 = scmp.ne.s32.totalorder %s49, %s51
    %p55 = scmp.eq.s32.totalorder %s15, 0
    %p56 = por %p54, %p55
    %p57 = scmp.ne.s32.totalorder %s49, %s51
    %p58 = scmp.eq.s32.totalorder %s20, 1
    %p59 = por %p57, %p58
    %p60 = scmp.ne.s32.totalorder %s51, %s52
    %p61 = scmp.eq.s32.totalorder %s20, 0
    %p62 = por %p60, %p61
    %p63 = scmp.ne.s32.totalorder %s51, %s52
    %p64 = scmp.eq.s32.totalorder %s21, 1
    %p65 = por %p63, %p64
    %p67 = scmp.ne.s32.totalorder %s52, %s66
    %p68 = scmp.eq.s32.totalorder %s21, 0
    %p69 = por %p67, %p68
    %s71 = sadd.s32 %s70, 1
    %p74 = scmp.eq.s32.totalorder %s15, 1
    %p75 = scmp.ne.s32.totalorder %s70, %s72
    %p76 = scmp.eq.s32.totalorder %s15, 0
    %p77 = por %p75, %p76
    %p78 = scmp.ne.s32.totalorder %s70, %s72
    %p79 = scmp.eq.s32.totalorder %s20, 1
    %p80 = por %p78, %p79
    %p81 = scmp.ne.s32.totalorder %s72, %s73
    %p82 = scmp.eq.s32.totalorder %s20, 0
    %p83 = por %p81, %p82
    %p84 = scmp.ne.s32.totalorder %s72, %s73
    %p85 = scmp.eq.s32.totalorder %s21, 1
    %p86 = por %p84, %p85
    %p88 = scmp.ne.s32.totalorder %s73, %s87
    %p89 = scmp.eq.s32.totalorder %s21, 0
    %p90 = por %p88, %p89
    %s92 = sadd.s32 %s91, 1
    %p95 = scmp.eq.s32.totalorder %s15, 1
    %p96 = scmp.ne.s32.totalorder %s91, %s93
    %p97 = scmp.eq.s32.totalorder %s15, 0
    %p98 = por %p96, %p97
    %p99 = scmp.ne.s32.totalorder %s91, %s93
    %p100 = scmp.eq.s32.totalorder %s20, 1
    %p101 = por %p99, %p100
    %p102 = scmp.ne.s32.totalorder %s93, %s94
    %p103 = scmp.eq.s32.totalorder %s20, 0
    %p104 = por %p102, %p103
    %p105 = scmp.ne.s32.totalorder %s93, %s94
    %p106 = scmp.eq.s32.totalorder %s21, 1
    %p107 = por %p105, %p106
    %p109 = scmp.ne.s32.totalorder %s94, %s108
    %p110 = scmp.eq.s32.totalorder %s21, 0
    %p111 = por %p109, %p110
    %s113 = sadd.s32 %s112, 1
    %p116 = scmp.eq.s32.totalorder %s15, 1
    %p117 = scmp.ne.s32.totalorder %s112, %s114
    %p118 = scmp.eq.s32.totalorder %s15, 0
    %p119 = por %p117, %p118
    %p120 = scmp.ne.s32.totalorder %s112, %s114
    %p121 = scmp.eq.s32.totalorder %s20, 1
    %p122 = por %p120, %p121
    %p123 = scmp.ne.s32.totalorder %s114, %s115
    %p124 = scmp.eq.s32.totalorder %s20, 0
    %p125 = por %p123, %p124
    %p126 = scmp.ne.s32.totalorder %s114, %s115
    %p127 = scmp.eq.s32.totalorder %s21, 1
    %p128 = por %p126, %p127
    %p130 = scmp.ne.s32.totalorder %s115, %s129
    %p131 = scmp.eq.s32.totalorder %s21, 0
    %p132 = por %p130, %p131
    %s134 = sadd.s32 %s133, 1
    %p137 = scmp.eq.s32.totalorder %s15, 1
    %p138 = scmp.ne.s32.totalorder %s133, %s135
    %p139 = scmp.eq.s32.totalorder %s15, 0
    %p140 = por %p138, %p139
    %p141 = scmp.ne.s32.totalorder %s133, %s135
    %p142 = scmp.eq.s32.totalorder %s20, 1
    %p143 = por %p141, %p142
    %p144 = scmp.ne.s32.totalorder %s135, %s136
    %p145 = scmp.eq.s32.totalorder %s20, 0
    %p146 = por %p144, %p145
    %p147 = scmp.ne.s32.totalorder %s135, %s136
    %p148 = scmp.eq.s32.totalorder %s21, 1
    %p149 = por %p147, %p148
    %p151 = scmp.ne.s32.totalorder %s136, %s150
    %p152 = scmp.eq.s32.totalorder %s21, 0
    %p153 = por %p151, %p152
    %s155 = sadd.s32 %s154, 1
    %p158 = scmp.eq.s32.totalorder %s15, 1
    %p159 = scmp.ne.s32.totalorder %s154, %s156
    %p160 = scmp.eq.s32.totalorder %s15, 0
    %p161 = por %p159, %p160
    %p162 = scmp.ne.s32.totalorder %s154, %s156
    %p163 = scmp.eq.s32.totalorder %s20, 1
    %p164 = por %p162, %p163
    %p165 = scmp.ne.s32.totalorder %s156, %s157
    %p166 = scmp.eq.s32.totalorder %s20, 0
    %p167 = por %p165, %p166
    %p168 = scmp.ne.s32.totalorder %s156, %s157
    %p169 = scmp.eq.s32.totalorder %s21, 1
    %p170 = por %p168, %p169
    %p172 = scmp.ne.s32.totalorder %s157, %s171
    %p173 = scmp.eq.s32.totalorder %s21, 0
    %p174 = por %p172, %p173
    %s176 = sadd.s32 %s175, 1
    %p179 = scmp.eq.s32.totalorder %s15, 1
    %p180 = scmp.ne.s32.totalorder %s175, %s177
    %p181 = scmp.eq.s32.totalorder %s15, 0
    %p182 = por %p180, %p181
    %p183 = scmp.ne.s32.totalorder %s175, %s177
    %p184 = scmp.eq.s32.totalorder %s20, 1
    %p185 = por %p183, %p184
    %p186 = scmp.ne.s32.totalorder %s177, %s178
    %p187 = scmp.eq.s32.totalorder %s20, 0
    %p188 = por %p186, %p187
    %p189 = scmp.ne.s32.totalorder %s177, %s178
    %p190 = scmp.eq.s32.totalorder %s21, 1
    %p191 = por %p189, %p190
    %p193 = scmp.ne.s32.totalorder %s178, %s192
    %p194 = scmp.eq.s32.totalorder %s21, 0
    %p195 = por %p193, %p194
    %s197 = sadd.s32 %s196, 1
    %p200 = scmp.eq.s32.totalorder %s15, 1
    %p201 = scmp.ne.s32.totalorder %s196, %s198
    %p202 = scmp.eq.s32.totalorder %s15, 0
    %p203 = por %p201, %p202
    %p204 = scmp.ne.s32.totalorder %s196, %s198
    %p205 = scmp.eq.s32.totalorder %s20, 1
    %p206 = por %p204, %p205
    %p207 = scmp.ne.s32.totalorder %s198, %s199
    %p208 = scmp.eq.s32.totalorder %s20, 0
    %p209 = por %p207, %p208
    %p210 = scmp.ne.s32.totalorder %s198, %s199
    %p211 = scmp.eq.s32.totalorder %s21, 1
    %p212 = por %p210, %p211
    %p214 = scmp.ne.s32.totalorder %s199, %s213
    %p215 = scmp.eq.s32.totalorder %s21, 0
    %p216 = por %p214, %p215
    %s217 = ssub.s32 %s15, %s22
    %p218 = scmp.eq.s32.totalorder %s217, 0
    %s220 = sadd.s32 %s219, 1
    %s221 = scalar_select %p218, %s219, %s220
    %p224 = pneg %p218
    %p225 = scmp.eq.s32.totalorder %s15, 1
    %p226 = por %p224, %p225
    %p227 = scmp.ne.s32.totalorder %s219, %s222
    %p228 = scmp.eq.s32.totalorder %s15, 0
    %p229 = por %p227, %p228
    %p230 = scmp.ne.s32.totalorder %s219, %s222
    %p231 = scmp.eq.s32.totalorder %s20, 1
    %p232 = por %p230, %p231
    %p233 = scmp.ne.s32.totalorder %s222, %s223
    %p234 = scmp.eq.s32.totalorder %s20, 0
    %p235 = por %p233, %p234
    %p236 = scmp.ne.s32.totalorder %s222, %s223
    %p237 = scmp.eq.s32.totalorder %s21, 1
    %p238 = por %p236, %p237
    %p240 = scmp.ne.s32.totalorder %s223, %s239
    %p241 = scmp.eq.s32.totalorder %s21, 0
    %p242 = por %p240, %p241
    %p243 = scmp.le.s32.totalorder 1, %s15
    %p244 = scmp.lt.s32.totalorder %s15, 3
    %p245 = pnand %p243, %p244
    %p246 = pneg %p245
    // Predicated region
    $region9: #{head_forward.3} parent=5 // pred_check
      _
    $region10: #{head_forward.3} parent=5 // pred_check_branch
      %248 = sbr.rel (%p245) target = $region12
    $region11: #{head_forward.3} parent=5 // pred_region
      %s249 = ssub.s32 %s15, 1
      // Predicated region
      $region13: #{head_forward.3} parent=11 // pred_check
        %p250 = pneg %p62
      $region14: #{head_forward.3} parent=11 // pred_check_branch
        %252 = sbr.rel (%p250) target = $region16
      $region15: #{head_forward.3} parent=11 // pred_region
        _
      $region16: #{head_forward.3} parent=11 // pred_fallthru
        _
      // Predicated region
      $region17: #{head_forward.3} parent=11 // pred_check
        %p253 = pneg %p83
      $region18: #{head_forward.3} parent=11 // pred_check_branch
        %255 = sbr.rel (%p253) target = $region20
      $region19: #{head_forward.3} parent=11 // pred_region
        _
      $region20: #{head_forward.3} parent=11 // pred_fallthru
        _
      // Predicated region
      $region21: #{head_forward.3} parent=11 // pred_check
        %p256 = pneg %p104
      $region22: #{head_forward.3} parent=11 // pred_check_branch
        %258 = sbr.rel (%p256) target = $region24
      $region23: #{head_forward.3} parent=11 // pred_region
        _
      $region24: #{head_forward.3} parent=11 // pred_fallthru
        _
      // Predicated region
      $region25: #{head_forward.3} parent=11 // pred_check
        %p259 = pneg %p125
      $region26: #{head_forward.3} parent=11 // pred_check_branch
        %261 = sbr.rel (%p259) target = $region28
      $region27: #{head_forward.3} parent=11 // pred_region
        _
      $region28: #{head_forward.3} parent=11 // pred_fallthru
        _
      // Predicated region
      $region29: #{head_forward.3} parent=11 // pred_check
        %p262 = pneg %p146
      $region30: #{head_forward.3} parent=11 // pred_check_branch
        %264 = sbr.rel (%p262) target = $region32
      $region31: #{head_forward.3} parent=11 // pred_region
        _
      $region32: #{head_forward.3} parent=11 // pred_fallthru
        _
      // Predicated region
      $region33: #{head_forward.3} parent=11 // pred_check
        %p265 = pneg %p167
      $region34: #{head_forward.3} parent=11 // pred_check_branch
        %267 = sbr.rel (%p265) target = $region36
      $region35: #{head_forward.3} parent=11 // pred_region
        _
      $region36: #{head_forward.3} parent=11 // pred_fallthru
        _
      // Predicated region
      $region37: #{head_forward.3} parent=11 // pred_check
        %p268 = pneg %p188
      $region38: #{head_forward.3} parent=11 // pred_check_branch
        %270 = sbr.rel (%p268) target = $region40
      $region39: #{head_forward.3} parent=11 // pred_region
        _
      $region40: #{head_forward.3} parent=11 // pred_fallthru
        _
      // Predicated region
      $region41: #{head_forward.3} parent=11 // pred_check
        %p271 = pneg %p209
      $region42: #{head_forward.3} parent=11 // pred_check_branch
        %273 = sbr.rel (%p271) target = $region44
      $region43: #{head_forward.3} parent=11 // pred_region
        _
      $region44: #{head_forward.3} parent=11 // pred_fallthru
        _
    $region12: #{head_forward.3} parent=5 // pred_fallthru
      _
    %p274 = scmp.lt.s32.totalorder %s15, 2
    // Predicated region
    $region45: #{head_forward.3} parent=5 // pred_check
      %p275 = pneg %p274
    $region46: #{head_forward.3} parent=5 // pred_check_branch
      %277 = sbr.rel (%p275) target = $region48
    $region47: #{head_forward.3} parent=5 // pred_region
      // Predicated region
      $region49: #{head_forward.3} parent=47 // pred_check
        %p278 = pneg %p35
      $region50: #{head_forward.3} parent=47 // pred_check_branch
        %280 = sbr.rel (%p278) target = $region52
      $region51: #{head_forward.3} parent=47 // pred_region
        %p281 = scmp.lt.s32.totalorder %s15, 1
        %s282 = scalar_select %p281, %s15, 1
        %s283 = smul.addr %s282, 32
        %s284 = smul.addr %s283, 8
        %s285 = scalar_lea.vmem %s0, %s284
      $region52: #{head_forward.3} parent=47 // pred_fallthru
        _
    $region48: #{head_forward.3} parent=5 // pred_fallthru
      _
    %p286 = scmp.le.s32.totalorder 1, %s15
    %p287 = scmp.lt.s32.totalorder %s15, 3
    %p288 = pnand %p286, %p287
    %p289 = pneg %p288
    // Predicated region
    $region53: #{head_forward.3} parent=5 // pred_check
      _
    $region54: #{head_forward.3} parent=5 // pred_check_branch
      %291 = sbr.rel (%p288) target = $region56
    $region55: #{head_forward.3} parent=5 // pred_region
      %s292 = ssub.s32 %s15, 1
      %p293 = scmp.lt.s32.totalorder %s20, 1
      %s294 = scalar_select %p293, %s20, 1
      %s295 = smul.addr %s294, 32
      %s296 = smul.addr %s295, 8
      %s297 = scalar_lea.vmem %s0, %s296
      %p298 = pneg %p41
      %p299 = pneg %p38
      %p300 = pneg %p62
      %p301 = pneg %p59
      %p302 = pneg %p83
      %p303 = pneg %p80
      %p304 = pneg %p104
      %p305 = pneg %p101
      %p306 = pneg %p125
      %p307 = pneg %p122
      %p308 = pneg %p146
      %p309 = pneg %p143
      %p310 = pneg %p167
      %p311 = pneg %p164
      %p312 = pneg %p188
      %p313 = pneg %p185
      %p314 = pneg %p209
      %p315 = pneg %p206
      %p316 = pneg %p235
      %p317 = pneg %p232
      %p318 = scmp.lt.s32.totalorder %s20, 1
      %s319 = scalar_select %p318, %s20, 1
      %s320 = smul.addr %s319, 8
      %s321 = smul.addr %s320, 8
      %s322 = scalar_lea.vmem %s9, %s321
      %p323 = scmp.lt.s32.totalorder %s20, 1
      %s324 = scalar_select %p323, %s20, 1
      %s325 = smul.addr %s324, 32
      %s326 = smul.addr %s325, 8
      %s327 = scalar_lea.vmem %s0, %s326
      %p328 = scmp.lt.s32.totalorder %s20, 1
      %s329 = scalar_select %p328, %s20, 1
      %s330 = smul.addr %s329, 8
      %s331 = smul.addr %s330, 8
      %s332 = scalar_lea.vmem %s9, %s331
      %v333 = vld [vmem:[%s327] sm:$0xff]
      %v334 = vld [vmem:[%s327 + $0x8] sm:$0xff]
      %v335 = vld [vmem:[%s327 + $0x10] sm:$0xff]
      %v336 = vld [vmem:[%s327 + $0x18] sm:$0xff]
      %v337 = vld [vmem:[%s327 + $0x20] sm:$0xff]
      %v338 = vld [vmem:[%s327 + $0x28] sm:$0xff]
      %v339 = vld [vmem:[%s327 + $0x30] sm:$0xff]
      %v340 = vld [vmem:[%s327 + $0x38] sm:$0xff]
      %v341 = vld [vmem:[%s327 + $0x40] sm:$0xff]
      %v342 = vld [vmem:[%s327 + $0x48] sm:$0xff]
      %v343 = vld [vmem:[%s327 + $0x50] sm:$0xff]
      %v344 = vld [vmem:[%s327 + $0x58] sm:$0xff]
      %v345 = vld [vmem:[%s327 + $0x60] sm:$0xff]
      %v346 = vld [vmem:[%s327 + $0x68] sm:$0xff]
      %v347 = vld [vmem:[%s327 + $0x70] sm:$0xff]
      %v348 = vld [vmem:[%s327 + $0x78] sm:$0xff]
      %v349 = vld [vmem:[%s327 + $0x80] sm:$0xff]
      %v350 = vld [vmem:[%s327 + $0x88] sm:$0xff]
      %v351 = vld [vmem:[%s327 + $0x90] sm:$0xff]
      %v352 = vld [vmem:[%s327 + $0x98] sm:$0xff]
      %v353 = vld [vmem:[%s327 + $0xa0] sm:$0xff]
      %v354 = vld [vmem:[%s327 + $0xa8] sm:$0xff]
      %v355 = vld [vmem:[%s327 + $0xb0] sm:$0xff]
      %v356 = vld [vmem:[%s327 + $0xb8] sm:$0xff]
      %v357 = vld [vmem:[%s327 + $0xc0] sm:$0xff]
      %v358 = vld [vmem:[%s327 + $0xc8] sm:$0xff]
      %v359 = vld [vmem:[%s327 + $0xd0] sm:$0xff]
      %v360 = vld [vmem:[%s327 + $0xd8] sm:$0xff]
      %v361 = vld [vmem:[%s327 + $0xe0] sm:$0xff]
      %v362 = vld [vmem:[%s327 + $0xe8] sm:$0xff]
      %v363 = vld [vmem:[%s327 + $0xf0] sm:$0xff]
      %v364 = vld [vmem:[%s327 + $0xf8] sm:$0xff]
      %365 = vst [vmem:[#allocation2] sm:$0xff] 0.0
      %366 = vst [vmem:[#allocation2 + $0x8] sm:$0x1] 0.0
      %367 = vst [vmem:[#allocation2 + $0x10] sm:$0xff] 0.0
      %368 = vst [vmem:[#allocation2 + $0x18] sm:$0x1] 0.0
      %369 = vst [vmem:[#allocation2 + $0x20] sm:$0xff] 0.0
      %370 = vst [vmem:[#allocation2 + $0x28] sm:$0x1] 0.0
      %371 = vst [vmem:[#allocation2 + $0x30] sm:$0xff] 0.0
      %372 = vst [vmem:[#allocation2 + $0x38] sm:$0x1] 0.0
      %373 = vst [vmem:[#allocation2 + $0x40] sm:$0xff] 0.0
      %374 = vst [vmem:[#allocation2 + $0x48] sm:$0x1] 0.0
      %375 = vst [vmem:[#allocation2 + $0x50] sm:$0xff] 0.0
      %376 = vst [vmem:[#allocation2 + $0x58] sm:$0x1] 0.0
      %377 = vst [vmem:[#allocation2 + $0x60] sm:$0xff] 0.0
      %378 = vst [vmem:[#allocation2 + $0x68] sm:$0x1] 0.0
      %379 = vst [vmem:[#allocation2 + $0x70] sm:$0xff] 0.0
      %380 = vst [vmem:[#allocation2 + $0x78] sm:$0x1] 0.0
      %381 = vst [vmem:[#allocation2 + $0x80] sm:$0xff] 0.0
      %382 = vst [vmem:[#allocation2 + $0x88] sm:$0x1] 0.0
      %383 = vst [vmem:[#allocation3] sm:$0xff] 0.0
      %384 = vst [vmem:[#allocation3 + $0x8] sm:$0x1] 0.0
      %385 = vst [vmem:[#allocation3 + $0x10] sm:$0xff] 0.0
      %386 = vst [vmem:[#allocation3 + $0x18] sm:$0x1] 0.0
      %387 = vst [vmem:[#allocation3 + $0x20] sm:$0xff] 0.0
      %388 = vst [vmem:[#allocation3 + $0x28] sm:$0x1] 0.0
      %389 = vst [vmem:[#allocation3 + $0x30] sm:$0xff] 0.0
      %390 = vst [vmem:[#allocation3 + $0x38] sm:$0x1] 0.0
      %391 = vst [vmem:[#allocation3 + $0x40] sm:$0xff] 0.0
      %392 = vst [vmem:[#allocation3 + $0x48] sm:$0x1] 0.0
      %393 = vst [vmem:[#allocation3 + $0x50] sm:$0xff] 0.0
      %394 = vst [vmem:[#allocation3 + $0x58] sm:$0x1] 0.0
      %395 = vst [vmem:[#allocation3 + $0x60] sm:$0xff] 0.0
      %396 = vst [vmem:[#allocation3 + $0x68] sm:$0x1] 0.0
      %397 = vst [vmem:[#allocation3 + $0x70] sm:$0xff] 0.0
      %398 = vst [vmem:[#allocation3 + $0x78] sm:$0x1] 0.0
      %399 = vst [vmem:[#allocation3 + $0x80] sm:$0xff] 0.0
      %400 = vst [vmem:[#allocation3 + $0x88] sm:$0x1] 0.0
      %401 = vst [vmem:[#allocation4] sm:$0xff] 0.0
      %402 = vst [vmem:[#allocation4 + $0x8] sm:$0x1] 0.0
      %403 = vst [vmem:[#allocation4 + $0x10] sm:$0xff] 0.0
      %404 = vst [vmem:[#allocation4 + $0x18] sm:$0x1] 0.0
      %405 = vst [vmem:[#allocation4 + $0x20] sm:$0xff] 0.0
      %406 = vst [vmem:[#allocation4 + $0x28] sm:$0x1] 0.0
      %407 = vst [vmem:[#allocation4 + $0x30] sm:$0xff] 0.0
      %408 = vst [vmem:[#allocation4 + $0x38] sm:$0x1] 0.0
      %409 = vst [vmem:[#allocation4 + $0x40] sm:$0xff] 0.0
      %410 = vst [vmem:[#allocation4 + $0x48] sm:$0x1] 0.0
      %411 = vst [vmem:[#allocation4 + $0x50] sm:$0xff] 0.0
      %412 = vst [vmem:[#allocation4 + $0x58] sm:$0x1] 0.0
      %413 = vst [vmem:[#allocation4 + $0x60] sm:$0xff] 0.0
      %414 = vst [vmem:[#allocation4 + $0x68] sm:$0x1] 0.0
      %415 = vst [vmem:[#allocation4 + $0x70] sm:$0xff] 0.0
      %416 = vst [vmem:[#allocation4 + $0x78] sm:$0x1] 0.0
      %417 = vst [vmem:[#allocation4 + $0x80] sm:$0xff] 0.0
      %418 = vst [vmem:[#allocation4 + $0x88] sm:$0x1] 0.0
      %419 = vst [vmem:[#allocation5] sm:$0xff] 0.0
      %420 = vst [vmem:[#allocation5 + $0x8] sm:$0x1] 0.0
      %421 = vst [vmem:[#allocation5 + $0x10] sm:$0xff] 0.0
      %422 = vst [vmem:[#allocation5 + $0x18] sm:$0x1] 0.0
      %423 = vst [vmem:[#allocation5 + $0x20] sm:$0xff] 0.0
      %424 = vst [vmem:[#allocation5 + $0x28] sm:$0x1] 0.0
      %425 = vst [vmem:[#allocation5 + $0x30] sm:$0xff] 0.0
      %426 = vst [vmem:[#allocation5 + $0x38] sm:$0x1] 0.0
      %427 = vst [vmem:[#allocation5 + $0x40] sm:$0xff] 0.0
      %428 = vst [vmem:[#allocation5 + $0x48] sm:$0x1] 0.0
      %429 = vst [vmem:[#allocation5 + $0x50] sm:$0xff] 0.0
      %430 = vst [vmem:[#allocation5 + $0x58] sm:$0x1] 0.0
      %431 = vst [vmem:[#allocation5 + $0x60] sm:$0xff] 0.0
      %432 = vst [vmem:[#allocation5 + $0x68] sm:$0x1] 0.0
      %433 = vst [vmem:[#allocation5 + $0x70] sm:$0xff] 0.0
      %434 = vst [vmem:[#allocation5 + $0x78] sm:$0x1] 0.0
      %435 = vst [vmem:[#allocation5 + $0x80] sm:$0xff] 0.0
      %436 = vst [vmem:[#allocation5 + $0x88] sm:$0x1] 0.0
      %v437 = vld [vmem:[%s1] sm:$0xff]
      %v438 = vld [vmem:[%s1 + $0x8] sm:$0xff]
      %v439 = vld [vmem:[%s1 + $0x10] sm:$0xff]
      %v440 = vld [vmem:[%s1 + $0x18] sm:$0xff]
      %v441 = vld [vmem:[%s1 + $0x20] sm:$0xff]
      %v442 = vld [vmem:[%s1 + $0x28] sm:$0xff]
      %v443 = vld [vmem:[%s1 + $0x30] sm:$0xff]
      %v444 = vld [vmem:[%s1 + $0x38] sm:$0xff]
      %v445 = vld [vmem:[%s1 + $0x40] sm:$0xff]
      %v446 = vld [vmem:[%s1 + $0x48] sm:$0xff]
      %v447 = vld [vmem:[%s1 + $0x50] sm:$0xff]
      %v448 = vld [vmem:[%s1 + $0x58] sm:$0xff]
      %v449 = vld [vmem:[%s1 + $0x60] sm:$0xff]
      %v450 = vld [vmem:[%s1 + $0x68] sm:$0xff]
      %v451 = vld [vmem:[%s1 + $0x70] sm:$0xff]
      %v452 = vld [vmem:[%s1 + $0x78] sm:$0xff]
      %v453 = vld [vmem:[%s2] sm:$0x1]
      %v455 = vlaneseq
      %v456 = vshrl.u32 %v455, 7
      %v457 = vsub.s32 0, %v456
      %v458 = vrot.slane %v453, %v457
      %460 = vmatprep.subr.mxu0 0.0
      %461 = vmatpush1.msra.mxu0 %v452
      %462 = vmatprep.subr.mxu0 0.0
      %463 = vmatpush1.msra.mxu0 %v451
      %464 = vmatprep.subr.mxu0 0.0
      %465 = vmatpush1.msra.mxu0 %v450
      %466 = vmatprep.subr.mxu0 0.0
      %467 = vmatpush1.msra.mxu0 %v449
      %468 = vmatprep.subr.mxu0 0.0
      %469 = vmatpush1.msra.mxu0 %v448
      %470 = vmatprep.subr.mxu0 0.0
      %471 = vmatpush1.msra.mxu0 %v447
      %472 = vmatprep.subr.mxu0 0.0
      %473 = vmatpush1.msra.mxu0 %v446
      %474 = vmatprep.subr.mxu0 0.0
      %475 = vmatpush1.msra.mxu0 %v445
      %476 = vmatprep.subr.mxu0 0.0
      %477 = vmatpush1.msra.mxu0 %v444
      %478 = vmatprep.subr.mxu0 0.0
      %479 = vmatpush1.msra.mxu0 %v443
      %480 = vmatprep.subr.mxu0 0.0
      %481 = vmatpush1.msra.mxu0 %v442
      %482 = vmatprep.subr.mxu0 0.0
      %483 = vmatpush1.msra.mxu0 %v441
      %484 = vmatprep.subr.mxu0 0.0
      %485 = vmatpush1.msra.mxu0 %v440
      %486 = vmatprep.subr.mxu0 0.0
      %487 = vmatpush1.msra.mxu0 %v439
      %488 = vmatprep.subr.mxu0 0.0
      %489 = vmatpush1.msra.mxu0 %v438
      %490 = vmatprep.subr.mxu0 0.0
      %491 = vmatpush1.msra.mxu0 %v437
      %492 = vmatprep.subr.mxu0 0.0
      %493 = vmatpush2.msra.mxu0 0.0
      %494 = vmatprep.subr.mxu0 0.0
      %495 = vmatpush2.msra.mxu0 0.0
      %496 = vmatprep.subr.mxu0 0.0
      %497 = vmatpush2.msra.mxu0 0.0
      %498 = vmatprep.subr.mxu0 0.0
      %499 = vmatpush2.msra.mxu0 0.0
      %500 = vmatprep.subr.mxu0 0.0
      %501 = vmatpush2.msra.mxu0 0.0
      %502 = vmatprep.subr.mxu0 0.0
      %503 = vmatpush2.msra.mxu0 0.0
      %504 = vmatprep.subr.mxu0 0.0
      %505 = vmatpush2.msra.mxu0 0.0
      %506 = vmatprep.subr.mxu0 0.0
      %507 = vmatpush2.msra.mxu0 0.0
      %508 = vmatprep.subr.mxu0 0.0
      %509 = vmatpush2.msra.mxu0 0.0
      %510 = vmatprep.subr.mxu0 0.0
      %511 = vmatpush2.msra.mxu0 0.0
      %512 = vmatprep.subr.mxu0 0.0
      %513 = vmatpush2.msra.mxu0 0.0
      %514 = vmatprep.subr.mxu0 0.0
      %515 = vmatpush2.msra.mxu0 0.0
      %516 = vmatprep.subr.mxu0 0.0
      %517 = vmatpush2.msra.mxu0 0.0
      %518 = vmatprep.subr.mxu0 0.0
      %519 = vmatpush2.msra.mxu0 0.0
      %520 = vmatprep.subr.mxu0 0.0
      %521 = vmatpush2.msra.mxu0 0.0
      %522 = vmatprep.subr.mxu0 0.0
      %523 = vmatpush2.msra.mxu0 0.0
      %524 = vmatprep.mubr.f32.mxu0 0.0
      %525 = vmatmul.mubr.f32.gmra.mxu0 %v333
      %v526 = vpop.f32.mrf.mxu0
      %v527 = vadd.f32 %v458, %v526
      %v528 = vpop.f32.mrf.mxu0
      %529 = vmatprep.mubr.f32.mxu0 0.0
      %530 = vmatmul.mubr.f32.gmra.mxu0 %v337
      %v531 = vpop.f32.mrf.mxu0
      %v532 = vadd.f32 %v458, %v531
      %v533 = vpop.f32.mrf.mxu0
      %534 = vmatprep.mubr.f32.mxu0 0.0
      %535 = vmatmul.mubr.f32.gmra.mxu0 %v341
      %v536 = vpop.f32.mrf.mxu0
      %v537 = vadd.f32 %v458, %v536
      %v538 = vpop.f32.mrf.mxu0
      %539 = vmatprep.mubr.f32.mxu0 0.0
      %540 = vmatmul.mubr.f32.gmra.mxu0 %v345
      %v541 = vpop.f32.mrf.mxu0
      %v542 = vadd.f32 %v458, %v541
      %v543 = vpop.f32.mrf.mxu0
      %544 = vmatprep.mubr.f32.mxu0 0.0
      %545 = vmatmul.mubr.f32.gmra.mxu0 %v349
      %v546 = vpop.f32.mrf.mxu0
      %v547 = vadd.f32 %v458, %v546
      %v548 = vpop.f32.mrf.mxu0
      %549 = vmatprep.mubr.f32.mxu0 0.0
      %550 = vmatmul.mubr.f32.gmra.mxu0 %v353
      %v551 = vpop.f32.mrf.mxu0
      %v552 = vadd.f32 %v458, %v551
      %v553 = vpop.f32.mrf.mxu0
      %554 = vmatprep.mubr.f32.mxu0 0.0
      %555 = vmatmul.mubr.f32.gmra.mxu0 %v357
      %v556 = vpop.f32.mrf.mxu0
      %v557 = vadd.f32 %v458, %v556
      %v558 = vpop.f32.mrf.mxu0
      %559 = vmatprep.mubr.f32.mxu0 0.0
      %560 = vmatmul.mubr.f32.gmra.mxu0 %v361
      %v561 = vpop.f32.mrf.mxu0
      %v562 = vadd.f32 %v458, %v561
      %v563 = vpop.f32.mrf.mxu0
      %564 = vdwg.mxu0
      %v565 = vmax.f32 %v527, 0.0
      %v566 = vmax.f32 %v532, 0.0
      %v567 = vmax.f32 %v537, 0.0
      %v568 = vmax.f32 %v542, 0.0
      %v569 = vmax.f32 %v547, 0.0
      %v570 = vmax.f32 %v552, 0.0
      %v571 = vmax.f32 %v557, 0.0
      %v572 = vmax.f32 %v562, 0.0
      %573 = vst [vmem:[#allocation2] sm:$0xff] %v565
      %574 = vst [vmem:[#allocation2 + $0x10] sm:$0xff] %v566
      %575 = vst [vmem:[#allocation2 + $0x20] sm:$0xff] %v567
      %576 = vst [vmem:[#allocation2 + $0x30] sm:$0xff] %v568
      %577 = vst [vmem:[#allocation2 + $0x40] sm:$0xff] %v569
      %578 = vst [vmem:[#allocation2 + $0x50] sm:$0xff] %v570
      %579 = vst [vmem:[#allocation2 + $0x60] sm:$0xff] %v571
      %580 = vst [vmem:[#allocation2 + $0x70] sm:$0xff] %v572
      %v581 = vld [vmem:[%s1] sm:$0xff]
      %v582 = vld [vmem:[%s1 + $0x8] sm:$0xff]
      %v583 = vld [vmem:[%s1 + $0x10] sm:$0xff]
      %v584 = vld [vmem:[%s1 + $0x18] sm:$0xff]
      %v585 = vld [vmem:[%s1 + $0x20] sm:$0xff]
      %v586 = vld [vmem:[%s1 + $0x28] sm:$0xff]
      %v587 = vld [vmem:[%s1 + $0x30] sm:$0xff]
      %v588 = vld [vmem:[%s1 + $0x38] sm:$0xff]
      %v589 = vld [vmem:[%s1 + $0x40] sm:$0xff]
      %v590 = vld [vmem:[%s1 + $0x48] sm:$0xff]
      %v591 = vld [vmem:[%s1 + $0x50] sm:$0xff]
      %v592 = vld [vmem:[%s1 + $0x58] sm:$0xff]
      %v593 = vld [vmem:[%s1 + $0x60] sm:$0xff]
      %v594 = vld [vmem:[%s1 + $0x68] sm:$0xff]
      %v595 = vld [vmem:[%s1 + $0x70] sm:$0xff]
      %v596 = vld [vmem:[%s1 + $0x78] sm:$0xff]
      %v597 = vld [vmem:[%s2] sm:$0x1]
      %v599 = vlaneseq
      %v600 = vshrl.u32 %v599, 7
      %v601 = vsub.s32 0, %v600
      %v602 = vrot.slane %v597, %v601
      %604 = vmatprep.subr.mxu0 0.0
      %605 = vmatpush1.msra.mxu0 %v596
      %606 = vmatprep.subr.mxu0 0.0
      %607 = vmatpush1.msra.mxu0 %v595
      %608 = vmatprep.subr.mxu0 0.0
      %609 = vmatpush1.msra.mxu0 %v594
      %610 = vmatprep.subr.mxu0 0.0
      %611 = vmatpush1.msra.mxu0 %v593
      %612 = vmatprep.subr.mxu0 0.0
      %613 = vmatpush1.msra.mxu0 %v592
      %614 = vmatprep.subr.mxu0 0.0
      %615 = vmatpush1.msra.mxu0 %v591
      %616 = vmatprep.subr.mxu0 0.0
      %617 = vmatpush1.msra.mxu0 %v590
      %618 = vmatprep.subr.mxu0 0.0
      %619 = vmatpush1.msra.mxu0 %v589
      %620 = vmatprep.subr.mxu0 0.0
      %621 = vmatpush1.msra.mxu0 %v588
      %622 = vmatprep.subr.mxu0 0.0
      %623 = vmatpush1.msra.mxu0 %v587
      %624 = vmatprep.subr.mxu0 0.0
      %625 = vmatpush1.msra.mxu0 %v586
      %626 = vmatprep.subr.mxu0 0.0
      %627 = vmatpush1.msra.mxu0 %v585
      %628 = vmatprep.subr.mxu0 0.0
      %629 = vmatpush1.msra.mxu0 %v584
      %630 = vmatprep.subr.mxu0 0.0
      %631 = vmatpush1.msra.mxu0 %v583
      %632 = vmatprep.subr.mxu0 0.0
      %633 = vmatpush1.msra.mxu0 %v582
      %634 = vmatprep.subr.mxu0 0.0
      %635 = vmatpush1.msra.mxu0 %v581
      %636 = vmatprep.subr.mxu0 0.0
      %637 = vmatpush2.msra.mxu0 0.0
      %638 = vmatprep.subr.mxu0 0.0
      %639 = vmatpush2.msra.mxu0 0.0
      %640 = vmatprep.subr.mxu0 0.0
      %641 = vmatpush2.msra.mxu0 0.0
      %642 = vmatprep.subr.mxu0 0.0
      %643 = vmatpush2.msra.mxu0 0.0
      %644 = vmatprep.subr.mxu0 0.0
      %645 = vmatpush2.msra.mxu0 0.0
      %646 = vmatprep.subr.mxu0 0.0
      %647 = vmatpush2.msra.mxu0 0.0
      %648 = vmatprep.subr.mxu0 0.0
      %649 = vmatpush2.msra.mxu0 0.0
      %650 = vmatprep.subr.mxu0 0.0
      %651 = vmatpush2.msra.mxu0 0.0
      %652 = vmatprep.subr.mxu0 0.0
      %653 = vmatpush2.msra.mxu0 0.0
      %654 = vmatprep.subr.mxu0 0.0
      %655 = vmatpush2.msra.mxu0 0.0
      %656 = vmatprep.subr.mxu0 0.0
      %657 = vmatpush2.msra.mxu0 0.0
      %658 = vmatprep.subr.mxu0 0.0
      %659 = vmatpush2.msra.mxu0 0.0
      %660 = vmatprep.subr.mxu0 0.0
      %661 = vmatpush2.msra.mxu0 0.0
      %662 = vmatprep.subr.mxu0 0.0
      %663 = vmatpush2.msra.mxu0 0.0
      %664 = vmatprep.subr.mxu0 0.0
      %665 = vmatpush2.msra.mxu0 0.0
      %666 = vmatprep.subr.mxu0 0.0
      %667 = vmatpush2.msra.mxu0 0.0
      %668 = vmatprep.mubr.f32.mxu0 0.0
      %669 = vmatmul.mubr.f32.gmra.mxu0 %v334
      %v670 = vpop.f32.mrf.mxu0
      %v671 = vadd.f32 %v602, %v670
      %v672 = vpop.f32.mrf.mxu0
      %673 = vmatprep.mubr.f32.mxu0 0.0
      %674 = vmatmul.mubr.f32.gmra.mxu0 %v338
      %v675 = vpop.f32.mrf.mxu0
      %v676 = vadd.f32 %v602, %v675
      %v677 = vpop.f32.mrf.mxu0
      %678 = vmatprep.mubr.f32.mxu0 0.0
      %679 = vmatmul.mubr.f32.gmra.mxu0 %v342
      %v680 = vpop.f32.mrf.mxu0
      %v681 = vadd.f32 %v602, %v680
      %v682 = vpop.f32.mrf.mxu0
      %683 = vmatprep.mubr.f32.mxu0 0.0
      %684 = vmatmul.mubr.f32.gmra.mxu0 %v346
      %v685 = vpop.f32.mrf.mxu0
      %v686 = vadd.f32 %v602, %v685
      %v687 = vpop.f32.mrf.mxu0
      %688 = vmatprep.mubr.f32.mxu0 0.0
      %689 = vmatmul.mubr.f32.gmra.mxu0 %v350
      %v690 = vpop.f32.mrf.mxu0
      %v691 = vadd.f32 %v602, %v690
      %v692 = vpop.f32.mrf.mxu0
      %693 = vmatprep.mubr.f32.mxu0 0.0
      %694 = vmatmul.mubr.f32.gmra.mxu0 %v354
      %v695 = vpop.f32.mrf.mxu0
      %v696 = vadd.f32 %v602, %v695
      %v697 = vpop.f32.mrf.mxu0
      %698 = vmatprep.mubr.f32.mxu0 0.0
      %699 = vmatmul.mubr.f32.gmra.mxu0 %v358
      %v700 = vpop.f32.mrf.mxu0
      %v701 = vadd.f32 %v602, %v700
      %v702 = vpop.f32.mrf.mxu0
      %703 = vmatprep.mubr.f32.mxu0 0.0
      %704 = vmatmul.mubr.f32.gmra.mxu0 %v362
      %v705 = vpop.f32.mrf.mxu0
      %v706 = vadd.f32 %v602, %v705
      %v707 = vpop.f32.mrf.mxu0
      %708 = vdwg.mxu0
      %v709 = vmax.f32 %v671, 0.0
      %v710 = vmax.f32 %v676, 0.0
      %v711 = vmax.f32 %v681, 0.0
      %v712 = vmax.f32 %v686, 0.0
      %v713 = vmax.f32 %v691, 0.0
      %v714 = vmax.f32 %v696, 0.0
      %v715 = vmax.f32 %v701, 0.0
      %v716 = vmax.f32 %v706, 0.0
      %717 = vst [vmem:[#allocation3 + $0x1] sm:$0xff] %v709
      %718 = vst [vmem:[#allocation3 + $0x11] sm:$0xff] %v710
      %719 = vst [vmem:[#allocation3 + $0x21] sm:$0xff] %v711
      %720 = vst [vmem:[#allocation3 + $0x31] sm:$0xff] %v712
      %721 = vst [vmem:[#allocation3 + $0x41] sm:$0xff] %v713
      %722 = vst [vmem:[#allocation3 + $0x51] sm:$0xff] %v714
      %723 = vst [vmem:[#allocation3 + $0x61] sm:$0xff] %v715
      %724 = vst [vmem:[#allocation3 + $0x71] sm:$0xff] %v716
      %v725 = vld [vmem:[%s1] sm:$0xff]
      %v726 = vld [vmem:[%s1 + $0x8] sm:$0xff]
      %v727 = vld [vmem:[%s1 + $0x10] sm:$0xff]
      %v728 = vld [vmem:[%s1 + $0x18] sm:$0xff]
      %v729 = vld [vmem:[%s1 + $0x20] sm:$0xff]
      %v730 = vld [vmem:[%s1 + $0x28] sm:$0xff]
      %v731 = vld [vmem:[%s1 + $0x30] sm:$0xff]
      %v732 = vld [vmem:[%s1 + $0x38] sm:$0xff]
      %v733 = vld [vmem:[%s1 + $0x40] sm:$0xff]
      %v734 = vld [vmem:[%s1 + $0x48] sm:$0xff]
      %v735 = vld [vmem:[%s1 + $0x50] sm:$0xff]
      %v736 = vld [vmem:[%s1 + $0x58] sm:$0xff]
      %v737 = vld [vmem:[%s1 + $0x60] sm:$0xff]
      %v738 = vld [vmem:[%s1 + $0x68] sm:$0xff]
      %v739 = vld [vmem:[%s1 + $0x70] sm:$0xff]
      %v740 = vld [vmem:[%s1 + $0x78] sm:$0xff]
      %v741 = vld [vmem:[%s2] sm:$0x1]
      %v743 = vlaneseq
      %v744 = vshrl.u32 %v743, 7
      %v745 = vsub.s32 0, %v744
      %v746 = vrot.slane %v741, %v745
      %748 = vmatprep.subr.mxu0 0.0
      %749 = vmatpush1.msra.mxu0 %v740
      %750 = vmatprep.subr.mxu0 0.0
      %751 = vmatpush1.msra.mxu0 %v739
      %752 = vmatprep.subr.mxu0 0.0
      %753 = vmatpush1.msra.mxu0 %v738
      %754 = vmatprep.subr.mxu0 0.0
      %755 = vmatpush1.msra.mxu0 %v737
      %756 = vmatprep.subr.mxu0 0.0
      %757 = vmatpush1.msra.mxu0 %v736
      %758 = vmatprep.subr.mxu0 0.0
      %759 = vmatpush1.msra.mxu0 %v735
      %760 = vmatprep.subr.mxu0 0.0
      %761 = vmatpush1.msra.mxu0 %v734
      %762 = vmatprep.subr.mxu0 0.0
      %763 = vmatpush1.msra.mxu0 %v733
      %764 = vmatprep.subr.mxu0 0.0
      %765 = vmatpush1.msra.mxu0 %v732
      %766 = vmatprep.subr.mxu0 0.0
      %767 = vmatpush1.msra.mxu0 %v731
      %768 = vmatprep.subr.mxu0 0.0
      %769 = vmatpush1.msra.mxu0 %v730
      %770 = vmatprep.subr.mxu0 0.0
      %771 = vmatpush1.msra.mxu0 %v729
      %772 = vmatprep.subr.mxu0 0.0
      %773 = vmatpush1.msra.mxu0 %v728
      %774 = vmatprep.subr.mxu0 0.0
      %775 = vmatpush1.msra.mxu0 %v727
      %776 = vmatprep.subr.mxu0 0.0
      %777 = vmatpush1.msra.mxu0 %v726
      %778 = vmatprep.subr.mxu0 0.0
      %779 = vmatpush1.msra.mxu0 %v725
      %780 = vmatprep.subr.mxu0 0.0
      %781 = vmatpush2.msra.mxu0 0.0
      %782 = vmatprep.subr.mxu0 0.0
      %783 = vmatpush2.msra.mxu0 0.0
      %784 = vmatprep.subr.mxu0 0.0
      %785 = vmatpush2.msra.mxu0 0.0
      %786 = vmatprep.subr.mxu0 0.0
      %787 = vmatpush2.msra.mxu0 0.0
      %788 = vmatprep.subr.mxu0 0.0
      %789 = vmatpush2.msra.mxu0 0.0
      %790 = vmatprep.subr.mxu0 0.0
      %791 = vmatpush2.msra.mxu0 0.0
      %792 = vmatprep.subr.mxu0 0.0
      %793 = vmatpush2.msra.mxu0 0.0
      %794 = vmatprep.subr.mxu0 0.0
      %795 = vmatpush2.msra.mxu0 0.0
      %796 = vmatprep.subr.mxu0 0.0
      %797 = vmatpush2.msra.mxu0 0.0
      %798 = vmatprep.subr.mxu0 0.0
      %799 = vmatpush2.msra.mxu0 0.0
      %800 = vmatprep.subr.mxu0 0.0
      %801 = vmatpush2.msra.mxu0 0.0
      %802 = vmatprep.subr.mxu0 0.0
      %803 = vmatpush2.msra.mxu0 0.0
      %804 = vmatprep.subr.mxu0 0.0
      %805 = vmatpush2.msra.mxu0 0.0
      %806 = vmatprep.subr.mxu0 0.0
      %807 = vmatpush2.msra.mxu0 0.0
      %808 = vmatprep.subr.mxu0 0.0
      %809 = vmatpush2.msra.mxu0 0.0
      %810 = vmatprep.subr.mxu0 0.0
      %811 = vmatpush2.msra.mxu0 0.0
      %812 = vmatprep.mubr.f32.mxu0 0.0
      %813 = vmatmul.mubr.f32.gmra.mxu0 %v335
      %v814 = vpop.f32.mrf.mxu0
      %v815 = vadd.f32 %v746, %v814
      %v816 = vpop.f32.mrf.mxu0
      %817 = vmatprep.mubr.f32.mxu0 0.0
      %818 = vmatmul.mubr.f32.gmra.mxu0 %v339
      %v819 = vpop.f32.mrf.mxu0
      %v820 = vadd.f32 %v746, %v819
      %v821 = vpop.f32.mrf.mxu0
      %822 = vmatprep.mubr.f32.mxu0 0.0
      %823 = vmatmul.mubr.f32.gmra.mxu0 %v343
      %v824 = vpop.f32.mrf.mxu0
      %v825 = vadd.f32 %v746, %v824
      %v826 = vpop.f32.mrf.mxu0
      %827 = vmatprep.mubr.f32.mxu0 0.0
      %828 = vmatmul.mubr.f32.gmra.mxu0 %v347
      %v829 = vpop.f32.mrf.mxu0
      %v830 = vadd.f32 %v746, %v829
      %v831 = vpop.f32.mrf.mxu0
      %832 = vmatprep.mubr.f32.mxu0 0.0
      %833 = vmatmul.mubr.f32.gmra.mxu0 %v351
      %v834 = vpop.f32.mrf.mxu0
      %v835 = vadd.f32 %v746, %v834
      %v836 = vpop.f32.mrf.mxu0
      %837 = vmatprep.mubr.f32.mxu0 0.0
      %838 = vmatmul.mubr.f32.gmra.mxu0 %v355
      %v839 = vpop.f32.mrf.mxu0
      %v840 = vadd.f32 %v746, %v839
      %v841 = vpop.f32.mrf.mxu0
      %842 = vmatprep.mubr.f32.mxu0 0.0
      %843 = vmatmul.mubr.f32.gmra.mxu0 %v359
      %v844 = vpop.f32.mrf.mxu0
      %v845 = vadd.f32 %v746, %v844
      %v846 = vpop.f32.mrf.mxu0
      %847 = vmatprep.mubr.f32.mxu0 0.0
      %848 = vmatmul.mubr.f32.gmra.mxu0 %v363
      %v849 = vpop.f32.mrf.mxu0
      %v850 = vadd.f32 %v746, %v849
      %v851 = vpop.f32.mrf.mxu0
      %852 = vdwg.mxu0
      %v853 = vmax.f32 %v815, 0.0
      %v854 = vmax.f32 %v820, 0.0
      %v855 = vmax.f32 %v825, 0.0
      %v856 = vmax.f32 %v830, 0.0
      %v857 = vmax.f32 %v835, 0.0
      %v858 = vmax.f32 %v840, 0.0
      %v859 = vmax.f32 %v845, 0.0
      %v860 = vmax.f32 %v850, 0.0
      %s861 = scalar_lea.vmem [#allocation4], 16
      %862 = vst [vmem:[%s861] sm:$0xff] %v853
      %863 = vst [vmem:[%s861 + $0x10] sm:$0xff] %v854
      %864 = vst [vmem:[%s861 + $0x20] sm:$0xff] %v855
      %865 = vst [vmem:[%s861 + $0x30] sm:$0xff] %v856
      %866 = vst [vmem:[%s861 + $0x40] sm:$0xff] %v857
      %867 = vst [vmem:[%s861 + $0x50] sm:$0xff] %v858
      %868 = vst [vmem:[%s861 + $0x60] sm:$0xff] %v859
      %869 = vst [vmem:[%s861 + $0x70] sm:$0xff] %v860
      %v870 = vld [vmem:[%s1] sm:$0xff]
      %v871 = vld [vmem:[%s1 + $0x8] sm:$0xff]
      %v872 = vld [vmem:[%s1 + $0x10] sm:$0xff]
      %v873 = vld [vmem:[%s1 + $0x18] sm:$0xff]
      %v874 = vld [vmem:[%s1 + $0x20] sm:$0xff]
      %v875 = vld [vmem:[%s1 + $0x28] sm:$0xff]
      %v876 = vld [vmem:[%s1 + $0x30] sm:$0xff]
      %v877 = vld [vmem:[%s1 + $0x38] sm:$0xff]
      %v878 = vld [vmem:[%s1 + $0x40] sm:$0xff]
      %v879 = vld [vmem:[%s1 + $0x48] sm:$0xff]
      %v880 = vld [vmem:[%s1 + $0x50] sm:$0xff]
      %v881 = vld [vmem:[%s1 + $0x58] sm:$0xff]
      %v882 = vld [vmem:[%s1 + $0x60] sm:$0xff]
      %v883 = vld [vmem:[%s1 + $0x68] sm:$0xff]
      %v884 = vld [vmem:[%s1 + $0x70] sm:$0xff]
      %v885 = vld [vmem:[%s1 + $0x78] sm:$0xff]
      %v886 = vld [vmem:[%s2] sm:$0x1]
      %v888 = vlaneseq
      %v889 = vshrl.u32 %v888, 7
      %v890 = vsub.s32 0, %v889
      %v891 = vrot.slane %v886, %v890
      %893 = vmatprep.subr.mxu0 0.0
      %894 = vmatpush1.msra.mxu0 %v885
      %895 = vmatprep.subr.mxu0 0.0
      %896 = vmatpush1.msra.mxu0 %v884
      %897 = vmatprep.subr.mxu0 0.0
      %898 = vmatpush1.msra.mxu0 %v883
      %899 = vmatprep.subr.mxu0 0.0
      %900 = vmatpush1.msra.mxu0 %v882
      %901 = vmatprep.subr.mxu0 0.0
      %902 = vmatpush1.msra.mxu0 %v881
      %903 = vmatprep.subr.mxu0 0.0
      %904 = vmatpush1.msra.mxu0 %v880
      %905 = vmatprep.subr.mxu0 0.0
      %906 = vmatpush1.msra.mxu0 %v879
      %907 = vmatprep.subr.mxu0 0.0
      %908 = vmatpush1.msra.mxu0 %v878
      %909 = vmatprep.subr.mxu0 0.0
      %910 = vmatpush1.msra.mxu0 %v877
      %911 = vmatprep.subr.mxu0 0.0
      %912 = vmatpush1.msra.mxu0 %v876
      %913 = vmatprep.subr.mxu0 0.0
      %914 = vmatpush1.msra.mxu0 %v875
      %915 = vmatprep.subr.mxu0 0.0
      %916 = vmatpush1.msra.mxu0 %v874
      %917 = vmatprep.subr.mxu0 0.0
      %918 = vmatpush1.msra.mxu0 %v873
      %919 = vmatprep.subr.mxu0 0.0
      %920 = vmatpush1.msra.mxu0 %v872
      %921 = vmatprep.subr.mxu0 0.0
      %922 = vmatpush1.msra.mxu0 %v871
      %923 = vmatprep.subr.mxu0 0.0
      %924 = vmatpush1.msra.mxu0 %v870
      %925 = vmatprep.subr.mxu0 0.0
      %926 = vmatpush2.msra.mxu0 0.0
      %927 = vmatprep.subr.mxu0 0.0
      %928 = vmatpush2.msra.mxu0 0.0
      %929 = vmatprep.subr.mxu0 0.0
      %930 = vmatpush2.msra.mxu0 0.0
      %931 = vmatprep.subr.mxu0 0.0
      %932 = vmatpush2.msra.mxu0 0.0
      %933 = vmatprep.subr.mxu0 0.0
      %934 = vmatpush2.msra.mxu0 0.0
      %935 = vmatprep.subr.mxu0 0.0
      %936 = vmatpush2.msra.mxu0 0.0
      %937 = vmatprep.subr.mxu0 0.0
      %938 = vmatpush2.msra.mxu0 0.0
      %939 = vmatprep.subr.mxu0 0.0
      %940 = vmatpush2.msra.mxu0 0.0
      %941 = vmatprep.subr.mxu0 0.0
      %942 = vmatpush2.msra.mxu0 0.0
      %943 = vmatprep.subr.mxu0 0.0
      %944 = vmatpush2.msra.mxu0 0.0
      %945 = vmatprep.subr.mxu0 0.0
      %946 = vmatpush2.msra.mxu0 0.0
      %947 = vmatprep.subr.mxu0 0.0
      %948 = vmatpush2.msra.mxu0 0.0
      %949 = vmatprep.subr.mxu0 0.0
      %950 = vmatpush2.msra.mxu0 0.0
      %951 = vmatprep.subr.mxu0 0.0
      %952 = vmatpush2.msra.mxu0 0.0
      %953 = vmatprep.subr.mxu0 0.0
      %954 = vmatpush2.msra.mxu0 0.0
      %955 = vmatprep.subr.mxu0 0.0
      %956 = vmatpush2.msra.mxu0 0.0
      %957 = vmatprep.mubr.f32.mxu0 0.0
      %958 = vmatmul.mubr.f32.gmra.mxu0 %v336
      %v959 = vpop.f32.mrf.mxu0
      %v960 = vadd.f32 %v891, %v959
      %v961 = vpop.f32.mrf.mxu0
      %962 = vmatprep.mubr.f32.mxu0 0.0
      %963 = vmatmul.mubr.f32.gmra.mxu0 %v340
      %v964 = vpop.f32.mrf.mxu0
      %v965 = vadd.f32 %v891, %v964
      %v966 = vpop.f32.mrf.mxu0
      %967 = vmatprep.mubr.f32.mxu0 0.0
      %968 = vmatmul.mubr.f32.gmra.mxu0 %v344
      %v969 = vpop.f32.mrf.mxu0
      %v970 = vadd.f32 %v891, %v969
      %v971 = vpop.f32.mrf.mxu0
      %972 = vmatprep.mubr.f32.mxu0 0.0
      %973 = vmatmul.mubr.f32.gmra.mxu0 %v348
      %v974 = vpop.f32.mrf.mxu0
      %v975 = vadd.f32 %v891, %v974
      %v976 = vpop.f32.mrf.mxu0
      %977 = vmatprep.mubr.f32.mxu0 0.0
      %978 = vmatmul.mubr.f32.gmra.mxu0 %v352
      %v979 = vpop.f32.mrf.mxu0
      %v980 = vadd.f32 %v891, %v979
      %v981 = vpop.f32.mrf.mxu0
      %982 = vmatprep.mubr.f32.mxu0 0.0
      %983 = vmatmul.mubr.f32.gmra.mxu0 %v356
      %v984 = vpop.f32.mrf.mxu0
      %v985 = vadd.f32 %v891, %v984
      %v986 = vpop.f32.mrf.mxu0
      %987 = vmatprep.mubr.f32.mxu0 0.0
      %988 = vmatmul.mubr.f32.gmra.mxu0 %v360
      %v989 = vpop.f32.mrf.mxu0
      %v990 = vadd.f32 %v891, %v989
      %v991 = vpop.f32.mrf.mxu0
      %992 = vmatprep.mubr.f32.mxu0 0.0
      %993 = vmatmul.mubr.f32.gmra.mxu0 %v364
      %v994 = vpop.f32.mrf.mxu0
      %v995 = vadd.f32 %v891, %v994
      %v996 = vpop.f32.mrf.mxu0
      %997 = vdwg.mxu0
      %v998 = vmax.f32 %v960, 0.0
      %v999 = vmax.f32 %v965, 0.0
      %v1000 = vmax.f32 %v970, 0.0
      %v1001 = vmax.f32 %v975, 0.0
      %v1002 = vmax.f32 %v980, 0.0
      %v1003 = vmax.f32 %v985, 0.0
      %v1004 = vmax.f32 %v990, 0.0
      %v1005 = vmax.f32 %v995, 0.0
      %s1006 = scalar_lea.vmem [#allocation5], 16
      %1007 = vst [vmem:[%s1006 + $0x1] sm:$0xff] %v998
      %1008 = vst [vmem:[%s1006 + $0x11] sm:$0xff] %v999
      %1009 = vst [vmem:[%s1006 + $0x21] sm:$0xff] %v1000
      %1010 = vst [vmem:[%s1006 + $0x31] sm:$0xff] %v1001
      %1011 = vst [vmem:[%s1006 + $0x41] sm:$0xff] %v1002
      %1012 = vst [vmem:[%s1006 + $0x51] sm:$0xff] %v1003
      %1013 = vst [vmem:[%s1006 + $0x61] sm:$0xff] %v1004
      %1014 = vst [vmem:[%s1006 + $0x71] sm:$0xff] %v1005
      %v1015 = vld [vmem:[#allocation5] sm:$0xff]
      %v1016 = vld [vmem:[#allocation5 + $0x10] sm:$0xff]
      %v1017 = vld [vmem:[#allocation5 + $0x20] sm:$0xff]
      %v1018 = vld [vmem:[#allocation5 + $0x30] sm:$0xff]
      %v1019 = vld [vmem:[#allocation5 + $0x40] sm:$0xff]
      %v1020 = vld [vmem:[#allocation5 + $0x50] sm:$0xff]
      %v1021 = vld [vmem:[#allocation5 + $0x60] sm:$0xff]
      %v1022 = vld [vmem:[#allocation5 + $0x70] sm:$0xff]
      %v1023 = vld [vmem:[%s3] sm:$0xff]
      %v1024 = vld [vmem:[%s3 + $0x8] sm:$0xff]
      %v1025 = vld [vmem:[%s3 + $0x10] sm:$0xff]
      %v1026 = vld [vmem:[%s3 + $0x18] sm:$0xff]
      %v1027 = vld [vmem:[%s3 + $0x20] sm:$0xff]
      %v1028 = vld [vmem:[%s3 + $0x28] sm:$0xff]
      %v1029 = vld [vmem:[%s3 + $0x30] sm:$0xff]
      %v1030 = vld [vmem:[%s3 + $0x38] sm:$0xff]
      %v1031 = vld [vmem:[%s3 + $0x40] sm:$0xff]
      %v1032 = vld [vmem:[%s3 + $0x48] sm:$0xff]
      %v1033 = vld [vmem:[%s3 + $0x50] sm:$0xff]
      %v1034 = vld [vmem:[%s3 + $0x58] sm:$0xff]
      %v1035 = vld [vmem:[%s3 + $0x60] sm:$0xff]
      %v1036 = vld [vmem:[%s3 + $0x68] sm:$0xff]
      %v1037 = vld [vmem:[%s3 + $0x70] sm:$0xff]
      %v1038 = vld [vmem:[%s3 + $0x78] sm:$0xff]
      %v1039 = vld [vmem:[#allocation4] sm:$0xff]
      %v1040 = vld [vmem:[#allocation4 + $0x10] sm:$0xff]
      %v1041 = vld [vmem:[#allocation4 + $0x20] sm:$0xff]
      %v1042 = vld [vmem:[#allocation4 + $0x30] sm:$0xff]
      %v1043 = vld [vmem:[#allocation4 + $0x40] sm:$0xff]
      %v1044 = vld [vmem:[#allocation4 + $0x50] sm:$0xff]
      %v1045 = vld [vmem:[#allocation4 + $0x60] sm:$0xff]
      %v1046 = vld [vmem:[#allocation4 + $0x70] sm:$0xff]
      %s1047 = scalar_lea.vmem %s3, 128
      %v1048 = vld [vmem:[%s1047] sm:$0xff]
      %v1049 = vld [vmem:[%s1047 + $0x8] sm:$0xff]
      %v1050 = vld [vmem:[%s1047 + $0x10] sm:$0xff]
      %v1051 = vld [vmem:[%s1047 + $0x18] sm:$0xff]
      %v1052 = vld [vmem:[%s1047 + $0x20] sm:$0xff]
      %v1053 = vld [vmem:[%s1047 + $0x28] sm:$0xff]
      %v1054 = vld [vmem:[%s1047 + $0x30] sm:$0xff]
      %v1055 = vld [vmem:[%s1047 + $0x38] sm:$0xff]
      %v1056 = vld [vmem:[%s1047 + $0x40] sm:$0xff]
      %v1057 = vld [vmem:[%s1047 + $0x48] sm:$0xff]
      %v1058 = vld [vmem:[%s1047 + $0x50] sm:$0xff]
      %v1059 = vld [vmem:[%s1047 + $0x58] sm:$0xff]
      %v1060 = vld [vmem:[%s1047 + $0x60] sm:$0xff]
      %v1061 = vld [vmem:[%s1047 + $0x68] sm:$0xff]
      %v1062 = vld [vmem:[%s1047 + $0x70] sm:$0xff]
      %v1063 = vld [vmem:[%s1047 + $0x78] sm:$0xff]
      %1064 = vmatprep.subr.mxu0 0.0
      %1065 = vmatpush1.msra.mxu0 %v1063
      %1066 = vmatprep.subr.mxu0 0.0
      %1067 = vmatpush1.msra.mxu0 %v1062
      %1068 = vmatprep.subr.mxu0 0.0
      %1069 = vmatpush1.msra.mxu0 %v1061
      %1070 = vmatprep.subr.mxu0 0.0
      %1071 = vmatpush1.msra.mxu0 %v1060
      %1072 = vmatprep.subr.mxu0 0.0
      %1073 = vmatpush1.msra.mxu0 %v1059
      %1074 = vmatprep.subr.mxu0 0.0
      %1075 = vmatpush1.msra.mxu0 %v1058
      %1076 = vmatprep.subr.mxu0 0.0
      %1077 = vmatpush1.msra.mxu0 %v1057
      %1078 = vmatprep.subr.mxu0 0.0
      %1079 = vmatpush1.msra.mxu0 %v1056
      %1080 = vmatprep.subr.mxu0 0.0
      %1081 = vmatpush1.msra.mxu0 %v1055
      %1082 = vmatprep.subr.mxu0 0.0
      %1083 = vmatpush1.msra.mxu0 %v1054
      %1084 = vmatprep.subr.mxu0 0.0
      %1085 = vmatpush1.msra.mxu0 %v1053
      %1086 = vmatprep.subr.mxu0 0.0
      %1087 = vmatpush1.msra.mxu0 %v1052
      %1088 = vmatprep.subr.mxu0 0.0
      %1089 = vmatpush1.msra.mxu0 %v1051
      %1090 = vmatprep.subr.mxu0 0.0
      %1091 = vmatpush1.msra.mxu0 %v1050
      %1092 = vmatprep.subr.mxu0 0.0
      %1093 = vmatpush1.msra.mxu0 %v1049
      %1094 = vmatprep.subr.mxu0 0.0
      %1095 = vmatpush1.msra.mxu0 %v1048
      %1096 = vmatprep.subr.mxu0 0.0
      %1097 = vmatpush2.msra.mxu0 0.0
      %1098 = vmatprep.subr.mxu0 0.0
      %1099 = vmatpush2.msra.mxu0 0.0
      %1100 = vmatprep.subr.mxu0 0.0
      %1101 = vmatpush2.msra.mxu0 0.0
      %1102 = vmatprep.subr.mxu0 0.0
      %1103 = vmatpush2.msra.mxu0 0.0
      %1104 = vmatprep.subr.mxu0 0.0
      %1105 = vmatpush2.msra.mxu0 0.0
      %1106 = vmatprep.subr.mxu0 0.0
      %1107 = vmatpush2.msra.mxu0 0.0
      %1108 = vmatprep.subr.mxu0 0.0
      %1109 = vmatpush2.msra.mxu0 0.0
      %1110 = vmatprep.subr.mxu0 0.0
      %1111 = vmatpush2.msra.mxu0 0.0
      %1112 = vmatprep.subr.mxu0 0.0
      %1113 = vmatpush2.msra.mxu0 0.0
      %1114 = vmatprep.subr.mxu0 0.0
      %1115 = vmatpush2.msra.mxu0 0.0
      %1116 = vmatprep.subr.mxu0 0.0
      %1117 = vmatpush2.msra.mxu0 0.0
      %1118 = vmatprep.subr.mxu0 0.0
      %1119 = vmatpush2.msra.mxu0 0.0
      %1120 = vmatprep.subr.mxu0 0.0
      %1121 = vmatpush2.msra.mxu0 0.0
      %1122 = vmatprep.subr.mxu0 0.0
      %1123 = vmatpush2.msra.mxu0 0.0
      %1124 = vmatprep.subr.mxu0 0.0
      %1125 = vmatpush2.msra.mxu0 0.0
      %1126 = vmatprep.subr.mxu0 0.0
      %1127 = vmatpush2.msra.mxu0 0.0
      %1128 = vmatprep.mubr.f32.mxu0 0.0
      %1129 = vmatmul.mubr.f32.gmra.mxu0 %v1039
      %v1130 = vpop.f32.mrf.mxu0
      %v1131 = vadd.f32 0.0, %v1130
      %v1132 = vpop.f32.mrf.mxu0
      %1133 = vmatprep.mubr.f32.mxu0 0.0
      %1134 = vmatmul.mubr.f32.gmra.mxu0 %v1040
      %v1135 = vpop.f32.mrf.mxu0
      %v1136 = vadd.f32 0.0, %v1135
      %v1137 = vpop.f32.mrf.mxu0
      %1138 = vmatprep.mubr.f32.mxu0 0.0
      %1139 = vmatmul.mubr.f32.gmra.mxu0 %v1041
      %v1140 = vpop.f32.mrf.mxu0
      %v1141 = vadd.f32 0.0, %v1140
      %v1142 = vpop.f32.mrf.mxu0
      %1143 = vmatprep.mubr.f32.mxu0 0.0
      %1144 = vmatmul.mubr.f32.gmra.mxu0 %v1042
      %v1145 = vpop.f32.mrf.mxu0
      %v1146 = vadd.f32 0.0, %v1145
      %v1147 = vpop.f32.mrf.mxu0
      %1148 = vmatprep.mubr.f32.mxu0 0.0
      %1149 = vmatmul.mubr.f32.gmra.mxu0 %v1043
      %v1150 = vpop.f32.mrf.mxu0
      %v1151 = vadd.f32 0.0, %v1150
      %v1152 = vpop.f32.mrf.mxu0
      %1153 = vmatprep.mubr.f32.mxu0 0.0
      %1154 = vmatmul.mubr.f32.gmra.mxu0 %v1044
      %v1155 = vpop.f32.mrf.mxu0
      %v1156 = vadd.f32 0.0, %v1155
      %v1157 = vpop.f32.mrf.mxu0
      %1158 = vmatprep.mubr.f32.mxu0 0.0
      %1159 = vmatmul.mubr.f32.gmra.mxu0 %v1045
      %v1160 = vpop.f32.mrf.mxu0
      %v1161 = vadd.f32 0.0, %v1160
      %v1162 = vpop.f32.mrf.mxu0
      %1163 = vmatprep.mubr.f32.mxu0 0.0
      %1164 = vmatmul.mubr.f32.gmra.mxu0 %v1046
      %v1165 = vpop.f32.mrf.mxu0
      %v1166 = vadd.f32 0.0, %v1165
      %v1167 = vpop.f32.mrf.mxu0
      %1168 = vdwg.mxu0
      %1169 = vmatprep.subr.mxu0 0.0
      %1170 = vmatpush1.msra.mxu0 %v1038
      %1171 = vmatprep.subr.mxu0 0.0
      %1172 = vmatpush1.msra.mxu0 %v1037
      %1173 = vmatprep.subr.mxu0 0.0
      %1174 = vmatpush1.msra.mxu0 %v1036
      %1175 = vmatprep.subr.mxu0 0.0
      %1176 = vmatpush1.msra.mxu0 %v1035
      %1177 = vmatprep.subr.mxu0 0.0
      %1178 = vmatpush1.msra.mxu0 %v1034
      %1179 = vmatprep.subr.mxu0 0.0
      %1180 = vmatpush1.msra.mxu0 %v1033
      %1181 = vmatprep.subr.mxu0 0.0
      %1182 = vmatpush1.msra.mxu0 %v1032
      %1183 = vmatprep.subr.mxu0 0.0
      %1184 = vmatpush1.msra.mxu0 %v1031
      %1185 = vmatprep.subr.mxu0 0.0
      %1186 = vmatpush1.msra.mxu0 %v1030
      %1187 = vmatprep.subr.mxu0 0.0
      %1188 = vmatpush1.msra.mxu0 %v1029
      %1189 = vmatprep.subr.mxu0 0.0
      %1190 = vmatpush1.msra.mxu0 %v1028
      %1191 = vmatprep.subr.mxu0 0.0
      %1192 = vmatpush1.msra.mxu0 %v1027
      %1193 = vmatprep.subr.mxu0 0.0
      %1194 = vmatpush1.msra.mxu0 %v1026
      %1195 = vmatprep.subr.mxu0 0.0
      %1196 = vmatpush1.msra.mxu0 %v1025
      %1197 = vmatprep.subr.mxu0 0.0
      %1198 = vmatpush1.msra.mxu0 %v1024
      %1199 = vmatprep.subr.mxu0 0.0
      %1200 = vmatpush1.msra.mxu0 %v1023
      %1201 = vmatprep.subr.mxu0 0.0
      %1202 = vmatpush2.msra.mxu0 0.0
      %1203 = vmatprep.subr.mxu0 0.0
      %1204 = vmatpush2.msra.mxu0 0.0
      %1205 = vmatprep.subr.mxu0 0.0
      %1206 = vmatpush2.msra.mxu0 0.0
      %1207 = vmatprep.subr.mxu0 0.0
      %1208 = vmatpush2.msra.mxu0 0.0
      %1209 = vmatprep.subr.mxu0 0.0
      %1210 = vmatpush2.msra.mxu0 0.0
      %1211 = vmatprep.subr.mxu0 0.0
      %1212 = vmatpush2.msra.mxu0 0.0
      %1213 = vmatprep.subr.mxu0 0.0
      %1214 = vmatpush2.msra.mxu0 0.0
      %1215 = vmatprep.subr.mxu0 0.0
      %1216 = vmatpush2.msra.mxu0 0.0
      %1217 = vmatprep.subr.mxu0 0.0
      %1218 = vmatpush2.msra.mxu0 0.0
      %1219 = vmatprep.subr.mxu0 0.0
      %1220 = vmatpush2.msra.mxu0 0.0
      %1221 = vmatprep.subr.mxu0 0.0
      %1222 = vmatpush2.msra.mxu0 0.0
      %1223 = vmatprep.subr.mxu0 0.0
      %1224 = vmatpush2.msra.mxu0 0.0
      %1225 = vmatprep.subr.mxu0 0.0
      %1226 = vmatpush2.msra.mxu0 0.0
      %1227 = vmatprep.subr.mxu0 0.0
      %1228 = vmatpush2.msra.mxu0 0.0
      %1229 = vmatprep.subr.mxu0 0.0
      %1230 = vmatpush2.msra.mxu0 0.0
      %1231 = vmatprep.subr.mxu0 0.0
      %1232 = vmatpush2.msra.mxu0 0.0
      %1233 = vmatprep.mubr.f32.mxu0 0.0
      %1234 = vmatmul.mubr.f32.gmra.mxu0 %v1015
      %v1235 = vpop.f32.mrf.mxu0
      %v1236 = vadd.f32 %v1131, %v1235
      %v1237 = vpop.f32.mrf.mxu0
      %1238 = vmatprep.mubr.f32.mxu0 0.0
      %1239 = vmatmul.mubr.f32.gmra.mxu0 %v1016
      %v1240 = vpop.f32.mrf.mxu0
      %v1241 = vadd.f32 %v1136, %v1240
      %v1242 = vpop.f32.mrf.mxu0
      %1243 = vmatprep.mubr.f32.mxu0 0.0
      %1244 = vmatmul.mubr.f32.gmra.mxu0 %v1017
      %v1245 = vpop.f32.mrf.mxu0
      %v1246 = vadd.f32 %v1141, %v1245
      %v1247 = vpop.f32.mrf.mxu0
      %1248 = vmatprep.mubr.f32.mxu0 0.0
      %1249 = vmatmul.mubr.f32.gmra.mxu0 %v1018
      %v1250 = vpop.f32.mrf.mxu0
      %v1251 = vadd.f32 %v1146, %v1250
      %v1252 = vpop.f32.mrf.mxu0
      %1253 = vmatprep.mubr.f32.mxu0 0.0
      %1254 = vmatmul.mubr.f32.gmra.mxu0 %v1019
      %v1255 = vpop.f32.mrf.mxu0
      %v1256 = vadd.f32 %v1151, %v1255
      %v1257 = vpop.f32.mrf.mxu0
      %1258 = vmatprep.mubr.f32.mxu0 0.0
      %1259 = vmatmul.mubr.f32.gmra.mxu0 %v1020
      %v1260 = vpop.f32.mrf.mxu0
      %v1261 = vadd.f32 %v1156, %v1260
      %v1262 = vpop.f32.mrf.mxu0
      %1263 = vmatprep.mubr.f32.mxu0 0.0
      %1264 = vmatmul.mubr.f32.gmra.mxu0 %v1021
      %v1265 = vpop.f32.mrf.mxu0
      %v1266 = vadd.f32 %v1161, %v1265
      %v1267 = vpop.f32.mrf.mxu0
      %1268 = vmatprep.mubr.f32.mxu0 0.0
      %1269 = vmatmul.mubr.f32.gmra.mxu0 %v1022
      %v1270 = vpop.f32.mrf.mxu0
      %v1271 = vadd.f32 %v1166, %v1270
      %v1272 = vpop.f32.mrf.mxu0
      %1273 = vdwg.mxu0
      %v1274 = vld [vmem:[#allocation5 + $0x1] sm:$0xff]
      %v1275 = vld [vmem:[#allocation5 + $0x11] sm:$0xff]
      %v1276 = vld [vmem:[#allocation5 + $0x21] sm:$0xff]
      %v1277 = vld [vmem:[#allocation5 + $0x31] sm:$0xff]
      %v1278 = vld [vmem:[#allocation5 + $0x41] sm:$0xff]
      %v1279 = vld [vmem:[#allocation5 + $0x51] sm:$0xff]
      %v1280 = vld [vmem:[#allocation5 + $0x61] sm:$0xff]
      %v1281 = vld [vmem:[#allocation5 + $0x71] sm:$0xff]
      %s1282 = scalar_lea.vmem %s3, 256
      %v1283 = vld [vmem:[%s1282] sm:$0xff]
      %v1284 = vld [vmem:[%s1282 + $0x8] sm:$0xff]
      %v1285 = vld [vmem:[%s1282 + $0x10] sm:$0xff]
      %v1286 = vld [vmem:[%s1282 + $0x18] sm:$0xff]
      %v1287 = vld [vmem:[%s1282 + $0x20] sm:$0xff]
      %v1288 = vld [vmem:[%s1282 + $0x28] sm:$0xff]
      %v1289 = vld [vmem:[%s1282 + $0x30] sm:$0xff]
      %v1290 = vld [vmem:[%s1282 + $0x38] sm:$0xff]
      %v1291 = vld [vmem:[%s1282 + $0x40] sm:$0xff]
      %v1292 = vld [vmem:[%s1282 + $0x48] sm:$0xff]
      %v1293 = vld [vmem:[%s1282 + $0x50] sm:$0xff]
      %v1294 = vld [vmem:[%s1282 + $0x58] sm:$0xff]
      %v1295 = vld [vmem:[%s1282 + $0x60] sm:$0xff]
      %v1296 = vld [vmem:[%s1282 + $0x68] sm:$0xff]
      %v1297 = vld [vmem:[%s1282 + $0x70] sm:$0xff]
      %v1298 = vld [vmem:[%s1282 + $0x78] sm:$0xff]
      %1299 = vmatprep.subr.mxu0 0.0
      %1300 = vmatpush1.msra.mxu0 %v1298
      %1301 = vmatprep.subr.mxu0 0.0
      %1302 = vmatpush1.msra.mxu0 %v1297
      %1303 = vmatprep.subr.mxu0 0.0
      %1304 = vmatpush1.msra.mxu0 %v1296
      %1305 = vmatprep.subr.mxu0 0.0
      %1306 = vmatpush1.msra.mxu0 %v1295
      %1307 = vmatprep.subr.mxu0 0.0
      %1308 = vmatpush1.msra.mxu0 %v1294
      %1309 = vmatprep.subr.mxu0 0.0
      %1310 = vmatpush1.msra.mxu0 %v1293
      %1311 = vmatprep.subr.mxu0 0.0
      %1312 = vmatpush1.msra.mxu0 %v1292
      %1313 = vmatprep.subr.mxu0 0.0
      %1314 = vmatpush1.msra.mxu0 %v1291
      %1315 = vmatprep.subr.mxu0 0.0
      %1316 = vmatpush1.msra.mxu0 %v1290
      %1317 = vmatprep.subr.mxu0 0.0
      %1318 = vmatpush1.msra.mxu0 %v1289
      %1319 = vmatprep.subr.mxu0 0.0
      %1320 = vmatpush1.msra.mxu0 %v1288
      %1321 = vmatprep.subr.mxu0 0.0
      %1322 = vmatpush1.msra.mxu0 %v1287
      %1323 = vmatprep.subr.mxu0 0.0
      %1324 = vmatpush1.msra.mxu0 %v1286
      %1325 = vmatprep.subr.mxu0 0.0
      %1326 = vmatpush1.msra.mxu0 %v1285
      %1327 = vmatprep.subr.mxu0 0.0
      %1328 = vmatpush1.msra.mxu0 %v1284
      %1329 = vmatprep.subr.mxu0 0.0
      %1330 = vmatpush1.msra.mxu0 %v1283
      %1331 = vmatprep.subr.mxu0 0.0
      %1332 = vmatpush2.msra.mxu0 0.0
      %1333 = vmatprep.subr.mxu0 0.0
      %1334 = vmatpush2.msra.mxu0 0.0
      %1335 = vmatprep.subr.mxu0 0.0
      %1336 = vmatpush2.msra.mxu0 0.0
      %1337 = vmatprep.subr.mxu0 0.0
      %1338 = vmatpush2.msra.mxu0 0.0
      %1339 = vmatprep.subr.mxu0 0.0
      %1340 = vmatpush2.msra.mxu0 0.0
      %1341 = vmatprep.subr.mxu0 0.0
      %1342 = vmatpush2.msra.mxu0 0.0
      %1343 = vmatprep.subr.mxu0 0.0
      %1344 = vmatpush2.msra.mxu0 0.0
      %1345 = vmatprep.subr.mxu0 0.0
      %1346 = vmatpush2.msra.mxu0 0.0
      %1347 = vmatprep.subr.mxu0 0.0
      %1348 = vmatpush2.msra.mxu0 0.0
      %1349 = vmatprep.subr.mxu0 0.0
      %1350 = vmatpush2.msra.mxu0 0.0
      %1351 = vmatprep.subr.mxu0 0.0
      %1352 = vmatpush2.msra.mxu0 0.0
      %1353 = vmatprep.subr.mxu0 0.0
      %1354 = vmatpush2.msra.mxu0 0.0
      %1355 = vmatprep.subr.mxu0 0.0
      %1356 = vmatpush2.msra.mxu0 0.0
      %1357 = vmatprep.subr.mxu0 0.0
      %1358 = vmatpush2.msra.mxu0 0.0
      %1359 = vmatprep.subr.mxu0 0.0
      %1360 = vmatpush2.msra.mxu0 0.0
      %1361 = vmatprep.subr.mxu0 0.0
      %1362 = vmatpush2.msra.mxu0 0.0
      %1363 = vmatprep.mubr.f32.mxu0 0.0
      %1364 = vmatmul.mubr.f32.gmra.mxu0 %v1274
      %v1365 = vpop.f32.mrf.mxu0
      %v1366 = vadd.f32 0.0, %v1365
      %v1367 = vpop.f32.mrf.mxu0
      %1368 = vmatprep.mubr.f32.mxu0 0.0
      %1369 = vmatmul.mubr.f32.gmra.mxu0 %v1275
      %v1370 = vpop.f32.mrf.mxu0
      %v1371 = vadd.f32 0.0, %v1370
      %v1372 = vpop.f32.mrf.mxu0
      %1373 = vmatprep.mubr.f32.mxu0 0.0
      %1374 = vmatmul.mubr.f32.gmra.mxu0 %v1276
      %v1375 = vpop.f32.mrf.mxu0
      %v1376 = vadd.f32 0.0, %v1375
      %v1377 = vpop.f32.mrf.mxu0
      %1378 = vmatprep.mubr.f32.mxu0 0.0
      %1379 = vmatmul.mubr.f32.gmra.mxu0 %v1277
      %v1380 = vpop.f32.mrf.mxu0
      %v1381 = vadd.f32 0.0, %v1380
      %v1382 = vpop.f32.mrf.mxu0
      %1383 = vmatprep.mubr.f32.mxu0 0.0
      %1384 = vmatmul.mubr.f32.gmra.mxu0 %v1278
      %v1385 = vpop.f32.mrf.mxu0
      %v1386 = vadd.f32 0.0, %v1385
      %v1387 = vpop.f32.mrf.mxu0
      %1388 = vmatprep.mubr.f32.mxu0 0.0
      %1389 = vmatmul.mubr.f32.gmra.mxu0 %v1279
      %v1390 = vpop.f32.mrf.mxu0
      %v1391 = vadd.f32 0.0, %v1390
      %v1392 = vpop.f32.mrf.mxu0
      %1393 = vmatprep.mubr.f32.mxu0 0.0
      %1394 = vmatmul.mubr.f32.gmra.mxu0 %v1280
      %v1395 = vpop.f32.mrf.mxu0
      %v1396 = vadd.f32 0.0, %v1395
      %v1397 = vpop.f32.mrf.mxu0
      %1398 = vmatprep.mubr.f32.mxu0 0.0
      %1399 = vmatmul.mubr.f32.gmra.mxu0 %v1281
      %v1400 = vpop.f32.mrf.mxu0
      %v1401 = vadd.f32 0.0, %v1400
      %v1402 = vpop.f32.mrf.mxu0
      %1403 = vdwg.mxu0
      %v1404 = vadd.f32 %v1236, %v1366
      %v1405 = vadd.f32 %v1241, %v1371
      %v1406 = vadd.f32 %v1246, %v1376
      %v1407 = vadd.f32 %v1251, %v1381
      %v1408 = vadd.f32 %v1256, %v1386
      %v1409 = vadd.f32 %v1261, %v1391
      %v1410 = vadd.f32 %v1266, %v1396
      %v1411 = vadd.f32 %v1271, %v1401
      %v1412 = vld [vmem:[#allocation3] sm:$0xff]
      %v1413 = vld [vmem:[#allocation3 + $0x10] sm:$0xff]
      %v1414 = vld [vmem:[#allocation3 + $0x20] sm:$0xff]
      %v1415 = vld [vmem:[#allocation3 + $0x30] sm:$0xff]
      %v1416 = vld [vmem:[#allocation3 + $0x40] sm:$0xff]
      %v1417 = vld [vmem:[#allocation3 + $0x50] sm:$0xff]
      %v1418 = vld [vmem:[#allocation3 + $0x60] sm:$0xff]
      %v1419 = vld [vmem:[#allocation3 + $0x70] sm:$0xff]
      %s1420 = scalar_lea.vmem %s3, 384
      %v1421 = vld [vmem:[%s1420] sm:$0xff]
      %v1422 = vld [vmem:[%s1420 + $0x8] sm:$0xff]
      %v1423 = vld [vmem:[%s1420 + $0x10] sm:$0xff]
      %v1424 = vld [vmem:[%s1420 + $0x18] sm:$0xff]
      %v1425 = vld [vmem:[%s1420 + $0x20] sm:$0xff]
      %v1426 = vld [vmem:[%s1420 + $0x28] sm:$0xff]
      %v1427 = vld [vmem:[%s1420 + $0x30] sm:$0xff]
      %v1428 = vld [vmem:[%s1420 + $0x38] sm:$0xff]
      %v1429 = vld [vmem:[%s1420 + $0x40] sm:$0xff]
      %v1430 = vld [vmem:[%s1420 + $0x48] sm:$0xff]
      %v1431 = vld [vmem:[%s1420 + $0x50] sm:$0xff]
      %v1432 = vld [vmem:[%s1420 + $0x58] sm:$0xff]
      %v1433 = vld [vmem:[%s1420 + $0x60] sm:$0xff]
      %v1434 = vld [vmem:[%s1420 + $0x68] sm:$0xff]
      %v1435 = vld [vmem:[%s1420 + $0x70] sm:$0xff]
      %v1436 = vld [vmem:[%s1420 + $0x78] sm:$0xff]
      %1437 = vmatprep.subr.mxu0 0.0
      %1438 = vmatpush1.msra.mxu0 %v1436
      %1439 = vmatprep.subr.mxu0 0.0
      %1440 = vmatpush1.msra.mxu0 %v1435
      %1441 = vmatprep.subr.mxu0 0.0
      %1442 = vmatpush1.msra.mxu0 %v1434
      %1443 = vmatprep.subr.mxu0 0.0
      %1444 = vmatpush1.msra.mxu0 %v1433
      %1445 = vmatprep.subr.mxu0 0.0
      %1446 = vmatpush1.msra.mxu0 %v1432
      %1447 = vmatprep.subr.mxu0 0.0
      %1448 = vmatpush1.msra.mxu0 %v1431
      %1449 = vmatprep.subr.mxu0 0.0
      %1450 = vmatpush1.msra.mxu0 %v1430
      %1451 = vmatprep.subr.mxu0 0.0
      %1452 = vmatpush1.msra.mxu0 %v1429
      %1453 = vmatprep.subr.mxu0 0.0
      %1454 = vmatpush1.msra.mxu0 %v1428
      %1455 = vmatprep.subr.mxu0 0.0
      %1456 = vmatpush1.msra.mxu0 %v1427
      %1457 = vmatprep.subr.mxu0 0.0
      %1458 = vmatpush1.msra.mxu0 %v1426
      %1459 = vmatprep.subr.mxu0 0.0
      %1460 = vmatpush1.msra.mxu0 %v1425
      %1461 = vmatprep.subr.mxu0 0.0
      %1462 = vmatpush1.msra.mxu0 %v1424
      %1463 = vmatprep.subr.mxu0 0.0
      %1464 = vmatpush1.msra.mxu0 %v1423
      %1465 = vmatprep.subr.mxu0 0.0
      %1466 = vmatpush1.msra.mxu0 %v1422
      %1467 = vmatprep.subr.mxu0 0.0
      %1468 = vmatpush1.msra.mxu0 %v1421
      %1469 = vmatprep.subr.mxu0 0.0
      %1470 = vmatpush2.msra.mxu0 0.0
      %1471 = vmatprep.subr.mxu0 0.0
      %1472 = vmatpush2.msra.mxu0 0.0
      %1473 = vmatprep.subr.mxu0 0.0
      %1474 = vmatpush2.msra.mxu0 0.0
      %1475 = vmatprep.subr.mxu0 0.0
      %1476 = vmatpush2.msra.mxu0 0.0
      %1477 = vmatprep.subr.mxu0 0.0
      %1478 = vmatpush2.msra.mxu0 0.0
      %1479 = vmatprep.subr.mxu0 0.0
      %1480 = vmatpush2.msra.mxu0 0.0
      %1481 = vmatprep.subr.mxu0 0.0
      %1482 = vmatpush2.msra.mxu0 0.0
      %1483 = vmatprep.subr.mxu0 0.0
      %1484 = vmatpush2.msra.mxu0 0.0
      %1485 = vmatprep.subr.mxu0 0.0
      %1486 = vmatpush2.msra.mxu0 0.0
      %1487 = vmatprep.subr.mxu0 0.0
      %1488 = vmatpush2.msra.mxu0 0.0
      %1489 = vmatprep.subr.mxu0 0.0
      %1490 = vmatpush2.msra.mxu0 0.0
      %1491 = vmatprep.subr.mxu0 0.0
      %1492 = vmatpush2.msra.mxu0 0.0
      %1493 = vmatprep.subr.mxu0 0.0
      %1494 = vmatpush2.msra.mxu0 0.0
      %1495 = vmatprep.subr.mxu0 0.0
      %1496 = vmatpush2.msra.mxu0 0.0
      %1497 = vmatprep.subr.mxu0 0.0
      %1498 = vmatpush2.msra.mxu0 0.0
      %1499 = vmatprep.subr.mxu0 0.0
      %1500 = vmatpush2.msra.mxu0 0.0
      %1501 = vmatprep.mubr.f32.mxu0 0.0
      %1502 = vmatmul.mubr.f32.gmra.mxu0 %v1412
      %v1503 = vpop.f32.mrf.mxu0
      %v1504 = vadd.f32 0.0, %v1503
      %v1505 = vpop.f32.mrf.mxu0
      %1506 = vmatprep.mubr.f32.mxu0 0.0
      %1507 = vmatmul.mubr.f32.gmra.mxu0 %v1413
      %v1508 = vpop.f32.mrf.mxu0
      %v1509 = vadd.f32 0.0, %v1508
      %v1510 = vpop.f32.mrf.mxu0
      %1511 = vmatprep.mubr.f32.mxu0 0.0
      %1512 = vmatmul.mubr.f32.gmra.mxu0 %v1414
      %v1513 = vpop.f32.mrf.mxu0
      %v1514 = vadd.f32 0.0, %v1513
      %v1515 = vpop.f32.mrf.mxu0
      %1516 = vmatprep.mubr.f32.mxu0 0.0
      %1517 = vmatmul.mubr.f32.gmra.mxu0 %v1415
      %v1518 = vpop.f32.mrf.mxu0
      %v1519 = vadd.f32 0.0, %v1518
      %v1520 = vpop.f32.mrf.mxu0
      %1521 = vmatprep.mubr.f32.mxu0 0.0
      %1522 = vmatmul.mubr.f32.gmra.mxu0 %v1416
      %v1523 = vpop.f32.mrf.mxu0
      %v1524 = vadd.f32 0.0, %v1523
      %v1525 = vpop.f32.mrf.mxu0
      %1526 = vmatprep.mubr.f32.mxu0 0.0
      %1527 = vmatmul.mubr.f32.gmra.mxu0 %v1417
      %v1528 = vpop.f32.mrf.mxu0
      %v1529 = vadd.f32 0.0, %v1528
      %v1530 = vpop.f32.mrf.mxu0
      %1531 = vmatprep.mubr.f32.mxu0 0.0
      %1532 = vmatmul.mubr.f32.gmra.mxu0 %v1418
      %v1533 = vpop.f32.mrf.mxu0
      %v1534 = vadd.f32 0.0, %v1533
      %v1535 = vpop.f32.mrf.mxu0
      %1536 = vmatprep.mubr.f32.mxu0 0.0
      %1537 = vmatmul.mubr.f32.gmra.mxu0 %v1419
      %v1538 = vpop.f32.mrf.mxu0
      %v1539 = vadd.f32 0.0, %v1538
      %v1540 = vpop.f32.mrf.mxu0
      %1541 = vdwg.mxu0
      %v1542 = vadd.f32 %v1404, %v1504
      %v1543 = vadd.f32 %v1405, %v1509
      %v1544 = vadd.f32 %v1406, %v1514
      %v1545 = vadd.f32 %v1407, %v1519
      %v1546 = vadd.f32 %v1408, %v1524
      %v1547 = vadd.f32 %v1409, %v1529
      %v1548 = vadd.f32 %v1410, %v1534
      %v1549 = vadd.f32 %v1411, %v1539
      %v1550 = vld [vmem:[#allocation2] sm:$0xff]
      %v1551 = vld [vmem:[#allocation2 + $0x10] sm:$0xff]
      %v1552 = vld [vmem:[#allocation2 + $0x20] sm:$0xff]
      %v1553 = vld [vmem:[#allocation2 + $0x30] sm:$0xff]
      %v1554 = vld [vmem:[#allocation2 + $0x40] sm:$0xff]
      %v1555 = vld [vmem:[#allocation2 + $0x50] sm:$0xff]
      %v1556 = vld [vmem:[#allocation2 + $0x60] sm:$0xff]
      %v1557 = vld [vmem:[#allocation2 + $0x70] sm:$0xff]
      %s1558 = scalar_lea.vmem %s3, 512
      %v1559 = vld [vmem:[%s1558] sm:$0xff]
      %v1560 = vld [vmem:[%s1558 + $0x8] sm:$0xff]
      %v1561 = vld [vmem:[%s1558 + $0x10] sm:$0xff]
      %v1562 = vld [vmem:[%s1558 + $0x18] sm:$0xff]
      %v1563 = vld [vmem:[%s1558 + $0x20] sm:$0xff]
      %v1564 = vld [vmem:[%s1558 + $0x28] sm:$0xff]
      %v1565 = vld [vmem:[%s1558 + $0x30] sm:$0xff]
      %v1566 = vld [vmem:[%s1558 + $0x38] sm:$0xff]
      %v1567 = vld [vmem:[%s1558 + $0x40] sm:$0xff]
      %v1568 = vld [vmem:[%s1558 + $0x48] sm:$0xff]
      %v1569 = vld [vmem:[%s1558 + $0x50] sm:$0xff]
      %v1570 = vld [vmem:[%s1558 + $0x58] sm:$0xff]
      %v1571 = vld [vmem:[%s1558 + $0x60] sm:$0xff]
      %v1572 = vld [vmem:[%s1558 + $0x68] sm:$0xff]
      %v1573 = vld [vmem:[%s1558 + $0x70] sm:$0xff]
      %v1574 = vld [vmem:[%s1558 + $0x78] sm:$0xff]
      %1575 = vmatprep.subr.mxu0 0.0
      %1576 = vmatpush1.msra.mxu0 %v1574
      %1577 = vmatprep.subr.mxu0 0.0
      %1578 = vmatpush1.msra.mxu0 %v1573
      %1579 = vmatprep.subr.mxu0 0.0
      %1580 = vmatpush1.msra.mxu0 %v1572
      %1581 = vmatprep.subr.mxu0 0.0
      %1582 = vmatpush1.msra.mxu0 %v1571
      %1583 = vmatprep.subr.mxu0 0.0
      %1584 = vmatpush1.msra.mxu0 %v1570
      %1585 = vmatprep.subr.mxu0 0.0
      %1586 = vmatpush1.msra.mxu0 %v1569
      %1587 = vmatprep.subr.mxu0 0.0
      %1588 = vmatpush1.msra.mxu0 %v1568
      %1589 = vmatprep.subr.mxu0 0.0
      %1590 = vmatpush1.msra.mxu0 %v1567
      %1591 = vmatprep.subr.mxu0 0.0
      %1592 = vmatpush1.msra.mxu0 %v1566
      %1593 = vmatprep.subr.mxu0 0.0
      %1594 = vmatpush1.msra.mxu0 %v1565
      %1595 = vmatprep.subr.mxu0 0.0
      %1596 = vmatpush1.msra.mxu0 %v1564
      %1597 = vmatprep.subr.mxu0 0.0
      %1598 = vmatpush1.msra.mxu0 %v1563
      %1599 = vmatprep.subr.mxu0 0.0
      %1600 = vmatpush1.msra.mxu0 %v1562
      %1601 = vmatprep.subr.mxu0 0.0
      %1602 = vmatpush1.msra.mxu0 %v1561
      %1603 = vmatprep.subr.mxu0 0.0
      %1604 = vmatpush1.msra.mxu0 %v1560
      %1605 = vmatprep.subr.mxu0 0.0
      %1606 = vmatpush1.msra.mxu0 %v1559
      %1607 = vmatprep.subr.mxu0 0.0
      %1608 = vmatpush2.msra.mxu0 0.0
      %1609 = vmatprep.subr.mxu0 0.0
      %1610 = vmatpush2.msra.mxu0 0.0
      %1611 = vmatprep.subr.mxu0 0.0
      %1612 = vmatpush2.msra.mxu0 0.0
      %1613 = vmatprep.subr.mxu0 0.0
      %1614 = vmatpush2.msra.mxu0 0.0
      %1615 = vmatprep.subr.mxu0 0.0
      %1616 = vmatpush2.msra.mxu0 0.0
      %1617 = vmatprep.subr.mxu0 0.0
      %1618 = vmatpush2.msra.mxu0 0.0
      %1619 = vmatprep.subr.mxu0 0.0
      %1620 = vmatpush2.msra.mxu0 0.0
      %1621 = vmatprep.subr.mxu0 0.0
      %1622 = vmatpush2.msra.mxu0 0.0
      %1623 = vmatprep.subr.mxu0 0.0
      %1624 = vmatpush2.msra.mxu0 0.0
      %1625 = vmatprep.subr.mxu0 0.0
      %1626 = vmatpush2.msra.mxu0 0.0
      %1627 = vmatprep.subr.mxu0 0.0
      %1628 = vmatpush2.msra.mxu0 0.0
      %1629 = vmatprep.subr.mxu0 0.0
      %1630 = vmatpush2.msra.mxu0 0.0
      %1631 = vmatprep.subr.mxu0 0.0
      %1632 = vmatpush2.msra.mxu0 0.0
      %1633 = vmatprep.subr.mxu0 0.0
      %1634 = vmatpush2.msra.mxu0 0.0
      %1635 = vmatprep.subr.mxu0 0.0
      %1636 = vmatpush2.msra.mxu0 0.0
      %1637 = vmatprep.subr.mxu0 0.0
      %1638 = vmatpush2.msra.mxu0 0.0
      %1639 = vmatprep.mubr.f32.mxu0 0.0
      %1640 = vmatmul.mubr.f32.gmra.mxu0 %v1550
      %v1641 = vpop.f32.mrf.mxu0
      %v1642 = vadd.f32 0.0, %v1641
      %v1643 = vpop.f32.mrf.mxu0
      %1644 = vmatprep.mubr.f32.mxu0 0.0
      %1645 = vmatmul.mubr.f32.gmra.mxu0 %v1551
      %v1646 = vpop.f32.mrf.mxu0
      %v1647 = vadd.f32 0.0, %v1646
      %v1648 = vpop.f32.mrf.mxu0
      %1649 = vmatprep.mubr.f32.mxu0 0.0
      %1650 = vmatmul.mubr.f32.gmra.mxu0 %v1552
      %v1651 = vpop.f32.mrf.mxu0
      %v1652 = vadd.f32 0.0, %v1651
      %v1653 = vpop.f32.mrf.mxu0
      %1654 = vmatprep.mubr.f32.mxu0 0.0
      %1655 = vmatmul.mubr.f32.gmra.mxu0 %v1553
      %v1656 = vpop.f32.mrf.mxu0
      %v1657 = vadd.f32 0.0, %v1656
      %v1658 = vpop.f32.mrf.mxu0
      %1659 = vmatprep.mubr.f32.mxu0 0.0
      %1660 = vmatmul.mubr.f32.gmra.mxu0 %v1554
      %v1661 = vpop.f32.mrf.mxu0
      %v1662 = vadd.f32 0.0, %v1661
      %v1663 = vpop.f32.mrf.mxu0
      %1664 = vmatprep.mubr.f32.mxu0 0.0
      %1665 = vmatmul.mubr.f32.gmra.mxu0 %v1555
      %v1666 = vpop.f32.mrf.mxu0
      %v1667 = vadd.f32 0.0, %v1666
      %v1668 = vpop.f32.mrf.mxu0
      %1669 = vmatprep.mubr.f32.mxu0 0.0
      %1670 = vmatmul.mubr.f32.gmra.mxu0 %v1556
      %v1671 = vpop.f32.mrf.mxu0
      %v1672 = vadd.f32 0.0, %v1671
      %v1673 = vpop.f32.mrf.mxu0
      %1674 = vmatprep.mubr.f32.mxu0 0.0
      %1675 = vmatmul.mubr.f32.gmra.mxu0 %v1557
      %v1676 = vpop.f32.mrf.mxu0
      %v1677 = vadd.f32 0.0, %v1676
      %v1678 = vpop.f32.mrf.mxu0
      %1679 = vdwg.mxu0
      %v1680 = vadd.f32 %v1542, %v1642
      %v1681 = vadd.f32 %v1543, %v1647
      %v1682 = vadd.f32 %v1544, %v1652
      %v1683 = vadd.f32 %v1545, %v1657
      %v1684 = vadd.f32 %v1546, %v1662
      %v1685 = vadd.f32 %v1547, %v1667
      %v1686 = vadd.f32 %v1548, %v1672
      %v1687 = vadd.f32 %v1549, %v1677
      %v1688 = vld [vmem:[#allocation3 + $0x1] sm:$0xff]
      %v1689 = vld [vmem:[#allocation3 + $0x11] sm:$0xff]
      %v1690 = vld [vmem:[#allocation3 + $0x21] sm:$0xff]
      %v1691 = vld [vmem:[#allocation3 + $0x31] sm:$0xff]
      %v1692 = vld [vmem:[#allocation3 + $0x41] sm:$0xff]
      %v1693 = vld [vmem:[#allocation3 + $0x51] sm:$0xff]
      %v1694 = vld [vmem:[#allocation3 + $0x61] sm:$0xff]
      %v1695 = vld [vmem:[#allocation3 + $0x71] sm:$0xff]
      %s1696 = scalar_lea.vmem %s3, 640
      %v1697 = vld [vmem:[%s1696] sm:$0xff]
      %v1698 = vld [vmem:[%s1696 + $0x8] sm:$0xff]
      %v1699 = vld [vmem:[%s1696 + $0x10] sm:$0xff]
      %v1700 = vld [vmem:[%s1696 + $0x18] sm:$0xff]
      %v1701 = vld [vmem:[%s1696 + $0x20] sm:$0xff]
      %v1702 = vld [vmem:[%s1696 + $0x28] sm:$0xff]
      %v1703 = vld [vmem:[%s1696 + $0x30] sm:$0xff]
      %v1704 = vld [vmem:[%s1696 + $0x38] sm:$0xff]
      %v1705 = vld [vmem:[%s1696 + $0x40] sm:$0xff]
      %v1706 = vld [vmem:[%s1696 + $0x48] sm:$0xff]
      %v1707 = vld [vmem:[%s1696 + $0x50] sm:$0xff]
      %v1708 = vld [vmem:[%s1696 + $0x58] sm:$0xff]
      %v1709 = vld [vmem:[%s1696 + $0x60] sm:$0xff]
      %v1710 = vld [vmem:[%s1696 + $0x68] sm:$0xff]
      %v1711 = vld [vmem:[%s1696 + $0x70] sm:$0xff]
      %v1712 = vld [vmem:[%s1696 + $0x78] sm:$0xff]
      %1713 = vmatprep.subr.mxu0 0.0
      %1714 = vmatpush1.msra.mxu0 %v1712
      %1715 = vmatprep.subr.mxu0 0.0
      %1716 = vmatpush1.msra.mxu0 %v1711
      %1717 = vmatprep.subr.mxu0 0.0
      %1718 = vmatpush1.msra.mxu0 %v1710
      %1719 = vmatprep.subr.mxu0 0.0
      %1720 = vmatpush1.msra.mxu0 %v1709
      %1721 = vmatprep.subr.mxu0 0.0
      %1722 = vmatpush1.msra.mxu0 %v1708
      %1723 = vmatprep.subr.mxu0 0.0
      %1724 = vmatpush1.msra.mxu0 %v1707
      %1725 = vmatprep.subr.mxu0 0.0
      %1726 = vmatpush1.msra.mxu0 %v1706
      %1727 = vmatprep.subr.mxu0 0.0
      %1728 = vmatpush1.msra.mxu0 %v1705
      %1729 = vmatprep.subr.mxu0 0.0
      %1730 = vmatpush1.msra.mxu0 %v1704
      %1731 = vmatprep.subr.mxu0 0.0
      %1732 = vmatpush1.msra.mxu0 %v1703
      %1733 = vmatprep.subr.mxu0 0.0
      %1734 = vmatpush1.msra.mxu0 %v1702
      %1735 = vmatprep.subr.mxu0 0.0
      %1736 = vmatpush1.msra.mxu0 %v1701
      %1737 = vmatprep.subr.mxu0 0.0
      %1738 = vmatpush1.msra.mxu0 %v1700
      %1739 = vmatprep.subr.mxu0 0.0
      %1740 = vmatpush1.msra.mxu0 %v1699
      %1741 = vmatprep.subr.mxu0 0.0
      %1742 = vmatpush1.msra.mxu0 %v1698
      %1743 = vmatprep.subr.mxu0 0.0
      %1744 = vmatpush1.msra.mxu0 %v1697
      %1745 = vmatprep.subr.mxu0 0.0
      %1746 = vmatpush2.msra.mxu0 0.0
      %1747 = vmatprep.subr.mxu0 0.0
      %1748 = vmatpush2.msra.mxu0 0.0
      %1749 = vmatprep.subr.mxu0 0.0
      %1750 = vmatpush2.msra.mxu0 0.0
      %1751 = vmatprep.subr.mxu0 0.0
      %1752 = vmatpush2.msra.mxu0 0.0
      %1753 = vmatprep.subr.mxu0 0.0
      %1754 = vmatpush2.msra.mxu0 0.0
      %1755 = vmatprep.subr.mxu0 0.0
      %1756 = vmatpush2.msra.mxu0 0.0
      %1757 = vmatprep.subr.mxu0 0.0
      %1758 = vmatpush2.msra.mxu0 0.0
      %1759 = vmatprep.subr.mxu0 0.0
      %1760 = vmatpush2.msra.mxu0 0.0
      %1761 = vmatprep.subr.mxu0 0.0
      %1762 = vmatpush2.msra.mxu0 0.0
      %1763 = vmatprep.subr.mxu0 0.0
      %1764 = vmatpush2.msra.mxu0 0.0
      %1765 = vmatprep.subr.mxu0 0.0
      %1766 = vmatpush2.msra.mxu0 0.0
      %1767 = vmatprep.subr.mxu0 0.0
      %1768 = vmatpush2.msra.mxu0 0.0
      %1769 = vmatprep.subr.mxu0 0.0
      %1770 = vmatpush2.msra.mxu0 0.0
      %1771 = vmatprep.subr.mxu0 0.0
      %1772 = vmatpush2.msra.mxu0 0.0
      %1773 = vmatprep.subr.mxu0 0.0
      %1774 = vmatpush2.msra.mxu0 0.0
      %1775 = vmatprep.subr.mxu0 0.0
      %1776 = vmatpush2.msra.mxu0 0.0
      %1777 = vmatprep.mubr.f32.mxu0 0.0
      %1778 = vmatmul.mubr.f32.gmra.mxu0 %v1688
      %v1779 = vpop.f32.mrf.mxu0
      %v1780 = vadd.f32 0.0, %v1779
      %v1781 = vpop.f32.mrf.mxu0
      %1782 = vmatprep.mubr.f32.mxu0 0.0
      %1783 = vmatmul.mubr.f32.gmra.mxu0 %v1689
      %v1784 = vpop.f32.mrf.mxu0
      %v1785 = vadd.f32 0.0, %v1784
      %v1786 = vpop.f32.mrf.mxu0
      %1787 = vmatprep.mubr.f32.mxu0 0.0
      %1788 = vmatmul.mubr.f32.gmra.mxu0 %v1690
      %v1789 = vpop.f32.mrf.mxu0
      %v1790 = vadd.f32 0.0, %v1789
      %v1791 = vpop.f32.mrf.mxu0
      %1792 = vmatprep.mubr.f32.mxu0 0.0
      %1793 = vmatmul.mubr.f32.gmra.mxu0 %v1691
      %v1794 = vpop.f32.mrf.mxu0
      %v1795 = vadd.f32 0.0, %v1794
      %v1796 = vpop.f32.mrf.mxu0
      %1797 = vmatprep.mubr.f32.mxu0 0.0
      %1798 = vmatmul.mubr.f32.gmra.mxu0 %v1692
      %v1799 = vpop.f32.mrf.mxu0
      %v1800 = vadd.f32 0.0, %v1799
      %v1801 = vpop.f32.mrf.mxu0
      %1802 = vmatprep.mubr.f32.mxu0 0.0
      %1803 = vmatmul.mubr.f32.gmra.mxu0 %v1693
      %v1804 = vpop.f32.mrf.mxu0
      %v1805 = vadd.f32 0.0, %v1804
      %v1806 = vpop.f32.mrf.mxu0
      %1807 = vmatprep.mubr.f32.mxu0 0.0
      %1808 = vmatmul.mubr.f32.gmra.mxu0 %v1694
      %v1809 = vpop.f32.mrf.mxu0
      %v1810 = vadd.f32 0.0, %v1809
      %v1811 = vpop.f32.mrf.mxu0
      %1812 = vmatprep.mubr.f32.mxu0 0.0
      %1813 = vmatmul.mubr.f32.gmra.mxu0 %v1695
      %v1814 = vpop.f32.mrf.mxu0
      %v1815 = vadd.f32 0.0, %v1814
      %v1816 = vpop.f32.mrf.mxu0
      %1817 = vdwg.mxu0
      %v1818 = vadd.f32 %v1680, %v1780
      %v1819 = vadd.f32 %v1681, %v1785
      %v1820 = vadd.f32 %v1682, %v1790
      %v1821 = vadd.f32 %v1683, %v1795
      %v1822 = vadd.f32 %v1684, %v1800
      %v1823 = vadd.f32 %v1685, %v1805
      %v1824 = vadd.f32 %v1686, %v1810
      %v1825 = vadd.f32 %v1687, %v1815
      %v1826 = vld [vmem:[%s1006] sm:$0xff]
      %v1827 = vld [vmem:[%s1006 + $0x10] sm:$0xff]
      %v1828 = vld [vmem:[%s1006 + $0x20] sm:$0xff]
      %v1829 = vld [vmem:[%s1006 + $0x30] sm:$0xff]
      %v1830 = vld [vmem:[%s1006 + $0x40] sm:$0xff]
      %v1831 = vld [vmem:[%s1006 + $0x50] sm:$0xff]
      %v1832 = vld [vmem:[%s1006 + $0x60] sm:$0xff]
      %v1833 = vld [vmem:[%s1006 + $0x70] sm:$0xff]
      %s1834 = scalar_lea.vmem %s3, 768
      %v1835 = vld [vmem:[%s1834] sm:$0xff]
      %v1836 = vld [vmem:[%s1834 + $0x8] sm:$0xff]
      %v1837 = vld [vmem:[%s1834 + $0x10] sm:$0xff]
      %v1838 = vld [vmem:[%s1834 + $0x18] sm:$0xff]
      %v1839 = vld [vmem:[%s1834 + $0x20] sm:$0xff]
      %v1840 = vld [vmem:[%s1834 + $0x28] sm:$0xff]
      %v1841 = vld [vmem:[%s1834 + $0x30] sm:$0xff]
      %v1842 = vld [vmem:[%s1834 + $0x38] sm:$0xff]
      %v1843 = vld [vmem:[%s1834 + $0x40] sm:$0xff]
      %v1844 = vld [vmem:[%s1834 + $0x48] sm:$0xff]
      %v1845 = vld [vmem:[%s1834 + $0x50] sm:$0xff]
      %v1846 = vld [vmem:[%s1834 + $0x58] sm:$0xff]
      %v1847 = vld [vmem:[%s1834 + $0x60] sm:$0xff]
      %v1848 = vld [vmem:[%s1834 + $0x68] sm:$0xff]
      %v1849 = vld [vmem:[%s1834 + $0x70] sm:$0xff]
      %v1850 = vld [vmem:[%s1834 + $0x78] sm:$0xff]
      %1851 = vmatprep.subr.mxu0 0.0
      %1852 = vmatpush1.msra.mxu0 %v1850
      %1853 = vmatprep.subr.mxu0 0.0
      %1854 = vmatpush1.msra.mxu0 %v1849
      %1855 = vmatprep.subr.mxu0 0.0
      %1856 = vmatpush1.msra.mxu0 %v1848
      %1857 = vmatprep.subr.mxu0 0.0
      %1858 = vmatpush1.msra.mxu0 %v1847
      %1859 = vmatprep.subr.mxu0 0.0
      %1860 = vmatpush1.msra.mxu0 %v1846
      %1861 = vmatprep.subr.mxu0 0.0
      %1862 = vmatpush1.msra.mxu0 %v1845
      %1863 = vmatprep.subr.mxu0 0.0
      %1864 = vmatpush1.msra.mxu0 %v1844
      %1865 = vmatprep.subr.mxu0 0.0
      %1866 = vmatpush1.msra.mxu0 %v1843
      %1867 = vmatprep.subr.mxu0 0.0
      %1868 = vmatpush1.msra.mxu0 %v1842
      %1869 = vmatprep.subr.mxu0 0.0
      %1870 = vmatpush1.msra.mxu0 %v1841
      %1871 = vmatprep.subr.mxu0 0.0
      %1872 = vmatpush1.msra.mxu0 %v1840
      %1873 = vmatprep.subr.mxu0 0.0
      %1874 = vmatpush1.msra.mxu0 %v1839
      %1875 = vmatprep.subr.mxu0 0.0
      %1876 = vmatpush1.msra.mxu0 %v1838
      %1877 = vmatprep.subr.mxu0 0.0
      %1878 = vmatpush1.msra.mxu0 %v1837
      %1879 = vmatprep.subr.mxu0 0.0
      %1880 = vmatpush1.msra.mxu0 %v1836
      %1881 = vmatprep.subr.mxu0 0.0
      %1882 = vmatpush1.msra.mxu0 %v1835
      %1883 = vmatprep.subr.mxu0 0.0
      %1884 = vmatpush2.msra.mxu0 0.0
      %1885 = vmatprep.subr.mxu0 0.0
      %1886 = vmatpush2.msra.mxu0 0.0
      %1887 = vmatprep.subr.mxu0 0.0
      %1888 = vmatpush2.msra.mxu0 0.0
      %1889 = vmatprep.subr.mxu0 0.0
      %1890 = vmatpush2.msra.mxu0 0.0
      %1891 = vmatprep.subr.mxu0 0.0
      %1892 = vmatpush2.msra.mxu0 0.0
      %1893 = vmatprep.subr.mxu0 0.0
      %1894 = vmatpush2.msra.mxu0 0.0
      %1895 = vmatprep.subr.mxu0 0.0
      %1896 = vmatpush2.msra.mxu0 0.0
      %1897 = vmatprep.subr.mxu0 0.0
      %1898 = vmatpush2.msra.mxu0 0.0
      %1899 = vmatprep.subr.mxu0 0.0
      %1900 = vmatpush2.msra.mxu0 0.0
      %1901 = vmatprep.subr.mxu0 0.0
      %1902 = vmatpush2.msra.mxu0 0.0
      %1903 = vmatprep.subr.mxu0 0.0
      %1904 = vmatpush2.msra.mxu0 0.0
      %1905 = vmatprep.subr.mxu0 0.0
      %1906 = vmatpush2.msra.mxu0 0.0
      %1907 = vmatprep.subr.mxu0 0.0
      %1908 = vmatpush2.msra.mxu0 0.0
      %1909 = vmatprep.subr.mxu0 0.0
      %1910 = vmatpush2.msra.mxu0 0.0
      %1911 = vmatprep.subr.mxu0 0.0
      %1912 = vmatpush2.msra.mxu0 0.0
      %1913 = vmatprep.subr.mxu0 0.0
      %1914 = vmatpush2.msra.mxu0 0.0
      %1915 = vmatprep.mubr.f32.mxu0 0.0
      %1916 = vmatmul.mubr.f32.gmra.mxu0 %v1826
      %v1917 = vpop.f32.mrf.mxu0
      %v1918 = vadd.f32 0.0, %v1917
      %v1919 = vpop.f32.mrf.mxu0
      %1920 = vmatprep.mubr.f32.mxu0 0.0
      %1921 = vmatmul.mubr.f32.gmra.mxu0 %v1827
      %v1922 = vpop.f32.mrf.mxu0
      %v1923 = vadd.f32 0.0, %v1922
      %v1924 = vpop.f32.mrf.mxu0
      %1925 = vmatprep.mubr.f32.mxu0 0.0
      %1926 = vmatmul.mubr.f32.gmra.mxu0 %v1828
      %v1927 = vpop.f32.mrf.mxu0
      %v1928 = vadd.f32 0.0, %v1927
      %v1929 = vpop.f32.mrf.mxu0
      %1930 = vmatprep.mubr.f32.mxu0 0.0
      %1931 = vmatmul.mubr.f32.gmra.mxu0 %v1829
      %v1932 = vpop.f32.mrf.mxu0
      %v1933 = vadd.f32 0.0, %v1932
      %v1934 = vpop.f32.mrf.mxu0
      %1935 = vmatprep.mubr.f32.mxu0 0.0
      %1936 = vmatmul.mubr.f32.gmra.mxu0 %v1830
      %v1937 = vpop.f32.mrf.mxu0
      %v1938 = vadd.f32 0.0, %v1937
      %v1939 = vpop.f32.mrf.mxu0
      %1940 = vmatprep.mubr.f32.mxu0 0.0
      %1941 = vmatmul.mubr.f32.gmra.mxu0 %v1831
      %v1942 = vpop.f32.mrf.mxu0
      %v1943 = vadd.f32 0.0, %v1942
      %v1944 = vpop.f32.mrf.mxu0
      %1945 = vmatprep.mubr.f32.mxu0 0.0
      %1946 = vmatmul.mubr.f32.gmra.mxu0 %v1832
      %v1947 = vpop.f32.mrf.mxu0
      %v1948 = vadd.f32 0.0, %v1947
      %v1949 = vpop.f32.mrf.mxu0
      %1950 = vmatprep.mubr.f32.mxu0 0.0
      %1951 = vmatmul.mubr.f32.gmra.mxu0 %v1833
      %v1952 = vpop.f32.mrf.mxu0
      %v1953 = vadd.f32 0.0, %v1952
      %v1954 = vpop.f32.mrf.mxu0
      %1955 = vdwg.mxu0
      %v1956 = vadd.f32 %v1818, %v1918
      %v1957 = vadd.f32 %v1819, %v1923
      %v1958 = vadd.f32 %v1820, %v1928
      %v1959 = vadd.f32 %v1821, %v1933
      %v1960 = vadd.f32 %v1822, %v1938
      %v1961 = vadd.f32 %v1823, %v1943
      %v1962 = vadd.f32 %v1824, %v1948
      %v1963 = vadd.f32 %v1825, %v1953
      %v1964 = vld [vmem:[%s861] sm:$0xff]
      %v1965 = vld [vmem:[%s861 + $0x10] sm:$0xff]
      %v1966 = vld [vmem:[%s861 + $0x20] sm:$0xff]
      %v1967 = vld [vmem:[%s861 + $0x30] sm:$0xff]
      %v1968 = vld [vmem:[%s861 + $0x40] sm:$0xff]
      %v1969 = vld [vmem:[%s861 + $0x50] sm:$0xff]
      %v1970 = vld [vmem:[%s861 + $0x60] sm:$0xff]
      %v1971 = vld [vmem:[%s861 + $0x70] sm:$0xff]
      %s1972 = scalar_lea.vmem %s3, 896
      %v1973 = vld [vmem:[%s1972] sm:$0xff]
      %v1974 = vld [vmem:[%s1972 + $0x8] sm:$0xff]
      %v1975 = vld [vmem:[%s1972 + $0x10] sm:$0xff]
      %v1976 = vld [vmem:[%s1972 + $0x18] sm:$0xff]
      %v1977 = vld [vmem:[%s1972 + $0x20] sm:$0xff]
      %v1978 = vld [vmem:[%s1972 + $0x28] sm:$0xff]
      %v1979 = vld [vmem:[%s1972 + $0x30] sm:$0xff]
      %v1980 = vld [vmem:[%s1972 + $0x38] sm:$0xff]
      %v1981 = vld [vmem:[%s1972 + $0x40] sm:$0xff]
      %v1982 = vld [vmem:[%s1972 + $0x48] sm:$0xff]
      %v1983 = vld [vmem:[%s1972 + $0x50] sm:$0xff]
      %v1984 = vld [vmem:[%s1972 + $0x58] sm:$0xff]
      %v1985 = vld [vmem:[%s1972 + $0x60] sm:$0xff]
      %v1986 = vld [vmem:[%s1972 + $0x68] sm:$0xff]
      %v1987 = vld [vmem:[%s1972 + $0x70] sm:$0xff]
      %v1988 = vld [vmem:[%s1972 + $0x78] sm:$0xff]
      %1989 = vmatprep.subr.mxu0 0.0
      %1990 = vmatpush1.msra.mxu0 %v1988
      %1991 = vmatprep.subr.mxu0 0.0
      %1992 = vmatpush1.msra.mxu0 %v1987
      %1993 = vmatprep.subr.mxu0 0.0
      %1994 = vmatpush1.msra.mxu0 %v1986
      %1995 = vmatprep.subr.mxu0 0.0
      %1996 = vmatpush1.msra.mxu0 %v1985
      %1997 = vmatprep.subr.mxu0 0.0
      %1998 = vmatpush1.msra.mxu0 %v1984
      %1999 = vmatprep.subr.mxu0 0.0
      %2000 = vmatpush1.msra.mxu0 %v1983
      %2001 = vmatprep.subr.mxu0 0.0
      %2002 = vmatpush1.msra.mxu0 %v1982
      %2003 = vmatprep.subr.mxu0 0.0
      %2004 = vmatpush1.msra.mxu0 %v1981
      %2005 = vmatprep.subr.mxu0 0.0
      %2006 = vmatpush1.msra.mxu0 %v1980
      %2007 = vmatprep.subr.mxu0 0.0
      %2008 = vmatpush1.msra.mxu0 %v1979
      %2009 = vmatprep.subr.mxu0 0.0
      %2010 = vmatpush1.msra.mxu0 %v1978
      %2011 = vmatprep.subr.mxu0 0.0
      %2012 = vmatpush1.msra.mxu0 %v1977
      %2013 = vmatprep.subr.mxu0 0.0
      %2014 = vmatpush1.msra.mxu0 %v1976
      %2015 = vmatprep.subr.mxu0 0.0
      %2016 = vmatpush1.msra.mxu0 %v1975
      %2017 = vmatprep.subr.mxu0 0.0
      %2018 = vmatpush1.msra.mxu0 %v1974
      %2019 = vmatprep.subr.mxu0 0.0
      %2020 = vmatpush1.msra.mxu0 %v1973
      %2021 = vmatprep.subr.mxu0 0.0
      %2022 = vmatpush2.msra.mxu0 0.0
      %2023 = vmatprep.subr.mxu0 0.0
      %2024 = vmatpush2.msra.mxu0 0.0
      %2025 = vmatprep.subr.mxu0 0.0
      %2026 = vmatpush2.msra.mxu0 0.0
      %2027 = vmatprep.subr.mxu0 0.0
      %2028 = vmatpush2.msra.mxu0 0.0
      %2029 = vmatprep.subr.mxu0 0.0
      %2030 = vmatpush2.msra.mxu0 0.0
      %2031 = vmatprep.subr.mxu0 0.0
      %2032 = vmatpush2.msra.mxu0 0.0
      %2033 = vmatprep.subr.mxu0 0.0
      %2034 = vmatpush2.msra.mxu0 0.0
      %2035 = vmatprep.subr.mxu0 0.0
      %2036 = vmatpush2.msra.mxu0 0.0
      %2037 = vmatprep.subr.mxu0 0.0
      %2038 = vmatpush2.msra.mxu0 0.0
      %2039 = vmatprep.subr.mxu0 0.0
      %2040 = vmatpush2.msra.mxu0 0.0
      %2041 = vmatprep.subr.mxu0 0.0
      %2042 = vmatpush2.msra.mxu0 0.0
      %2043 = vmatprep.subr.mxu0 0.0
      %2044 = vmatpush2.msra.mxu0 0.0
      %2045 = vmatprep.subr.mxu0 0.0
      %2046 = vmatpush2.msra.mxu0 0.0
      %2047 = vmatprep.subr.mxu0 0.0
      %2048 = vmatpush2.msra.mxu0 0.0
      %2049 = vmatprep.subr.mxu0 0.0
      %2050 = vmatpush2.msra.mxu0 0.0
      %2051 = vmatprep.subr.mxu0 0.0
      %2052 = vmatpush2.msra.mxu0 0.0
      %2053 = vmatprep.mubr.f32.mxu0 0.0
      %2054 = vmatmul.mubr.f32.gmra.mxu0 %v1964
      %v2055 = vpop.f32.mrf.mxu0
      %v2056 = vadd.f32 0.0, %v2055
      %v2057 = vpop.f32.mrf.mxu0
      %2058 = vmatprep.mubr.f32.mxu0 0.0
      %2059 = vmatmul.mubr.f32.gmra.mxu0 %v1965
      %v2060 = vpop.f32.mrf.mxu0
      %v2061 = vadd.f32 0.0, %v2060
      %v2062 = vpop.f32.mrf.mxu0
      %2063 = vmatprep.mubr.f32.mxu0 0.0
      %2064 = vmatmul.mubr.f32.gmra.mxu0 %v1966
      %v2065 = vpop.f32.mrf.mxu0
      %v2066 = vadd.f32 0.0, %v2065
      %v2067 = vpop.f32.mrf.mxu0
      %2068 = vmatprep.mubr.f32.mxu0 0.0
      %2069 = vmatmul.mubr.f32.gmra.mxu0 %v1967
      %v2070 = vpop.f32.mrf.mxu0
      %v2071 = vadd.f32 0.0, %v2070
      %v2072 = vpop.f32.mrf.mxu0
      %2073 = vmatprep.mubr.f32.mxu0 0.0
      %2074 = vmatmul.mubr.f32.gmra.mxu0 %v1968
      %v2075 = vpop.f32.mrf.mxu0
      %v2076 = vadd.f32 0.0, %v2075
      %v2077 = vpop.f32.mrf.mxu0
      %2078 = vmatprep.mubr.f32.mxu0 0.0
      %2079 = vmatmul.mubr.f32.gmra.mxu0 %v1969
      %v2080 = vpop.f32.mrf.mxu0
      %v2081 = vadd.f32 0.0, %v2080
      %v2082 = vpop.f32.mrf.mxu0
      %2083 = vmatprep.mubr.f32.mxu0 0.0
      %2084 = vmatmul.mubr.f32.gmra.mxu0 %v1970
      %v2085 = vpop.f32.mrf.mxu0
      %v2086 = vadd.f32 0.0, %v2085
      %v2087 = vpop.f32.mrf.mxu0
      %2088 = vmatprep.mubr.f32.mxu0 0.0
      %2089 = vmatmul.mubr.f32.gmra.mxu0 %v1971
      %v2090 = vpop.f32.mrf.mxu0
      %v2091 = vadd.f32 0.0, %v2090
      %v2092 = vpop.f32.mrf.mxu0
      %2093 = vdwg.mxu0
      %v2094 = vadd.f32 %v1956, %v2056
      %v2095 = vadd.f32 %v1957, %v2061
      %v2096 = vadd.f32 %v1958, %v2066
      %v2097 = vadd.f32 %v1959, %v2071
      %v2098 = vadd.f32 %v1960, %v2076
      %v2099 = vadd.f32 %v1961, %v2081
      %v2100 = vadd.f32 %v1962, %v2086
      %v2101 = vadd.f32 %v1963, %v2091
      %v2102 = vld [vmem:[%s1006 + $0x1] sm:$0xff]
      %v2103 = vld [vmem:[%s1006 + $0x11] sm:$0xff]
      %v2104 = vld [vmem:[%s1006 + $0x21] sm:$0xff]
      %v2105 = vld [vmem:[%s1006 + $0x31] sm:$0xff]
      %v2106 = vld [vmem:[%s1006 + $0x41] sm:$0xff]
      %v2107 = vld [vmem:[%s1006 + $0x51] sm:$0xff]
      %v2108 = vld [vmem:[%s1006 + $0x61] sm:$0xff]
      %v2109 = vld [vmem:[%s1006 + $0x71] sm:$0xff]
      %s2110 = scalar_lea.vmem %s3, 1024
      %v2111 = vld [vmem:[%s2110] sm:$0xff]
      %v2112 = vld [vmem:[%s2110 + $0x8] sm:$0xff]
      %v2113 = vld [vmem:[%s2110 + $0x10] sm:$0xff]
      %v2114 = vld [vmem:[%s2110 + $0x18] sm:$0xff]
      %v2115 = vld [vmem:[%s2110 + $0x20] sm:$0xff]
      %v2116 = vld [vmem:[%s2110 + $0x28] sm:$0xff]
      %v2117 = vld [vmem:[%s2110 + $0x30] sm:$0xff]
      %v2118 = vld [vmem:[%s2110 + $0x38] sm:$0xff]
      %v2119 = vld [vmem:[%s2110 + $0x40] sm:$0xff]
      %v2120 = vld [vmem:[%s2110 + $0x48] sm:$0xff]
      %v2121 = vld [vmem:[%s2110 + $0x50] sm:$0xff]
      %v2122 = vld [vmem:[%s2110 + $0x58] sm:$0xff]
      %v2123 = vld [vmem:[%s2110 + $0x60] sm:$0xff]
      %v2124 = vld [vmem:[%s2110 + $0x68] sm:$0xff]
      %v2125 = vld [vmem:[%s2110 + $0x70] sm:$0xff]
      %v2126 = vld [vmem:[%s2110 + $0x78] sm:$0xff]
      %2127 = vmatprep.subr.mxu0 0.0
      %2128 = vmatpush1.msra.mxu0 %v2126
      %2129 = vmatprep.subr.mxu0 0.0
      %2130 = vmatpush1.msra.mxu0 %v2125
      %2131 = vmatprep.subr.mxu0 0.0
      %2132 = vmatpush1.msra.mxu0 %v2124
      %2133 = vmatprep.subr.mxu0 0.0
      %2134 = vmatpush1.msra.mxu0 %v2123
      %2135 = vmatprep.subr.mxu0 0.0
      %2136 = vmatpush1.msra.mxu0 %v2122
      %2137 = vmatprep.subr.mxu0 0.0
      %2138 = vmatpush1.msra.mxu0 %v2121
      %2139 = vmatprep.subr.mxu0 0.0
      %2140 = vmatpush1.msra.mxu0 %v2120
      %2141 = vmatprep.subr.mxu0 0.0
      %2142 = vmatpush1.msra.mxu0 %v2119
      %2143 = vmatprep.subr.mxu0 0.0
      %2144 = vmatpush1.msra.mxu0 %v2118
      %2145 = vmatprep.subr.mxu0 0.0
      %2146 = vmatpush1.msra.mxu0 %v2117
      %2147 = vmatprep.subr.mxu0 0.0
      %2148 = vmatpush1.msra.mxu0 %v2116
      %2149 = vmatprep.subr.mxu0 0.0
      %2150 = vmatpush1.msra.mxu0 %v2115
      %2151 = vmatprep.subr.mxu0 0.0
      %2152 = vmatpush1.msra.mxu0 %v2114
      %2153 = vmatprep.subr.mxu0 0.0
      %2154 = vmatpush1.msra.mxu0 %v2113
      %2155 = vmatprep.subr.mxu0 0.0
      %2156 = vmatpush1.msra.mxu0 %v2112
      %2157 = vmatprep.subr.mxu0 0.0
      %2158 = vmatpush1.msra.mxu0 %v2111
      %2159 = vmatprep.subr.mxu0 0.0
      %2160 = vmatpush2.msra.mxu0 0.0
      %2161 = vmatprep.subr.mxu0 0.0
      %2162 = vmatpush2.msra.mxu0 0.0
      %2163 = vmatprep.subr.mxu0 0.0
      %2164 = vmatpush2.msra.mxu0 0.0
      %2165 = vmatprep.subr.mxu0 0.0
      %2166 = vmatpush2.msra.mxu0 0.0
      %2167 = vmatprep.subr.mxu0 0.0
      %2168 = vmatpush2.msra.mxu0 0.0
      %2169 = vmatprep.subr.mxu0 0.0
      %2170 = vmatpush2.msra.mxu0 0.0
      %2171 = vmatprep.subr.mxu0 0.0
      %2172 = vmatpush2.msra.mxu0 0.0
      %2173 = vmatprep.subr.mxu0 0.0
      %2174 = vmatpush2.msra.mxu0 0.0
      %2175 = vmatprep.subr.mxu0 0.0
      %2176 = vmatpush2.msra.mxu0 0.0
      %2177 = vmatprep.subr.mxu0 0.0
      %2178 = vmatpush2.msra.mxu0 0.0
      %2179 = vmatprep.subr.mxu0 0.0
      %2180 = vmatpush2.msra.mxu0 0.0
      %2181 = vmatprep.subr.mxu0 0.0
      %2182 = vmatpush2.msra.mxu0 0.0
      %2183 = vmatprep.subr.mxu0 0.0
      %2184 = vmatpush2.msra.mxu0 0.0
      %2185 = vmatprep.subr.mxu0 0.0
      %2186 = vmatpush2.msra.mxu0 0.0
      %2187 = vmatprep.subr.mxu0 0.0
      %2188 = vmatpush2.msra.mxu0 0.0
      %2189 = vmatprep.subr.mxu0 0.0
      %2190 = vmatpush2.msra.mxu0 0.0
      %2191 = vmatprep.mubr.f32.mxu0 0.0
      %2192 = vmatmul.mubr.f32.gmra.mxu0 %v2102
      %v2193 = vpop.f32.mrf.mxu0
      %v2194 = vadd.f32 0.0, %v2193
      %v2195 = vpop.f32.mrf.mxu0
      %2196 = vmatprep.mubr.f32.mxu0 0.0
      %2197 = vmatmul.mubr.f32.gmra.mxu0 %v2103
      %v2198 = vpop.f32.mrf.mxu0
      %v2199 = vadd.f32 0.0, %v2198
      %v2200 = vpop.f32.mrf.mxu0
      %2201 = vmatprep.mubr.f32.mxu0 0.0
      %2202 = vmatmul.mubr.f32.gmra.mxu0 %v2104
      %v2203 = vpop.f32.mrf.mxu0
      %v2204 = vadd.f32 0.0, %v2203
      %v2205 = vpop.f32.mrf.mxu0
      %2206 = vmatprep.mubr.f32.mxu0 0.0
      %2207 = vmatmul.mubr.f32.gmra.mxu0 %v2105
      %v2208 = vpop.f32.mrf.mxu0
      %v2209 = vadd.f32 0.0, %v2208
      %v2210 = vpop.f32.mrf.mxu0
      %2211 = vmatprep.mubr.f32.mxu0 0.0
      %2212 = vmatmul.mubr.f32.gmra.mxu0 %v2106
      %v2213 = vpop.f32.mrf.mxu0
      %v2214 = vadd.f32 0.0, %v2213
      %v2215 = vpop.f32.mrf.mxu0
      %2216 = vmatprep.mubr.f32.mxu0 0.0
      %2217 = vmatmul.mubr.f32.gmra.mxu0 %v2107
      %v2218 = vpop.f32.mrf.mxu0
      %v2219 = vadd.f32 0.0, %v2218
      %v2220 = vpop.f32.mrf.mxu0
      %2221 = vmatprep.mubr.f32.mxu0 0.0
      %2222 = vmatmul.mubr.f32.gmra.mxu0 %v2108
      %v2223 = vpop.f32.mrf.mxu0
      %v2224 = vadd.f32 0.0, %v2223
      %v2225 = vpop.f32.mrf.mxu0
      %2226 = vmatprep.mubr.f32.mxu0 0.0
      %2227 = vmatmul.mubr.f32.gmra.mxu0 %v2109
      %v2228 = vpop.f32.mrf.mxu0
      %v2229 = vadd.f32 0.0, %v2228
      %v2230 = vpop.f32.mrf.mxu0
      %2231 = vdwg.mxu0
      %v2232 = vadd.f32 %v2094, %v2194
      %v2233 = vadd.f32 %v2095, %v2199
      %v2234 = vadd.f32 %v2096, %v2204
      %v2235 = vadd.f32 %v2097, %v2209
      %v2236 = vadd.f32 %v2098, %v2214
      %v2237 = vadd.f32 %v2099, %v2219
      %v2238 = vadd.f32 %v2100, %v2224
      %v2239 = vadd.f32 %v2101, %v2229
      %v2240 = vld [vmem:[%s4] sm:$0x1]
      %v2242 = vlaneseq
      %v2243 = vshrl.u32 %v2242, 7
      %v2244 = vsub.s32 0, %v2243
      %v2245 = vrot.slane %v2240, %v2244
      %v2247 = vadd.f32 %v2232, %v2245
      %v2248 = vadd.f32 %v2233, %v2245
      %v2249 = vadd.f32 %v2234, %v2245
      %v2250 = vadd.f32 %v2235, %v2245
      %v2251 = vadd.f32 %v2236, %v2245
      %v2252 = vadd.f32 %v2237, %v2245
      %v2253 = vadd.f32 %v2238, %v2245
      %v2254 = vadd.f32 %v2239, %v2245
      %v2255 = vmax.f32 %v2247, 0.0
      %v2256 = vmax.f32 %v2248, 0.0
      %v2257 = vmax.f32 %v2249, 0.0
      %v2258 = vmax.f32 %v2250, 0.0
      %v2259 = vmax.f32 %v2251, 0.0
      %v2260 = vmax.f32 %v2252, 0.0
      %v2261 = vmax.f32 %v2253, 0.0
      %v2262 = vmax.f32 %v2254, 0.0
      %v2263 = vld [vmem:[%s5] sm:$0xff]
      %v2264 = vld [vmem:[%s5 + $0x8] sm:$0xff]
      %v2265 = vld [vmem:[%s5 + $0x10] sm:$0xff]
      %v2266 = vld [vmem:[%s5 + $0x18] sm:$0xff]
      %v2267 = vld [vmem:[%s5 + $0x20] sm:$0xff]
      %v2268 = vld [vmem:[%s5 + $0x28] sm:$0xff]
      %v2269 = vld [vmem:[%s5 + $0x30] sm:$0xff]
      %v2270 = vld [vmem:[%s5 + $0x38] sm:$0xff]
      %v2271 = vld [vmem:[%s5 + $0x40] sm:$0xff]
      %v2272 = vld [vmem:[%s5 + $0x48] sm:$0xff]
      %v2273 = vld [vmem:[%s5 + $0x50] sm:$0xff]
      %v2274 = vld [vmem:[%s5 + $0x58] sm:$0xff]
      %v2275 = vld [vmem:[%s5 + $0x60] sm:$0xff]
      %v2276 = vld [vmem:[%s5 + $0x68] sm:$0xff]
      %v2277 = vld [vmem:[%s5 + $0x70] sm:$0xff]
      %v2278 = vld [vmem:[%s5 + $0x78] sm:$0xff]
      %v2279 = vld [vmem:[%s6] sm:$0x1]
      %v2281 = vlaneseq
      %v2282 = vshrl.u32 %v2281, 7
      %v2283 = vsub.s32 0, %v2282
      %v2284 = vrot.slane %v2279, %v2283
      %2286 = vmatprep.subr.mxu0 0.0
      %2287 = vmatpush1.msra.mxu0 %v2278
      %2288 = vmatprep.subr.mxu0 0.0
      %2289 = vmatpush1.msra.mxu0 %v2277
      %2290 = vmatprep.subr.mxu0 0.0
      %2291 = vmatpush1.msra.mxu0 %v2276
      %2292 = vmatprep.subr.mxu0 0.0
      %2293 = vmatpush1.msra.mxu0 %v2275
      %2294 = vmatprep.subr.mxu0 0.0
      %2295 = vmatpush1.msra.mxu0 %v2274
      %2296 = vmatprep.subr.mxu0 0.0
      %2297 = vmatpush1.msra.mxu0 %v2273
      %2298 = vmatprep.subr.mxu0 0.0
      %2299 = vmatpush1.msra.mxu0 %v2272
      %2300 = vmatprep.subr.mxu0 0.0
      %2301 = vmatpush1.msra.mxu0 %v2271
      %2302 = vmatprep.subr.mxu0 0.0
      %2303 = vmatpush1.msra.mxu0 %v2270
      %2304 = vmatprep.subr.mxu0 0.0
      %2305 = vmatpush1.msra.mxu0 %v2269
      %2306 = vmatprep.subr.mxu0 0.0
      %2307 = vmatpush1.msra.mxu0 %v2268
      %2308 = vmatprep.subr.mxu0 0.0
      %2309 = vmatpush1.msra.mxu0 %v2267
      %2310 = vmatprep.subr.mxu0 0.0
      %2311 = vmatpush1.msra.mxu0 %v2266
      %2312 = vmatprep.subr.mxu0 0.0
      %2313 = vmatpush1.msra.mxu0 %v2265
      %2314 = vmatprep.subr.mxu0 0.0
      %2315 = vmatpush1.msra.mxu0 %v2264
      %2316 = vmatprep.subr.mxu0 0.0
      %2317 = vmatpush1.msra.mxu0 %v2263
      %2318 = vmatprep.subr.mxu0 0.0
      %2319 = vmatpush2.msra.mxu0 0.0
      %2320 = vmatprep.subr.mxu0 0.0
      %2321 = vmatpush2.msra.mxu0 0.0
      %2322 = vmatprep.subr.mxu0 0.0
      %2323 = vmatpush2.msra.mxu0 0.0
      %2324 = vmatprep.subr.mxu0 0.0
      %2325 = vmatpush2.msra.mxu0 0.0
      %2326 = vmatprep.subr.mxu0 0.0
      %2327 = vmatpush2.msra.mxu0 0.0
      %2328 = vmatprep.subr.mxu0 0.0
      %2329 = vmatpush2.msra.mxu0 0.0
      %2330 = vmatprep.subr.mxu0 0.0
      %2331 = vmatpush2.msra.mxu0 0.0
      %2332 = vmatprep.subr.mxu0 0.0
      %2333 = vmatpush2.msra.mxu0 0.0
      %2334 = vmatprep.subr.mxu0 0.0
      %2335 = vmatpush2.msra.mxu0 0.0
      %2336 = vmatprep.subr.mxu0 0.0
      %2337 = vmatpush2.msra.mxu0 0.0
      %2338 = vmatprep.subr.mxu0 0.0
      %2339 = vmatpush2.msra.mxu0 0.0
      %2340 = vmatprep.subr.mxu0 0.0
      %2341 = vmatpush2.msra.mxu0 0.0
      %2342 = vmatprep.subr.mxu0 0.0
      %2343 = vmatpush2.msra.mxu0 0.0
      %2344 = vmatprep.subr.mxu0 0.0
      %2345 = vmatpush2.msra.mxu0 0.0
      %2346 = vmatprep.subr.mxu0 0.0
      %2347 = vmatpush2.msra.mxu0 0.0
      %2348 = vmatprep.subr.mxu0 0.0
      %2349 = vmatpush2.msra.mxu0 0.0
      %2350 = vmatprep.mubr.f32.mxu0 0.0
      %2351 = vmatmul.mubr.f32.gmra.mxu0 %v2255
      %v2352 = vpop.f32.mrf.mxu0
      %v2353 = vadd.f32 %v2284, %v2352
      %v2354 = vpop.f32.mrf.mxu0
      %2355 = vmatprep.mubr.f32.mxu0 0.0
      %2356 = vmatmul.mubr.f32.gmra.mxu0 %v2256
      %v2357 = vpop.f32.mrf.mxu0
      %v2358 = vadd.f32 %v2284, %v2357
      %v2359 = vpop.f32.mrf.mxu0
      %2360 = vmatprep.mubr.f32.mxu0 0.0
      %2361 = vmatmul.mubr.f32.gmra.mxu0 %v2257
      %v2362 = vpop.f32.mrf.mxu0
      %v2363 = vadd.f32 %v2284, %v2362
      %v2364 = vpop.f32.mrf.mxu0
      %2365 = vmatprep.mubr.f32.mxu0 0.0
      %2366 = vmatmul.mubr.f32.gmra.mxu0 %v2258
      %v2367 = vpop.f32.mrf.mxu0
      %v2368 = vadd.f32 %v2284, %v2367
      %v2369 = vpop.f32.mrf.mxu0
      %2370 = vmatprep.mubr.f32.mxu0 0.0
      %2371 = vmatmul.mubr.f32.gmra.mxu0 %v2259
      %v2372 = vpop.f32.mrf.mxu0
      %v2373 = vadd.f32 %v2284, %v2372
      %v2374 = vpop.f32.mrf.mxu0
      %2375 = vmatprep.mubr.f32.mxu0 0.0
      %2376 = vmatmul.mubr.f32.gmra.mxu0 %v2260
      %v2377 = vpop.f32.mrf.mxu0
      %v2378 = vadd.f32 %v2284, %v2377
      %v2379 = vpop.f32.mrf.mxu0
      %2380 = vmatprep.mubr.f32.mxu0 0.0
      %2381 = vmatmul.mubr.f32.gmra.mxu0 %v2261
      %v2382 = vpop.f32.mrf.mxu0
      %v2383 = vadd.f32 %v2284, %v2382
      %v2384 = vpop.f32.mrf.mxu0
      %2385 = vmatprep.mubr.f32.mxu0 0.0
      %2386 = vmatmul.mubr.f32.gmra.mxu0 %v2262
      %v2387 = vpop.f32.mrf.mxu0
      %v2388 = vadd.f32 %v2284, %v2387
      %v2389 = vpop.f32.mrf.mxu0
      %2390 = vdwg.mxu0
      %v2391 = vld [vmem:[%s7] sm:$0xff]
      %v2392 = vld [vmem:[%s7 + $0x8] sm:$0xff]
      %v2393 = vld [vmem:[%s7 + $0x10] sm:$0xff]
      %v2394 = vld [vmem:[%s7 + $0x18] sm:$0xff]
      %v2395 = vld [vmem:[%s7 + $0x20] sm:$0xff]
      %v2396 = vld [vmem:[%s7 + $0x28] sm:$0xff]
      %v2397 = vld [vmem:[%s7 + $0x30] sm:$0xff]
      %v2398 = vld [vmem:[%s7 + $0x38] sm:$0xff]
      %v2399 = vld [vmem:[%s7 + $0x40] sm:$0xff]
      %v2400 = vld [vmem:[%s7 + $0x48] sm:$0xff]
      %v2401 = vld [vmem:[%s7 + $0x50] sm:$0xff]
      %v2402 = vld [vmem:[%s7 + $0x58] sm:$0xff]
      %v2403 = vld [vmem:[%s7 + $0x60] sm:$0xff]
      %v2404 = vld [vmem:[%s7 + $0x68] sm:$0xff]
      %v2405 = vld [vmem:[%s7 + $0x70] sm:$0xff]
      %v2406 = vld [vmem:[%s7 + $0x78] sm:$0xff]
      %v2407 = vld [vmem:[%s8] sm:$0x1]
      %v2409 = vlaneseq
      %v2410 = vshrl.u32 %v2409, 7
      %v2411 = vsub.s32 0, %v2410
      %v2412 = vrot.slane %v2407, %v2411
      %2414 = vmatprep.subr.mxu0 0.0
      %2415 = vmatpush1.msra.mxu0 %v2406
      %2416 = vmatprep.subr.mxu0 0.0
      %2417 = vmatpush1.msra.mxu0 %v2405
      %2418 = vmatprep.subr.mxu0 0.0
      %2419 = vmatpush1.msra.mxu0 %v2404
      %2420 = vmatprep.subr.mxu0 0.0
      %2421 = vmatpush1.msra.mxu0 %v2403
      %2422 = vmatprep.subr.mxu0 0.0
      %2423 = vmatpush1.msra.mxu0 %v2402
      %2424 = vmatprep.subr.mxu0 0.0
      %2425 = vmatpush1.msra.mxu0 %v2401
      %2426 = vmatprep.subr.mxu0 0.0
      %2427 = vmatpush1.msra.mxu0 %v2400
      %2428 = vmatprep.subr.mxu0 0.0
      %2429 = vmatpush1.msra.mxu0 %v2399
      %2430 = vmatprep.subr.mxu0 0.0
      %2431 = vmatpush1.msra.mxu0 %v2398
      %2432 = vmatprep.subr.mxu0 0.0
      %2433 = vmatpush1.msra.mxu0 %v2397
      %2434 = vmatprep.subr.mxu0 0.0
      %2435 = vmatpush1.msra.mxu0 %v2396
      %2436 = vmatprep.subr.mxu0 0.0
      %2437 = vmatpush1.msra.mxu0 %v2395
      %2438 = vmatprep.subr.mxu0 0.0
      %2439 = vmatpush1.msra.mxu0 %v2394
      %2440 = vmatprep.subr.mxu0 0.0
      %2441 = vmatpush1.msra.mxu0 %v2393
      %2442 = vmatprep.subr.mxu0 0.0
      %2443 = vmatpush1.msra.mxu0 %v2392
      %2444 = vmatprep.subr.mxu0 0.0
      %2445 = vmatpush1.msra.mxu0 %v2391
      %2446 = vmatprep.subr.mxu0 0.0
      %2447 = vmatpush2.msra.mxu0 0.0
      %2448 = vmatprep.subr.mxu0 0.0
      %2449 = vmatpush2.msra.mxu0 0.0
      %2450 = vmatprep.subr.mxu0 0.0
      %2451 = vmatpush2.msra.mxu0 0.0
      %2452 = vmatprep.subr.mxu0 0.0
      %2453 = vmatpush2.msra.mxu0 0.0
      %2454 = vmatprep.subr.mxu0 0.0
      %2455 = vmatpush2.msra.mxu0 0.0
      %2456 = vmatprep.subr.mxu0 0.0
      %2457 = vmatpush2.msra.mxu0 0.0
      %2458 = vmatprep.subr.mxu0 0.0
      %2459 = vmatpush2.msra.mxu0 0.0
      %2460 = vmatprep.subr.mxu0 0.0
      %2461 = vmatpush2.msra.mxu0 0.0
      %2462 = vmatprep.subr.mxu0 0.0
      %2463 = vmatpush2.msra.mxu0 0.0
      %2464 = vmatprep.subr.mxu0 0.0
      %2465 = vmatpush2.msra.mxu0 0.0
      %2466 = vmatprep.subr.mxu0 0.0
      %2467 = vmatpush2.msra.mxu0 0.0
      %2468 = vmatprep.subr.mxu0 0.0
      %2469 = vmatpush2.msra.mxu0 0.0
      %2470 = vmatprep.subr.mxu0 0.0
      %2471 = vmatpush2.msra.mxu0 0.0
      %2472 = vmatprep.subr.mxu0 0.0
      %2473 = vmatpush2.msra.mxu0 0.0
      %2474 = vmatprep.subr.mxu0 0.0
      %2475 = vmatpush2.msra.mxu0 0.0
      %2476 = vmatprep.subr.mxu0 0.0
      %2477 = vmatpush2.msra.mxu0 0.0
      %2478 = vmatprep.mubr.f32.mxu0 0.0
      %2479 = vmatmul.mubr.f32.gmra.mxu0 %v333
      %v2480 = vpop.f32.mrf.mxu0
      %v2481 = vadd.f32 %v2412, %v2480
      %v2482 = vpop.f32.mrf.mxu0
      %2483 = vmatprep.mubr.f32.mxu0 0.0
      %2484 = vmatmul.mubr.f32.gmra.mxu0 %v337
      %v2485 = vpop.f32.mrf.mxu0
      %v2486 = vadd.f32 %v2412, %v2485
      %v2487 = vpop.f32.mrf.mxu0
      %2488 = vmatprep.mubr.f32.mxu0 0.0
      %2489 = vmatmul.mubr.f32.gmra.mxu0 %v341
      %v2490 = vpop.f32.mrf.mxu0
      %v2491 = vadd.f32 %v2412, %v2490
      %v2492 = vpop.f32.mrf.mxu0
      %2493 = vmatprep.mubr.f32.mxu0 0.0
      %2494 = vmatmul.mubr.f32.gmra.mxu0 %v345
      %v2495 = vpop.f32.mrf.mxu0
      %v2496 = vadd.f32 %v2412, %v2495
      %v2497 = vpop.f32.mrf.mxu0
      %2498 = vmatprep.mubr.f32.mxu0 0.0
      %2499 = vmatmul.mubr.f32.gmra.mxu0 %v349
      %v2500 = vpop.f32.mrf.mxu0
      %v2501 = vadd.f32 %v2412, %v2500
      %v2502 = vpop.f32.mrf.mxu0
      %2503 = vmatprep.mubr.f32.mxu0 0.0
      %2504 = vmatmul.mubr.f32.gmra.mxu0 %v353
      %v2505 = vpop.f32.mrf.mxu0
      %v2506 = vadd.f32 %v2412, %v2505
      %v2507 = vpop.f32.mrf.mxu0
      %2508 = vmatprep.mubr.f32.mxu0 0.0
      %2509 = vmatmul.mubr.f32.gmra.mxu0 %v357
      %v2510 = vpop.f32.mrf.mxu0
      %v2511 = vadd.f32 %v2412, %v2510
      %v2512 = vpop.f32.mrf.mxu0
      %2513 = vmatprep.mubr.f32.mxu0 0.0
      %2514 = vmatmul.mubr.f32.gmra.mxu0 %v361
      %v2515 = vpop.f32.mrf.mxu0
      %v2516 = vadd.f32 %v2412, %v2515
      %v2517 = vpop.f32.mrf.mxu0
      %2518 = vdwg.mxu0
      %v2519 = vadd.f32 %v2353, %v2481
      %v2520 = vadd.f32 %v2358, %v2486
      %v2521 = vadd.f32 %v2363, %v2491
      %v2522 = vadd.f32 %v2368, %v2496
      %v2523 = vadd.f32 %v2373, %v2501
      %v2524 = vadd.f32 %v2378, %v2506
      %v2525 = vadd.f32 %v2383, %v2511
      %v2526 = vadd.f32 %v2388, %v2516
      %v2527 = vmax.f32 %v2519, 0.0
      %v2528 = vmax.f32 %v2520, 0.0
      %v2529 = vmax.f32 %v2521, 0.0
      %v2530 = vmax.f32 %v2522, 0.0
      %v2531 = vmax.f32 %v2523, 0.0
      %v2532 = vmax.f32 %v2524, 0.0
      %v2533 = vmax.f32 %v2525, 0.0
      %v2534 = vmax.f32 %v2526, 0.0
      %2535 = vst [vmem:[%s332] sm:$0xff] %v2527
      %2536 = vst [vmem:[%s332 + $0x8] sm:$0xff] %v2528
      %2537 = vst [vmem:[%s332 + $0x10] sm:$0xff] %v2529
      %2538 = vst [vmem:[%s332 + $0x18] sm:$0xff] %v2530
      %2539 = vst [vmem:[%s332 + $0x20] sm:$0xff] %v2531
      %2540 = vst [vmem:[%s332 + $0x28] sm:$0xff] %v2532
      %2541 = vst [vmem:[%s332 + $0x30] sm:$0xff] %v2533
      %2542 = vst [vmem:[%s332 + $0x38] sm:$0xff] %v2534
      %p2543 = scmp.lt.s32.totalorder %s20, 1
      %s2544 = scalar_select %p2543, %s20, 1
      %s2545 = smul.addr %s2544, 8
      %s2546 = smul.addr %s2545, 8
      %s2547 = scalar_lea.vmem %s9, %s2546
      // Predicated region
      $region57: #{head_forward.3} parent=55 // pred_check
        %p2548 = pneg %p232
      $region58: #{head_forward.3} parent=55 // pred_check_branch
        %2550 = sbr.rel (%p2548) target = $region60
      $region59: #{head_forward.3} parent=55 // pred_region
        _
      $region60: #{head_forward.3} parent=55 // pred_fallthru
        _
    $region56: #{head_forward.3} parent=5 // pred_fallthru
      _
    %p2551 = scmp.le.s32.totalorder 2, %s15
    // Predicated region
    $region61: #{head_forward.3} parent=5 // pred_check
      %p2552 = pneg %p2551
    $region62: #{head_forward.3} parent=5 // pred_check_branch
      %2554 = sbr.rel (%p2552) target = $region64
    $region63: #{head_forward.3} parent=5 // pred_region
      %s2555 = ssub.s32 %s15, 2
      // Predicated region
      $region65: #{head_forward.3} parent=63 // pred_check
        %p2556 = pneg %p238
      $region66: #{head_forward.3} parent=63 // pred_check_branch
        %2558 = sbr.rel (%p2556) target = $region68
      $region67: #{head_forward.3} parent=63 // pred_region
        %p2559 = scmp.lt.s32.totalorder %s21, 1
        %s2560 = scalar_select %p2559, %s21, 1
        %s2561 = smul.addr %s2560, 8
        %s2562 = smul.addr %s2561, 8
        %s2563 = scalar_lea.vmem %s9, %s2562
      $region68: #{head_forward.3} parent=63 // pred_fallthru
        _
    $region64: #{head_forward.3} parent=5 // pred_fallthru
      _
  $region6: #{head_forward.3} parent=0 // loop_footer
    %s19 = sadd.s32 1, %s15
  $region7: #{head_forward.3} parent=0 // loop_footer_branch
    %14 = sbr.rel target = $region3
  $region8: #{head_forward.3} parent=0 // loop_exit
    _

</llo_original>
